<compile_context>
chip_gen: v7x
topology: tpu7x:2x2x1
jax: 0.10.0
libtpu: 0.0.40
codegen_flags: <defaults>
</compile_context>

<pallas_src>
import functools
import numpy as np
import jax
import jax.numpy as jnp
from jax import lax
from jax.experimental import pallas as pl
from jax.experimental.pallas import tpu as pltpu

# ----------------------------- model config ---------------------------------
VOCAB_SIZE = 96
D_EMB = 32           # == d_input, so no InputAdapterMLP
N_HEAD = 4
N_LAYERS = 2
D_FF = 2 * D_EMB     # dim_feedforward = d_emb * 2
PAD_IDX = 0
SEQ_LEN = 8
BATCH = 2
NEG_INF = -1e30
_PROWS_PER_LAYER = 9           # rows per layer in the f32 bias/LN slab


def _dot_nt(a, b):
    """a @ b.T with f32 accumulation on the MXU."""
    return lax.dot_general(a, b, (((1,), (1,)), ((), ())),
                           preferred_element_type=jnp.float32)


def _layernorm(x, g, b):
    m = jnp.mean(x, axis=-1, keepdims=True)
    v = jnp.mean((x - m) ** 2, axis=-1, keepdims=True)
    return (x - m) * lax.rsqrt(v + 1e-5) * g + b


def sinusoidal_pe(T, D):
    # numpy -> baked as a constant at trace time (no per-call XLA ops)
    pos = np.arange(T, dtype=np.float32)[:, None]
    div = np.exp(np.arange(0, D, 2, dtype=np.float32) * (-np.log(10000.0) / D))
    pe = np.zeros((T, D), np.float32)
    pe[:, 0::2] = np.sin(pos * div)
    pe[:, 1::2] = np.cos(pos * div)
    return pe


# --------------------------- fused Pallas kernel -----------------------------
def fused_forward_kernel(x_ref, bias_ref, w_ref, p_ref, o_ref, *,
                         n_layers, n_head, d_emb, d_ff):
    """Whole forward pass (all encoder layers + vocab projection) in one kernel.

    x_ref    : (BTP, D)    f32   padded, batch-major flattened activations
    bias_ref : (BTP, BTP)  f32   block-diag causal + key-padding additive bias
    w_ref    : (R, D)      bf16  packed matmul weights:
                 per layer: [Wq_stack(HD), Wk(D), Wvo_stack(HD), Wff1(DF), Wff2^T(DF)]
                 then       [Vproj(VPAD)]
    p_ref    : (P, 128)    f32   packed biases / layernorm params (one row each)
    o_ref    : (BTP, VPAD) f32   lane-dense padded logits
    """
    D, DF = d_emb, d_ff
    HD = n_head * D
    WROWS = 2 * HD + D + 2 * DF          # weight-slab rows per layer
    PROWS = _PROWS_PER_LAYER
    VPAD = o_ref.shape[1]

    x = x_ref[...]                       # (BTP, D) f32
    bias = bias_ref[...]                 # (BTP, BTP) f32

    for l in range(n_layers):
        wo, po = l * WROWS, l * PROWS
        wq    = w_ref[wo                   : wo + HD, :]           # (HD, D) bf16 (masked + scaled)
        wk    = w_ref[wo + HD              : wo + HD + D, :]       # (D, D)
        wvo   = w_ref[wo + HD + D          : wo + 2 * HD + D, :]   # (HD, D) (W_out folded in)
        wff1  = w_ref[wo + 2 * HD + D      : wo + 2 * HD + D + DF, :]
        wff2t = w_ref[wo + 2 * HD + D + DF : wo + WROWS, :]        # (DF, D) = Wff2^T

        bq   = p_ref[po    : po + 1, :HD]
        bk   = p_ref[po + 1: po + 2, :D]
        bvo  = p_ref[po + 2: po + 3, :HD]                          # b_out folded into head 0
        bff1 = p_ref[po + 3: po + 4, :DF]
        bff2 = p_ref[po + 4: po + 5, :D]
        ln1g = p_ref[po + 5: po + 6, :D]
        ln1b = p_ref[po + 6: po + 7, :D]
        ln2g = p_ref[po + 7: po + 8, :D]
        ln2b = p_ref[po + 8: po + 9, :D]

        # ---- stacked projections: 3 lane-dense matmuls instead of 1 + 8 per-head ----
        xb = x.astype(jnp.bfloat16)
        q_all  = _dot_nt(xb, wq) + bq        # (BTP, HD) f32, 1/sqrt(hd) folded in
        k      = _dot_nt(xb, wk) + bk        # (BTP, D)  f32
        vo_all = _dot_nt(xb, wvo) + bvo      # (BTP, HD) f32 = (X Wv^T + bv) Wout^T per head
        kb = k.astype(jnp.bfloat16)

        # ---- per-head attention (static 32-lane slices of the stacked results) ----
        attn = None
        for h in range(n_head):
            qh = q_all[:, h * D:(h + 1) * D].astype(jnp.bfloat16)
            s = _dot_nt(qh, kb) + bias                       # (BTP, BTP) f32
            s = s - jnp.max(s, axis=-1, keepdims=True)
            e = jnp.exp(s)
            p = e * pl.reciprocal(jnp.sum(e, axis=-1, keepdims=True), approx=True)
            voh = vo_all[:, h * D:(h + 1) * D].astype(jnp.bfloat16)
            pv = jnp.dot(p.astype(jnp.bfloat16), voh,
                         preferred_element_type=jnp.float32)
            attn = pv if attn is None else attn + pv          # no zero-init materialized

        # ---- post-norm encoder layer (PyTorch default, eps=1e-5), dropout identity ----
        x1 = _layernorm(x + attn, ln1g, ln1b)
        h1 = jnp.maximum(_dot_nt(x1.astype(jnp.bfloat16), wff1) + bff1, 0.0)
        ff = jnp.dot(h1.astype(jnp.bfloat16), wff2t,
                     preferred_element_type=jnp.float32) + bff2
        x = _layernorm(x1 + ff, ln2g, ln2b)

    # ---- vocab projection into a lane-dense padded slab ----
    vw = w_ref[n_layers * WROWS: n_layers * WROWS + VPAD, :]       # (VPAD, D) bf16
    vb = p_ref[n_layers * PROWS: n_layers * PROWS + 1, :VPAD]      # (1, VPAD) f32
    o_ref[...] = (_dot_nt(x.astype(jnp.bfloat16), vw) + vb).astype(o_ref.dtype)


# --------------------- one-time weight preparation (hoisted) -----------------
def prepare_weights(params, n_head=N_HEAD):
    """Fold head slicing, 1/sqrt(hd) scaling and W_out into stacked full-width weights,
    and pack everything into two slabs. Run ONCE at parameter-load time."""
    layers = params["layers"]
    D = layers[0]["w_out"].shape[0]
    DF = layers[0]["wff1"].shape[0]
    HD = n_head * D
    hd = D // n_head
    scale = 1.0 / float(np.sqrt(hd))
    V = params["v_proj_w"].shape[0]
    vpad = ((V + 127) // 128) * 128
    lanes = max(HD, vpad, DF, D, 128)

    def row(v):
        v = jnp.asarray(v, jnp.float32).reshape(-1)
        return jnp.pad(v, (0, lanes - v.shape[0]))

    w_rows, p_rows = [], []
    for p in layers:
        w_in = jnp.asarray(p["w_in"], jnp.float32)            # (3D, D)
        b_in = jnp.asarray(p["b_in"], jnp.float32).reshape(-1)
        w_out = jnp.asarray(p["w_out"], jnp.float32)           # (D, D)
        wq, wk, wv = w_in[:D], w_in[D:2 * D], w_in[2 * D:]
        bq, bk, bv = b_in[:D], b_in[D:2 * D], b_in[2 * D:]

        wq_blocks, wvo_blocks = [], []
        bq_stack = jnp.zeros((HD,), jnp.float32)
        bvo_stack = jnp.zeros((HD,), jnp.float32)
        for h in range(n_head):
            sl = slice(h * hd, (h + 1) * hd)
            # masked + scaled Q weights (scale applied in f32, BEFORE the bf16 cast)
            wq_blocks.append(jnp.zeros((D, D), jnp.float32).at[sl, :].set(wq[sl, :] * scale))
            bq_stack = bq_stack.at[h * D + h * hd: h * D + (h + 1) * hd].set(bq[sl] * scale)
            # fold out_proj into the value projection: Wvo_h = Wout[:, h] @ Wv_h
            wvo_blocks.append(w_out[:, sl] @ wv[sl, :])
            bvo_stack = bvo_stack.at[h * D:(h + 1) * D].set(w_out[:, sl] @ bv[sl])
        # out-projection bias rides through head 0 (softmax rows sum to 1)
        bvo_stack = bvo_stack.at[:D].add(jnp.asarray(p["b_out"], jnp.float32).reshape(-1))

        w_rows += [jnp.concatenate(wq_blocks, axis=0), wk,
                   jnp.concatenate(wvo_blocks, axis=0),
                   jnp.asarray(p["wff1"], jnp.float32),
                   jnp.asarray(p["wff2"], jnp.float32).T]
        p_rows += [row(bq_stack), row(bk), row(bvo_stack),
                   row(p["bff1"]), row(p["bff2"]),
                   row(p["ln1g"]), row(p["ln1b"]),
                   row(p["ln2g"]), row(p["ln2b"])]

    vw = jnp.zeros((vpad, D), jnp.float32).at[:V].set(params["v_proj_w"])
    vb = jnp.zeros((vpad,), jnp.float32).at[:V].set(params["v_proj_b"])
    w_rows.append(vw)
    p_rows.append(row(vb))

    wslab = jnp.concatenate(w_rows, axis=0).astype(jnp.bfloat16)   # (960, 32) bf16
    pslab = jnp.stack(p_rows, axis=0)                              # (19, 128) f32
    pad_rows = (-pslab.shape[0]) % 8
    if pad_rows:
        pslab = jnp.pad(pslab, ((0, pad_rows), (0, 0)))            # -> (24, 128)
    return dict(wslab=wslab, pslab=pslab,
                embedding=jnp.asarray(params["embedding"], jnp.float32))


# ------------------------------ forward wrapper -------------------------------
def defmod_forward(wslab, pslab, embedding, vector, input_sequence, *,
                   n_layers, n_head, d_emb, d_ff, vocab_size, pad_idx):
    S, B = input_sequence.shape
    D = d_emb
    T = S + 1
    BT = B * T
    BTP = ((BT + 31) // 32) * 32                 # pad flattened seq dim -> aligned tiles
    vpad = ((vocab_size + 127) // 128) * 128

    # embedding lookup + gloss vector + positional encoding (tiny XLA glue;
    # input_adapt is None since d_input == d_emb; dropouts identity in eval)
    embs = embedding[input_sequence]                               # (S, B, D)
    seq = jnp.concatenate([vector[None, :, :], embs], axis=0)      # (T, B, D)
    src = seq + sinusoidal_pe(T, D)[:, None, :]
    x = jnp.transpose(src, (1, 0, 2)).reshape(BT, D)
    x = jnp.pad(x, ((0, BTP - BT), (0, 0))).astype(jnp.float32)    # (BTP, D)

    # additive attention bias: static block-diag causal structure (numpy constant)
    # OR'ed with the runtime key-padding mask (position 0 = gloss, never padded)
    r = np.arange(BTP)
    valid = (r[:, None] < BT) & (r[None, :] < BT)
    same = (r[:, None] // T) == (r[None, :] // T)
    causal = (r[None, :] % T) <= (r[:, None] % T)
    struct_bad = ~(valid & same & causal)                          # (BTP, BTP) np bool

    key_pad = jnp.concatenate(
        [jnp.zeros((1, B), dtype=bool), input_sequence == pad_idx], axis=0)   # (T, B)
    kp = jnp.pad(jnp.transpose(key_pad).reshape(BT), (0, BTP - BT))
    bias = jnp.where(jnp.asarray(struct_bad) | kp[None, :],
                     NEG_INF, 0.0).astype(jnp.float32)             # (BTP, BTP) f32

    kernel = functools.partial(fused_forward_kernel, n_layers=n_layers,
                               n_head=n_head, d_emb=D, d_ff=d_ff)
    inputs = [x, bias, wslab, pslab]
    logits_pad = pl.pallas_call(
        kernel,
        out_shape=jax.ShapeDtypeStruct((BTP, vpad), jnp.float32),
        grid=(1,),
        in_specs=[pl.BlockSpec(a.shape, lambda i: (0, 0)) for a in inputs],
        out_specs=pl.BlockSpec((BTP, vpad), lambda i: (0, 0)),
        compiler_params=pltpu.CompilerParams(dimension_semantics=("arbitrary",)),
    )(*inputs)

    # (BTP, vpad) -> (T, B, V)
    return jnp.transpose(logits_pad[:BT].reshape(B, T, vpad), (1, 0, 2))[..., :vocab_size]


# ------------------------- pure-JAX reference (sanity) -----------------------
def _ref_inputs(params, vector, input_sequence, pad_idx):
    S, B = input_sequence.shape
    D = vector.shape[-1]
    T = S + 1
    embs = params["embedding"][input_sequence]
    seq = jnp.concatenate([vector[None, :, :], embs], axis=0)
    src = seq + sinusoidal_pe(T, D)[:, None, :]
    causal = jnp.where(jnp.arange(T)[None, :] > jnp.arange(T)[:, None], NEG_INF, 0.0)
    key_pad = jnp.concatenate(
        [jnp.zeros((1, B), dtype=bool), input_sequence == pad_idx], axis=0).T
    bias = causal[None, :, :] + jnp.where(key_pad[:, None, :], NEG_INF, 0.0)
    x = jnp.transpose(src, (1, 0, 2)).astype(jnp.float32)
    return x, bias.astype(jnp.float32), T


def reference_forward(params, vector, input_sequence, n_head=N_HEAD, pad_idx=PAD_IDX):
    x, bias, T = _ref_inputs(params, vector, input_sequence, pad_idx)
    B, _, D = x.shape
    hd = D // n_head
    for p in params["layers"]:
        qkv = jnp.einsum('btd,ed->bte', x, p["w_in"]) + p["b_in"][0]
        q = qkv[..., :D].reshape(B, T, n_head, hd)
        k = qkv[..., D:2 * D].reshape(B, T, n_head, hd)
        v = qkv[..., 2 * D:].reshape(B, T, n_head, hd)
        s = jnp.einsum('bthd,bshd->bhts', q, k) / np.sqrt(hd) + bias[:, None]
        pr = jax.nn.softmax(s, axis=-1)
        o = jnp.einsum('bhts,bshd->bthd', pr, v).reshape(B, T, D)
        attn = jnp.einsum('btd,ed->bte', o, p["w_out"]) + p["b_out"][0]
        x1 = _layernorm(x + attn, p["ln1g"][0], p["ln1b"][0])
        h = jax.nn.relu(jnp.einsum('btd,fd->btf', x1, p["wff1"]) + p["bff1"][0])
        ff = jnp.einsum('btf,df->btd', h, p["wff2"]) + p["bff2"][0]
        x = _layernorm(x1 + ff, p["ln2g"][0], p["ln2b"][0])
    out = jnp.transpose(x, (1, 0, 2))
    logits = jnp.einsum('tbd,vd->tbv', out, params["v_proj_w"]) + params["v_proj_b"]
    return logits


# ------------------------------ param init -----------------------------------
def init_params(key, vocab_size=VOCAB_SIZE, d_emb=D_EMB, n_layers=N_LAYERS, d_ff=D_FF):
    # deterministic synthetic init mirroring initParams (xavier-ish weights,
    # zero biases, unit layernorm gains)
    keys = jax.random.split(key, 2 + n_layers)

    def w(k, shape, scale=0.08):
        return jax.random.normal(k, shape, jnp.float32) * scale

    params = {
        "embedding": w(keys[0], (vocab_size, d_emb), 0.1),
        "v_proj_w": w(keys[1], (vocab_size, d_emb)),
        "v_proj_b": jnp.zeros((vocab_size,), jnp.float32),
        "layers": [],
    }
    for l in range(n_layers):
        lk = jax.random.split(keys[2 + l], 4)
        params["layers"].append(dict(
            w_in=w(lk[0], (3 * d_emb, d_emb)),
            b_in=jnp.zeros((1, 3 * d_emb), jnp.float32),
            w_out=w(lk[1], (d_emb, d_emb)),
            b_out=jnp.zeros((1, d_emb), jnp.float32),
            ln1g=jnp.ones((1, d_emb), jnp.float32),
            ln1b=jnp.zeros((1, d_emb), jnp.float32),
            wff1=w(lk[2], (d_ff, d_emb)),
            bff1=jnp.zeros((1, d_ff), jnp.float32),
            wff2=w(lk[3], (d_emb, d_ff)),
            bff2=jnp.zeros((1, d_emb), jnp.float32),
            ln2g=jnp.ones((1, d_emb), jnp.float32),
            ln2b=jnp.zeros((1, d_emb), jnp.float32),
        ))
    return params


# ---------------------------------- main --------------------------------------
if __name__ == "__main__":
    key = jax.random.PRNGKey(0)
    kparam, kvec, kseq = jax.random.split(key, 3)

    params = init_params(kparam)

    # gloss vector (B, d_emb) and token sequence (S, B), seq-first like PyTorch
    vector = jax.random.normal(kvec, (BATCH, D_EMB), jnp.float32)
    input_sequence = jax.random.randint(kseq, (SEQ_LEN, BATCH), 1, VOCAB_SIZE, jnp.int32)
    # add some padding tokens to exercise src_key_padding_mask
    input_sequence = input_sequence.at[-2:, 0].set(PAD_IDX)

    # one-time weight prep (hoisted out of the per-call forward path) + jitted forward
    prep = prepare_weights(params)
    fwd = jax.jit(functools.partial(
        defmod_forward, n_layers=N_LAYERS, n_head=N_HEAD, d_emb=D_EMB,
        d_ff=D_FF, vocab_size=VOCAB_SIZE, pad_idx=PAD_IDX))

    v_dist = fwd(prep["wslab"], prep["pslab"], prep["embedding"],
                 vector, input_sequence)
    v_dist = jax.block_until_ready(v_dist)

    ref = jax.block_until_ready(reference_forward(params, vector, input_sequence))
    assert v_dist.shape == (SEQ_LEN + 1, BATCH, VOCAB_SIZE)
    # tolerance covers bf16 matmul operands + EUP approx reciprocal in the softmax
    np.testing.assert_allclose(np.asarray(v_dist), np.asarray(ref), rtol=3e-2, atol=3e-2)

    # TODO(synk): dropout layers are identity (eval mode); training-mode dropout RNG not implemented.
    print("KERNEL_OK")
</pallas_src>

<mosaic_0001>
module attributes {stable_mosaic.version = 11 : i64} {
  func.func @fused_forward_kernel(%arg0: i32, %arg1: memref<32x32xf32, #tpu.memory_space<vmem>>, %arg2: memref<32x32xf32, #tpu.memory_space<vmem>>, %arg3: memref<960x32xbf16, #tpu.memory_space<vmem>>, %arg4: memref<24x128xf32, #tpu.memory_space<vmem>>, %arg5: memref<32x128xf32, #tpu.memory_space<vmem>>) attributes {dimension_semantics = [#tpu.dimension_semantics<arbitrary>], iteration_bounds = array<i64: 1>, scalar_prefetch = 0 : i64, scratch_operands = 0 : i64, tpu.core_type = #tpu.core_type<tc>, window_params = [{pipeline_mode = #tpu.pipeline_mode<synchronous>, transform_indices = @transform_0, window_bounds = array<i64: 32, 32>}, {pipeline_mode = #tpu.pipeline_mode<synchronous>, transform_indices = @transform_1, window_bounds = array<i64: 32, 32>}, {pipeline_mode = #tpu.pipeline_mode<synchronous>, transform_indices = @transform_2, window_bounds = array<i64: 960, 32>}, {pipeline_mode = #tpu.pipeline_mode<synchronous>, transform_indices = @transform_3, window_bounds = array<i64: 24, 128>}, {pipeline_mode = #tpu.pipeline_mode<synchronous>, transform_indices = @transform_4, window_bounds = array<i64: 32, 128>}]} {
    %c0 = arith.constant 0 : index
    %c0_0 = arith.constant 0 : index
    %0 = vector.load %arg1[%c0, %c0_0] : memref<32x32xf32, #tpu.memory_space<vmem>>, vector<32x32xf32>
    %c0_1 = arith.constant 0 : index
    %c0_2 = arith.constant 0 : index
    %1 = vector.load %arg2[%c0_1, %c0_2] : memref<32x32xf32, #tpu.memory_space<vmem>>, vector<32x32xf32>
    %c0_3 = arith.constant 0 : index
    %c0_4 = arith.constant 0 : index
    %2 = vector.load %arg3[%c0_3, %c0_4] : memref<960x32xbf16, #tpu.memory_space<vmem>>, vector<128x32xbf16>
    %c128 = arith.constant 128 : index
    %c0_5 = arith.constant 0 : index
    %3 = vector.load %arg3[%c128, %c0_5] : memref<960x32xbf16, #tpu.memory_space<vmem>>, vector<32x32xbf16>
    %c160 = arith.constant 160 : index
    %c0_6 = arith.constant 0 : index
    %4 = vector.load %arg3[%c160, %c0_6] : memref<960x32xbf16, #tpu.memory_space<vmem>>, vector<128x32xbf16>
    %c288 = arith.constant 288 : index
    %c0_7 = arith.constant 0 : index
    %5 = vector.load %arg3[%c288, %c0_7] : memref<960x32xbf16, #tpu.memory_space<vmem>>, vector<64x32xbf16>
    %c352 = arith.constant 352 : index
    %c0_8 = arith.constant 0 : index
    %6 = vector.load %arg3[%c352, %c0_8] : memref<960x32xbf16, #tpu.memory_space<vmem>>, vector<64x32xbf16>
    %c0_9 = arith.constant 0 : index
    %c0_10 = arith.constant 0 : index
    %7 = vector.load %arg4[%c0_9, %c0_10] : memref<24x128xf32, #tpu.memory_space<vmem>>, vector<1x128xf32>
    %c1 = arith.constant 1 : index
    %c0_11 = arith.constant 0 : index
    %8 = vector.load %arg4[%c1, %c0_11] : memref<24x128xf32, #tpu.memory_space<vmem>>, vector<1x32xf32>
    %c2 = arith.constant 2 : index
    %c0_12 = arith.constant 0 : index
    %9 = vector.load %arg4[%c2, %c0_12] : memref<24x128xf32, #tpu.memory_space<vmem>>, vector<1x128xf32>
    %c3 = arith.constant 3 : index
    %c0_13 = arith.constant 0 : index
    %10 = vector.load %arg4[%c3, %c0_13] : memref<24x128xf32, #tpu.memory_space<vmem>>, vector<1x64xf32>
    %c4 = arith.constant 4 : index
    %c0_14 = arith.constant 0 : index
    %11 = vector.load %arg4[%c4, %c0_14] : memref<24x128xf32, #tpu.memory_space<vmem>>, vector<1x32xf32>
    %c5 = arith.constant 5 : index
    %c0_15 = arith.constant 0 : index
    %12 = vector.load %arg4[%c5, %c0_15] : memref<24x128xf32, #tpu.memory_space<vmem>>, vector<1x32xf32>
    %c6 = arith.constant 6 : index
    %c0_16 = arith.constant 0 : index
    %13 = vector.load %arg4[%c6, %c0_16] : memref<24x128xf32, #tpu.memory_space<vmem>>, vector<1x32xf32>
    %c7 = arith.constant 7 : index
    %c0_17 = arith.constant 0 : index
    %14 = vector.load %arg4[%c7, %c0_17] : memref<24x128xf32, #tpu.memory_space<vmem>>, vector<1x32xf32>
    %c8 = arith.constant 8 : index
    %c0_18 = arith.constant 0 : index
    %15 = vector.load %arg4[%c8, %c0_18] : memref<24x128xf32, #tpu.memory_space<vmem>>, vector<1x32xf32>
    %16 = arith.truncf %0 : vector<32x32xf32> to vector<32x32xbf16>
    %cst = arith.constant dense<0.000000e+00> : vector<32x128xf32>
    %17 = tpu.matmul %16, %2, %cst {dimension_numbers = #tpu.dot_dimension_numbers<[1], [1], [0], [0], [0, 0, 1, 0], [], []>} : vector<32x32xbf16>, vector<128x32xbf16>, vector<32x128xf32> -> vector<32x128xf32>
    %18 = vector.broadcast %7 : vector<1x128xf32> to vector<32x128xf32>
    %19 = arith.addf %17, %18 : vector<32x128xf32>
    %cst_19 = arith.constant dense<0.000000e+00> : vector<32x32xf32>
    %20 = tpu.matmul %16, %3, %cst_19 {dimension_numbers = #tpu.dot_dimension_numbers<[1], [1], [0], [0], [0, 0, 1, 0], [], []>} : vector<32x32xbf16>, vector<32x32xbf16>, vector<32x32xf32> -> vector<32x32xf32>
    %21 = vector.broadcast %8 : vector<1x32xf32> to vector<32x32xf32>
    %22 = arith.addf %20, %21 : vector<32x32xf32>
    %cst_20 = arith.constant dense<0.000000e+00> : vector<32x128xf32>
    %23 = tpu.matmul %16, %4, %cst_20 {dimension_numbers = #tpu.dot_dimension_numbers<[1], [1], [0], [0], [0, 0, 1, 0], [], []>} : vector<32x32xbf16>, vector<128x32xbf16>, vector<32x128xf32> -> vector<32x128xf32>
    %24 = vector.broadcast %9 : vector<1x128xf32> to vector<32x128xf32>
    %25 = arith.addf %23, %24 : vector<32x128xf32>
    %26 = arith.truncf %22 : vector<32x32xf32> to vector<32x32xbf16>
    %27 = vector.extract_strided_slice %19 {offsets = [0, 0], sizes = [32, 32], strides = [1, 1]} : vector<32x128xf32> to vector<32x32xf32>
    %28 = arith.truncf %27 : vector<32x32xf32> to vector<32x32xbf16>
    %cst_21 = arith.constant dense<0.000000e+00> : vector<32x32xf32>
    %29 = tpu.matmul %28, %26, %cst_21 {dimension_numbers = #tpu.dot_dimension_numbers<[1], [1], [0], [0], [0, 0, 1, 0], [], []>} : vector<32x32xbf16>, vector<32x32xbf16>, vector<32x32xf32> -> vector<32x32xf32>
    %30 = arith.addf %29, %1 : vector<32x32xf32>
    %cst_22 = arith.constant dense<0xFF800000> : vector<32xf32>
    %31 = vector.multi_reduction <maximumf>, %30, %cst_22 [1] : vector<32x32xf32> to vector<32xf32>
    %32 = vector.shape_cast %31 : vector<32xf32> to vector<32x1xf32>
    %33 = vector.broadcast %32 : vector<32x1xf32> to vector<32x32xf32>
    %34 = arith.subf %30, %33 : vector<32x32xf32>
    %35 = math.exp %34 : vector<32x32xf32>
    %cst_23 = arith.constant dense<0.000000e+00> : vector<32xf32>
    %36 = vector.multi_reduction <add>, %35, %cst_23 [1] : vector<32x32xf32> to vector<32xf32>
    %37 = vector.shape_cast %36 : vector<32xf32> to vector<32x1xf32>
    %38 = tpu.reciprocal %37 {approx = true} : vector<32x1xf32> -> vector<32x1xf32>
    %39 = vector.broadcast %38 : vector<32x1xf32> to vector<32x32xf32>
    %40 = arith.mulf %35, %39 : vector<32x32xf32>
    %41 = vector.extract_strided_slice %25 {offsets = [0, 0], sizes = [32, 32], strides = [1, 1]} : vector<32x128xf32> to vector<32x32xf32>
    %42 = arith.truncf %41 : vector<32x32xf32> to vector<32x32xbf16>
    %43 = arith.truncf %40 : vector<32x32xf32> to vector<32x32xbf16>
    %cst_24 = arith.constant dense<0.000000e+00> : vector<32x32xf32>
    %44 = tpu.matmul %43, %42, %cst_24 {dimension_numbers = #tpu.dot_dimension_numbers<[1], [0], [0], [1], [0, 0, 1, 1], [], []>} : vector<32x32xbf16>, vector<32x32xbf16>, vector<32x32xf32> -> vector<32x32xf32>
    %45 = vector.extract_strided_slice %19 {offsets = [0, 32], sizes = [32, 32], strides = [1, 1]} : vector<32x128xf32> to vector<32x32xf32>
    %46 = arith.truncf %45 : vector<32x32xf32> to vector<32x32xbf16>
    %cst_25 = arith.constant dense<0.000000e+00> : vector<32x32xf32>
    %47 = tpu.matmul %46, %26, %cst_25 {dimension_numbers = #tpu.dot_dimension_numbers<[1], [1], [0], [0], [0, 0, 1, 0], [], []>} : vector<32x32xbf16>, vector<32x32xbf16>, vector<32x32xf32> -> vector<32x32xf32>
    %48 = arith.addf %47, %1 : vector<32x32xf32>
    %cst_26 = arith.constant dense<0xFF800000> : vector<32xf32>
    %49 = vector.multi_reduction <maximumf>, %48, %cst_26 [1] : vector<32x32xf32> to vector<32xf32>
    %50 = vector.shape_cast %49 : vector<32xf32> to vector<32x1xf32>
    %51 = vector.broadcast %50 : vector<32x1xf32> to vector<32x32xf32>
    %52 = arith.subf %48, %51 : vector<32x32xf32>
    %53 = math.exp %52 : vector<32x32xf32>
    %cst_27 = arith.constant dense<0.000000e+00> : vector<32xf32>
    %54 = vector.multi_reduction <add>, %53, %cst_27 [1] : vector<32x32xf32> to vector<32xf32>
    %55 = vector.shape_cast %54 : vector<32xf32> to vector<32x1xf32>
    %56 = tpu.reciprocal %55 {approx = true} : vector<32x1xf32> -> vector<32x1xf32>
    %57 = vector.broadcast %56 : vector<32x1xf32> to vector<32x32xf32>
    %58 = arith.mulf %53, %57 : vector<32x32xf32>
    %59 = vector.extract_strided_slice %25 {offsets = [0, 32], sizes = [32, 32], strides = [1, 1]} : vector<32x128xf32> to vector<32x32xf32>
    %60 = arith.truncf %59 : vector<32x32xf32> to vector<32x32xbf16>
    %61 = arith.truncf %58 : vector<32x32xf32> to vector<32x32xbf16>
    %cst_28 = arith.constant dense<0.000000e+00> : vector<32x32xf32>
    %62 = tpu.matmul %61, %60, %cst_28 {dimension_numbers = #tpu.dot_dimension_numbers<[1], [0], [0], [1], [0, 0, 1, 1], [], []>} : vector<32x32xbf16>, vector<32x32xbf16>, vector<32x32xf32> -> vector<32x32xf32>
    %63 = arith.addf %44, %62 : vector<32x32xf32>
    %64 = vector.extract_strided_slice %19 {offsets = [0, 64], sizes = [32, 32], strides = [1, 1]} : vector<32x128xf32> to vector<32x32xf32>
    %65 = arith.truncf %64 : vector<32x32xf32> to vector<32x32xbf16>
    %cst_29 = arith.constant dense<0.000000e+00> : vector<32x32xf32>
    %66 = tpu.matmul %65, %26, %cst_29 {dimension_numbers = #tpu.dot_dimension_numbers<[1], [1], [0], [0], [0, 0, 1, 0], [], []>} : vector<32x32xbf16>, vector<32x32xbf16>, vector<32x32xf32> -> vector<32x32xf32>
    %67 = arith.addf %66, %1 : vector<32x32xf32>
    %cst_30 = arith.constant dense<0xFF800000> : vector<32xf32>
    %68 = vector.multi_reduction <maximumf>, %67, %cst_30 [1] : vector<32x32xf32> to vector<32xf32>
    %69 = vector.shape_cast %68 : vector<32xf32> to vector<32x1xf32>
    %70 = vector.broadcast %69 : vector<32x1xf32> to vector<32x32xf32>
    %71 = arith.subf %67, %70 : vector<32x32xf32>
    %72 = math.exp %71 : vector<32x32xf32>
    %cst_31 = arith.constant dense<0.000000e+00> : vector<32xf32>
    %73 = vector.multi_reduction <add>, %72, %cst_31 [1] : vector<32x32xf32> to vector<32xf32>
    %74 = vector.shape_cast %73 : vector<32xf32> to vector<32x1xf32>
    %75 = tpu.reciprocal %74 {approx = true} : vector<32x1xf32> -> vector<32x1xf32>
    %76 = vector.broadcast %75 : vector<32x1xf32> to vector<32x32xf32>
    %77 = arith.mulf %72, %76 : vector<32x32xf32>
    %78 = vector.extract_strided_slice %25 {offsets = [0, 64], sizes = [32, 32], strides = [1, 1]} : vector<32x128xf32> to vector<32x32xf32>
    %79 = arith.truncf %78 : vector<32x32xf32> to vector<32x32xbf16>
    %80 = arith.truncf %77 : vector<32x32xf32> to vector<32x32xbf16>
    %cst_32 = arith.constant dense<0.000000e+00> : vector<32x32xf32>
    %81 = tpu.matmul %80, %79, %cst_32 {dimension_numbers = #tpu.dot_dimension_numbers<[1], [0], [0], [1], [0, 0, 1, 1], [], []>} : vector<32x32xbf16>, vector<32x32xbf16>, vector<32x32xf32> -> vector<32x32xf32>
    %82 = arith.addf %63, %81 : vector<32x32xf32>
    %83 = vector.extract_strided_slice %19 {offsets = [0, 96], sizes = [32, 32], strides = [1, 1]} : vector<32x128xf32> to vector<32x32xf32>
    %84 = arith.truncf %83 : vector<32x32xf32> to vector<32x32xbf16>
    %cst_33 = arith.constant dense<0.000000e+00> : vector<32x32xf32>
    %85 = tpu.matmul %84, %26, %cst_33 {dimension_numbers = #tpu.dot_dimension_numbers<[1], [1], [0], [0], [0, 0, 1, 0], [], []>} : vector<32x32xbf16>, vector<32x32xbf16>, vector<32x32xf32> -> vector<32x32xf32>
    %86 = arith.addf %85, %1 : vector<32x32xf32>
    %cst_34 = arith.constant dense<0xFF800000> : vector<32xf32>
    %87 = vector.multi_reduction <maximumf>, %86, %cst_34 [1] : vector<32x32xf32> to vector<32xf32>
    %88 = vector.shape_cast %87 : vector<32xf32> to vector<32x1xf32>
    %89 = vector.broadcast %88 : vector<32x1xf32> to vector<32x32xf32>
    %90 = arith.subf %86, %89 : vector<32x32xf32>
    %91 = math.exp %90 : vector<32x32xf32>
    %cst_35 = arith.constant dense<0.000000e+00> : vector<32xf32>
    %92 = vector.multi_reduction <add>, %91, %cst_35 [1] : vector<32x32xf32> to vector<32xf32>
    %93 = vector.shape_cast %92 : vector<32xf32> to vector<32x1xf32>
    %94 = tpu.reciprocal %93 {approx = true} : vector<32x1xf32> -> vector<32x1xf32>
    %95 = vector.broadcast %94 : vector<32x1xf32> to vector<32x32xf32>
    %96 = arith.mulf %91, %95 : vector<32x32xf32>
    %97 = vector.extract_strided_slice %25 {offsets = [0, 96], sizes = [32, 32], strides = [1, 1]} : vector<32x128xf32> to vector<32x32xf32>
    %98 = arith.truncf %97 : vector<32x32xf32> to vector<32x32xbf16>
    %99 = arith.truncf %96 : vector<32x32xf32> to vector<32x32xbf16>
    %cst_36 = arith.constant dense<0.000000e+00> : vector<32x32xf32>
    %100 = tpu.matmul %99, %98, %cst_36 {dimension_numbers = #tpu.dot_dimension_numbers<[1], [0], [0], [1], [0, 0, 1, 1], [], []>} : vector<32x32xbf16>, vector<32x32xbf16>, vector<32x32xf32> -> vector<32x32xf32>
    %101 = arith.addf %82, %100 : vector<32x32xf32>
    %102 = arith.addf %0, %101 : vector<32x32xf32>
    %cst_37 = arith.constant dense<0.000000e+00> : vector<32xf32>
    %103 = vector.multi_reduction <add>, %102, %cst_37 [1] : vector<32x32xf32> to vector<32xf32>
    %104 = vector.shape_cast %103 : vector<32xf32> to vector<32x1xf32>
    %cst_38 = arith.constant 3.200000e+01 : f32
    %105 = vector.broadcast %cst_38 : f32 to vector<32x1xf32>
    %106 = arith.divf %104, %105 : vector<32x1xf32>
    %107 = vector.broadcast %106 : vector<32x1xf32> to vector<32x32xf32>
    %108 = arith.subf %102, %107 : vector<32x32xf32>
    %109 = arith.mulf %108, %108 : vector<32x32xf32>
    %cst_39 = arith.constant dense<0.000000e+00> : vector<32xf32>
    %110 = vector.multi_reduction <add>, %109, %cst_39 [1] : vector<32x32xf32> to vector<32xf32>
    %111 = vector.shape_cast %110 : vector<32xf32> to vector<32x1xf32>
    %cst_40 = arith.constant 3.200000e+01 : f32
    %112 = vector.broadcast %cst_40 : f32 to vector<32x1xf32>
    %113 = arith.divf %111, %112 : vector<32x1xf32>
    %114 = vector.broadcast %106 : vector<32x1xf32> to vector<32x32xf32>
    %115 = arith.subf %102, %114 : vector<32x32xf32>
    %cst_41 = arith.constant 9.99999974E-6 : f32
    %116 = vector.broadcast %cst_41 : f32 to vector<32x1xf32>
    %117 = arith.addf %113, %116 : vector<32x1xf32>
    %118 = math.rsqrt %117 : vector<32x1xf32>
    %119 = vector.broadcast %118 : vector<32x1xf32> to vector<32x32xf32>
    %120 = arith.mulf %115, %119 : vector<32x32xf32>
    %121 = vector.broadcast %12 : vector<1x32xf32> to vector<32x32xf32>
    %122 = arith.mulf %120, %121 : vector<32x32xf32>
    %123 = vector.broadcast %13 : vector<1x32xf32> to vector<32x32xf32>
    %124 = arith.addf %122, %123 : vector<32x32xf32>
    %125 = arith.truncf %124 : vector<32x32xf32> to vector<32x32xbf16>
    %cst_42 = arith.constant dense<0.000000e+00> : vector<32x64xf32>
    %126 = tpu.matmul %125, %5, %cst_42 {dimension_numbers = #tpu.dot_dimension_numbers<[1], [1], [0], [0], [0, 0, 1, 0], [], []>} : vector<32x32xbf16>, vector<64x32xbf16>, vector<32x64xf32> -> vector<32x64xf32>
    %127 = vector.broadcast %10 : vector<1x64xf32> to vector<32x64xf32>
    %128 = arith.addf %126, %127 : vector<32x64xf32>
    %cst_43 = arith.constant 0.000000e+00 : f32
    %129 = vector.broadcast %cst_43 : f32 to vector<32x64xf32>
    %130 = arith.maximumf %128, %129 : vector<32x64xf32>
    %131 = arith.truncf %130 : vector<32x64xf32> to vector<32x64xbf16>
    %cst_44 = arith.constant dense<0.000000e+00> : vector<32x32xf32>
    %132 = tpu.matmul %131, %6, %cst_44 {dimension_numbers = #tpu.dot_dimension_numbers<[1], [0], [0], [1], [0, 0, 1, 1], [], []>} : vector<32x64xbf16>, vector<64x32xbf16>, vector<32x32xf32> -> vector<32x32xf32>
    %133 = vector.broadcast %11 : vector<1x32xf32> to vector<32x32xf32>
    %134 = arith.addf %132, %133 : vector<32x32xf32>
    %135 = arith.addf %124, %134 : vector<32x32xf32>
    %cst_45 = arith.constant dense<0.000000e+00> : vector<32xf32>
    %136 = vector.multi_reduction <add>, %135, %cst_45 [1] : vector<32x32xf32> to vector<32xf32>
    %137 = vector.shape_cast %136 : vector<32xf32> to vector<32x1xf32>
    %cst_46 = arith.constant 3.200000e+01 : f32
    %138 = vector.broadcast %cst_46 : f32 to vector<32x1xf32>
    %139 = arith.divf %137, %138 : vector<32x1xf32>
    %140 = vector.broadcast %139 : vector<32x1xf32> to vector<32x32xf32>
    %141 = arith.subf %135, %140 : vector<32x32xf32>
    %142 = arith.mulf %141, %141 : vector<32x32xf32>
    %cst_47 = arith.constant dense<0.000000e+00> : vector<32xf32>
    %143 = vector.multi_reduction <add>, %142, %cst_47 [1] : vector<32x32xf32> to vector<32xf32>
    %144 = vector.shape_cast %143 : vector<32xf32> to vector<32x1xf32>
    %cst_48 = arith.constant 3.200000e+01 : f32
    %145 = vector.broadcast %cst_48 : f32 to vector<32x1xf32>
    %146 = arith.divf %144, %145 : vector<32x1xf32>
    %147 = vector.broadcast %139 : vector<32x1xf32> to vector<32x32xf32>
    %148 = arith.subf %135, %147 : vector<32x32xf32>
    %cst_49 = arith.constant 9.99999974E-6 : f32
    %149 = vector.broadcast %cst_49 : f32 to vector<32x1xf32>
    %150 = arith.addf %146, %149 : vector<32x1xf32>
    %151 = math.rsqrt %150 : vector<32x1xf32>
    %152 = vector.broadcast %151 : vector<32x1xf32> to vector<32x32xf32>
    %153 = arith.mulf %148, %152 : vector<32x32xf32>
    %154 = vector.broadcast %14 : vector<1x32xf32> to vector<32x32xf32>
    %155 = arith.mulf %153, %154 : vector<32x32xf32>
    %156 = vector.broadcast %15 : vector<1x32xf32> to vector<32x32xf32>
    %157 = arith.addf %155, %156 : vector<32x32xf32>
    %c416 = arith.constant 416 : index
    %c0_50 = arith.constant 0 : index
    %158 = vector.load %arg3[%c416, %c0_50] : memref<960x32xbf16, #tpu.memory_space<vmem>>, vector<128x32xbf16>
    %c544 = arith.constant 544 : index
    %c0_51 = arith.constant 0 : index
    %159 = vector.load %arg3[%c544, %c0_51] : memref<960x32xbf16, #tpu.memory_space<vmem>>, vector<32x32xbf16>
    %c576 = arith.constant 576 : index
    %c0_52 = arith.constant 0 : index
    %160 = vector.load %arg3[%c576, %c0_52] : memref<960x32xbf16, #tpu.memory_space<vmem>>, vector<128x32xbf16>
    %c704 = arith.constant 704 : index
    %c0_53 = arith.constant 0 : index
    %161 = vector.load %arg3[%c704, %c0_53] : memref<960x32xbf16, #tpu.memory_space<vmem>>, vector<64x32xbf16>
    %c768 = arith.constant 768 : index
    %c0_54 = arith.constant 0 : index
    %162 = vector.load %arg3[%c768, %c0_54] : memref<960x32xbf16, #tpu.memory_space<vmem>>, vector<64x32xbf16>
    %c9 = arith.constant 9 : index
    %c0_55 = arith.constant 0 : index
    %163 = vector.load %arg4[%c9, %c0_55] : memref<24x128xf32, #tpu.memory_space<vmem>>, vector<1x128xf32>
    %c10 = arith.constant 10 : index
    %c0_56 = arith.constant 0 : index
    %164 = vector.load %arg4[%c10, %c0_56] : memref<24x128xf32, #tpu.memory_space<vmem>>, vector<1x32xf32>
    %c11 = arith.constant 11 : index
    %c0_57 = arith.constant 0 : index
    %165 = vector.load %arg4[%c11, %c0_57] : memref<24x128xf32, #tpu.memory_space<vmem>>, vector<1x128xf32>
    %c12 = arith.constant 12 : index
    %c0_58 = arith.constant 0 : index
    %166 = vector.load %arg4[%c12, %c0_58] : memref<24x128xf32, #tpu.memory_space<vmem>>, vector<1x64xf32>
    %c13 = arith.constant 13 : index
    %c0_59 = arith.constant 0 : index
    %167 = vector.load %arg4[%c13, %c0_59] : memref<24x128xf32, #tpu.memory_space<vmem>>, vector<1x32xf32>
    %c14 = arith.constant 14 : index
    %c0_60 = arith.constant 0 : index
    %168 = vector.load %arg4[%c14, %c0_60] : memref<24x128xf32, #tpu.memory_space<vmem>>, vector<1x32xf32>
    %c15 = arith.constant 15 : index
    %c0_61 = arith.constant 0 : index
    %169 = vector.load %arg4[%c15, %c0_61] : memref<24x128xf32, #tpu.memory_space<vmem>>, vector<1x32xf32>
    %c16 = arith.constant 16 : index
    %c0_62 = arith.constant 0 : index
    %170 = vector.load %arg4[%c16, %c0_62] : memref<24x128xf32, #tpu.memory_space<vmem>>, vector<1x32xf32>
    %c17 = arith.constant 17 : index
    %c0_63 = arith.constant 0 : index
    %171 = vector.load %arg4[%c17, %c0_63] : memref<24x128xf32, #tpu.memory_space<vmem>>, vector<1x32xf32>
    %172 = arith.truncf %157 : vector<32x32xf32> to vector<32x32xbf16>
    %cst_64 = arith.constant dense<0.000000e+00> : vector<32x128xf32>
    %173 = tpu.matmul %172, %158, %cst_64 {dimension_numbers = #tpu.dot_dimension_numbers<[1], [1], [0], [0], [0, 0, 1, 0], [], []>} : vector<32x32xbf16>, vector<128x32xbf16>, vector<32x128xf32> -> vector<32x128xf32>
    %174 = vector.broadcast %163 : vector<1x128xf32> to vector<32x128xf32>
    %175 = arith.addf %173, %174 : vector<32x128xf32>
    %cst_65 = arith.constant dense<0.000000e+00> : vector<32x32xf32>
    %176 = tpu.matmul %172, %159, %cst_65 {dimension_numbers = #tpu.dot_dimension_numbers<[1], [1], [0], [0], [0, 0, 1, 0], [], []>} : vector<32x32xbf16>, vector<32x32xbf16>, vector<32x32xf32> -> vector<32x32xf32>
    %177 = vector.broadcast %164 : vector<1x32xf32> to vector<32x32xf32>
    %178 = arith.addf %176, %177 : vector<32x32xf32>
    %cst_66 = arith.constant dense<0.000000e+00> : vector<32x128xf32>
    %179 = tpu.matmul %172, %160, %cst_66 {dimension_numbers = #tpu.dot_dimension_numbers<[1], [1], [0], [0], [0, 0, 1, 0], [], []>} : vector<32x32xbf16>, vector<128x32xbf16>, vector<32x128xf32> -> vector<32x128xf32>
    %180 = vector.broadcast %165 : vector<1x128xf32> to vector<32x128xf32>
    %181 = arith.addf %179, %180 : vector<32x128xf32>
    %182 = arith.truncf %178 : vector<32x32xf32> to vector<32x32xbf16>
    %183 = vector.extract_strided_slice %175 {offsets = [0, 0], sizes = [32, 32], strides = [1, 1]} : vector<32x128xf32> to vector<32x32xf32>
    %184 = arith.truncf %183 : vector<32x32xf32> to vector<32x32xbf16>
    %cst_67 = arith.constant dense<0.000000e+00> : vector<32x32xf32>
    %185 = tpu.matmul %184, %182, %cst_67 {dimension_numbers = #tpu.dot_dimension_numbers<[1], [1], [0], [0], [0, 0, 1, 0], [], []>} : vector<32x32xbf16>, vector<32x32xbf16>, vector<32x32xf32> -> vector<32x32xf32>
    %186 = arith.addf %185, %1 : vector<32x32xf32>
    %cst_68 = arith.constant dense<0xFF800000> : vector<32xf32>
    %187 = vector.multi_reduction <maximumf>, %186, %cst_68 [1] : vector<32x32xf32> to vector<32xf32>
    %188 = vector.shape_cast %187 : vector<32xf32> to vector<32x1xf32>
    %189 = vector.broadcast %188 : vector<32x1xf32> to vector<32x32xf32>
    %190 = arith.subf %186, %189 : vector<32x32xf32>
    %191 = math.exp %190 : vector<32x32xf32>
    %cst_69 = arith.constant dense<0.000000e+00> : vector<32xf32>
    %192 = vector.multi_reduction <add>, %191, %cst_69 [1] : vector<32x32xf32> to vector<32xf32>
    %193 = vector.shape_cast %192 : vector<32xf32> to vector<32x1xf32>
    %194 = tpu.reciprocal %193 {approx = true} : vector<32x1xf32> -> vector<32x1xf32>
    %195 = vector.broadcast %194 : vector<32x1xf32> to vector<32x32xf32>
    %196 = arith.mulf %191, %195 : vector<32x32xf32>
    %197 = vector.extract_strided_slice %181 {offsets = [0, 0], sizes = [32, 32], strides = [1, 1]} : vector<32x128xf32> to vector<32x32xf32>
    %198 = arith.truncf %197 : vector<32x32xf32> to vector<32x32xbf16>
    %199 = arith.truncf %196 : vector<32x32xf32> to vector<32x32xbf16>
    %cst_70 = arith.constant dense<0.000000e+00> : vector<32x32xf32>
    %200 = tpu.matmul %199, %198, %cst_70 {dimension_numbers = #tpu.dot_dimension_numbers<[1], [0], [0], [1], [0, 0, 1, 1], [], []>} : vector<32x32xbf16>, vector<32x32xbf16>, vector<32x32xf32> -> vector<32x32xf32>
    %201 = vector.extract_strided_slice %175 {offsets = [0, 32], sizes = [32, 32], strides = [1, 1]} : vector<32x128xf32> to vector<32x32xf32>
    %202 = arith.truncf %201 : vector<32x32xf32> to vector<32x32xbf16>
    %cst_71 = arith.constant dense<0.000000e+00> : vector<32x32xf32>
    %203 = tpu.matmul %202, %182, %cst_71 {dimension_numbers = #tpu.dot_dimension_numbers<[1], [1], [0], [0], [0, 0, 1, 0], [], []>} : vector<32x32xbf16>, vector<32x32xbf16>, vector<32x32xf32> -> vector<32x32xf32>
    %204 = arith.addf %203, %1 : vector<32x32xf32>
    %cst_72 = arith.constant dense<0xFF800000> : vector<32xf32>
    %205 = vector.multi_reduction <maximumf>, %204, %cst_72 [1] : vector<32x32xf32> to vector<32xf32>
    %206 = vector.shape_cast %205 : vector<32xf32> to vector<32x1xf32>
    %207 = vector.broadcast %206 : vector<32x1xf32> to vector<32x32xf32>
    %208 = arith.subf %204, %207 : vector<32x32xf32>
    %209 = math.exp %208 : vector<32x32xf32>
    %cst_73 = arith.constant dense<0.000000e+00> : vector<32xf32>
    %210 = vector.multi_reduction <add>, %209, %cst_73 [1] : vector<32x32xf32> to vector<32xf32>
    %211 = vector.shape_cast %210 : vector<32xf32> to vector<32x1xf32>
    %212 = tpu.reciprocal %211 {approx = true} : vector<32x1xf32> -> vector<32x1xf32>
    %213 = vector.broadcast %212 : vector<32x1xf32> to vector<32x32xf32>
    %214 = arith.mulf %209, %213 : vector<32x32xf32>
    %215 = vector.extract_strided_slice %181 {offsets = [0, 32], sizes = [32, 32], strides = [1, 1]} : vector<32x128xf32> to vector<32x32xf32>
    %216 = arith.truncf %215 : vector<32x32xf32> to vector<32x32xbf16>
    %217 = arith.truncf %214 : vector<32x32xf32> to vector<32x32xbf16>
    %cst_74 = arith.constant dense<0.000000e+00> : vector<32x32xf32>
    %218 = tpu.matmul %217, %216, %cst_74 {dimension_numbers = #tpu.dot_dimension_numbers<[1], [0], [0], [1], [0, 0, 1, 1], [], []>} : vector<32x32xbf16>, vector<32x32xbf16>, vector<32x32xf32> -> vector<32x32xf32>
    %219 = arith.addf %200, %218 : vector<32x32xf32>
    %220 = vector.extract_strided_slice %175 {offsets = [0, 64], sizes = [32, 32], strides = [1, 1]} : vector<32x128xf32> to vector<32x32xf32>
    %221 = arith.truncf %220 : vector<32x32xf32> to vector<32x32xbf16>
    %cst_75 = arith.constant dense<0.000000e+00> : vector<32x32xf32>
    %222 = tpu.matmul %221, %182, %cst_75 {dimension_numbers = #tpu.dot_dimension_numbers<[1], [1], [0], [0], [0, 0, 1, 0], [], []>} : vector<32x32xbf16>, vector<32x32xbf16>, vector<32x32xf32> -> vector<32x32xf32>
    %223 = arith.addf %222, %1 : vector<32x32xf32>
    %cst_76 = arith.constant dense<0xFF800000> : vector<32xf32>
    %224 = vector.multi_reduction <maximumf>, %223, %cst_76 [1] : vector<32x32xf32> to vector<32xf32>
    %225 = vector.shape_cast %224 : vector<32xf32> to vector<32x1xf32>
    %226 = vector.broadcast %225 : vector<32x1xf32> to vector<32x32xf32>
    %227 = arith.subf %223, %226 : vector<32x32xf32>
    %228 = math.exp %227 : vector<32x32xf32>
    %cst_77 = arith.constant dense<0.000000e+00> : vector<32xf32>
    %229 = vector.multi_reduction <add>, %228, %cst_77 [1] : vector<32x32xf32> to vector<32xf32>
    %230 = vector.shape_cast %229 : vector<32xf32> to vector<32x1xf32>
    %231 = tpu.reciprocal %230 {approx = true} : vector<32x1xf32> -> vector<32x1xf32>
    %232 = vector.broadcast %231 : vector<32x1xf32> to vector<32x32xf32>
    %233 = arith.mulf %228, %232 : vector<32x32xf32>
    %234 = vector.extract_strided_slice %181 {offsets = [0, 64], sizes = [32, 32], strides = [1, 1]} : vector<32x128xf32> to vector<32x32xf32>
    %235 = arith.truncf %234 : vector<32x32xf32> to vector<32x32xbf16>
    %236 = arith.truncf %233 : vector<32x32xf32> to vector<32x32xbf16>
    %cst_78 = arith.constant dense<0.000000e+00> : vector<32x32xf32>
    %237 = tpu.matmul %236, %235, %cst_78 {dimension_numbers = #tpu.dot_dimension_numbers<[1], [0], [0], [1], [0, 0, 1, 1], [], []>} : vector<32x32xbf16>, vector<32x32xbf16>, vector<32x32xf32> -> vector<32x32xf32>
    %238 = arith.addf %219, %237 : vector<32x32xf32>
    %239 = vector.extract_strided_slice %175 {offsets = [0, 96], sizes = [32, 32], strides = [1, 1]} : vector<32x128xf32> to vector<32x32xf32>
    %240 = arith.truncf %239 : vector<32x32xf32> to vector<32x32xbf16>
    %cst_79 = arith.constant dense<0.000000e+00> : vector<32x32xf32>
    %241 = tpu.matmul %240, %182, %cst_79 {dimension_numbers = #tpu.dot_dimension_numbers<[1], [1], [0], [0], [0, 0, 1, 0], [], []>} : vector<32x32xbf16>, vector<32x32xbf16>, vector<32x32xf32> -> vector<32x32xf32>
    %242 = arith.addf %241, %1 : vector<32x32xf32>
    %cst_80 = arith.constant dense<0xFF800000> : vector<32xf32>
    %243 = vector.multi_reduction <maximumf>, %242, %cst_80 [1] : vector<32x32xf32> to vector<32xf32>
    %244 = vector.shape_cast %243 : vector<32xf32> to vector<32x1xf32>
    %245 = vector.broadcast %244 : vector<32x1xf32> to vector<32x32xf32>
    %246 = arith.subf %242, %245 : vector<32x32xf32>
    %247 = math.exp %246 : vector<32x32xf32>
    %cst_81 = arith.constant dense<0.000000e+00> : vector<32xf32>
    %248 = vector.multi_reduction <add>, %247, %cst_81 [1] : vector<32x32xf32> to vector<32xf32>
    %249 = vector.shape_cast %248 : vector<32xf32> to vector<32x1xf32>
    %250 = tpu.reciprocal %249 {approx = true} : vector<32x1xf32> -> vector<32x1xf32>
    %251 = vector.broadcast %250 : vector<32x1xf32> to vector<32x32xf32>
    %252 = arith.mulf %247, %251 : vector<32x32xf32>
    %253 = vector.extract_strided_slice %181 {offsets = [0, 96], sizes = [32, 32], strides = [1, 1]} : vector<32x128xf32> to vector<32x32xf32>
    %254 = arith.truncf %253 : vector<32x32xf32> to vector<32x32xbf16>
    %255 = arith.truncf %252 : vector<32x32xf32> to vector<32x32xbf16>
    %cst_82 = arith.constant dense<0.000000e+00> : vector<32x32xf32>
    %256 = tpu.matmul %255, %254, %cst_82 {dimension_numbers = #tpu.dot_dimension_numbers<[1], [0], [0], [1], [0, 0, 1, 1], [], []>} : vector<32x32xbf16>, vector<32x32xbf16>, vector<32x32xf32> -> vector<32x32xf32>
    %257 = arith.addf %238, %256 : vector<32x32xf32>
    %258 = arith.addf %157, %257 : vector<32x32xf32>
    %cst_83 = arith.constant dense<0.000000e+00> : vector<32xf32>
    %259 = vector.multi_reduction <add>, %258, %cst_83 [1] : vector<32x32xf32> to vector<32xf32>
    %260 = vector.shape_cast %259 : vector<32xf32> to vector<32x1xf32>
    %cst_84 = arith.constant 3.200000e+01 : f32
    %261 = vector.broadcast %cst_84 : f32 to vector<32x1xf32>
    %262 = arith.divf %260, %261 : vector<32x1xf32>
    %263 = vector.broadcast %262 : vector<32x1xf32> to vector<32x32xf32>
    %264 = arith.subf %258, %263 : vector<32x32xf32>
    %265 = arith.mulf %264, %264 : vector<32x32xf32>
    %cst_85 = arith.constant dense<0.000000e+00> : vector<32xf32>
    %266 = vector.multi_reduction <add>, %265, %cst_85 [1] : vector<32x32xf32> to vector<32xf32>
    %267 = vector.shape_cast %266 : vector<32xf32> to vector<32x1xf32>
    %cst_86 = arith.constant 3.200000e+01 : f32
    %268 = vector.broadcast %cst_86 : f32 to vector<32x1xf32>
    %269 = arith.divf %267, %268 : vector<32x1xf32>
    %270 = vector.broadcast %262 : vector<32x1xf32> to vector<32x32xf32>
    %271 = arith.subf %258, %270 : vector<32x32xf32>
    %cst_87 = arith.constant 9.99999974E-6 : f32
    %272 = vector.broadcast %cst_87 : f32 to vector<32x1xf32>
    %273 = arith.addf %269, %272 : vector<32x1xf32>
    %274 = math.rsqrt %273 : vector<32x1xf32>
    %275 = vector.broadcast %274 : vector<32x1xf32> to vector<32x32xf32>
    %276 = arith.mulf %271, %275 : vector<32x32xf32>
    %277 = vector.broadcast %168 : vector<1x32xf32> to vector<32x32xf32>
    %278 = arith.mulf %276, %277 : vector<32x32xf32>
    %279 = vector.broadcast %169 : vector<1x32xf32> to vector<32x32xf32>
    %280 = arith.addf %278, %279 : vector<32x32xf32>
    %281 = arith.truncf %280 : vector<32x32xf32> to vector<32x32xbf16>
    %cst_88 = arith.constant dense<0.000000e+00> : vector<32x64xf32>
    %282 = tpu.matmul %281, %161, %cst_88 {dimension_numbers = #tpu.dot_dimension_numbers<[1], [1], [0], [0], [0, 0, 1, 0], [], []>} : vector<32x32xbf16>, vector<64x32xbf16>, vector<32x64xf32> -> vector<32x64xf32>
    %283 = vector.broadcast %166 : vector<1x64xf32> to vector<32x64xf32>
    %284 = arith.addf %282, %283 : vector<32x64xf32>
    %cst_89 = arith.constant 0.000000e+00 : f32
    %285 = vector.broadcast %cst_89 : f32 to vector<32x64xf32>
    %286 = arith.maximumf %284, %285 : vector<32x64xf32>
    %287 = arith.truncf %286 : vector<32x64xf32> to vector<32x64xbf16>
    %cst_90 = arith.constant dense<0.000000e+00> : vector<32x32xf32>
    %288 = tpu.matmul %287, %162, %cst_90 {dimension_numbers = #tpu.dot_dimension_numbers<[1], [0], [0], [1], [0, 0, 1, 1], [], []>} : vector<32x64xbf16>, vector<64x32xbf16>, vector<32x32xf32> -> vector<32x32xf32>
    %289 = vector.broadcast %167 : vector<1x32xf32> to vector<32x32xf32>
    %290 = arith.addf %288, %289 : vector<32x32xf32>
    %291 = arith.addf %280, %290 : vector<32x32xf32>
    %cst_91 = arith.constant dense<0.000000e+00> : vector<32xf32>
    %292 = vector.multi_reduction <add>, %291, %cst_91 [1] : vector<32x32xf32> to vector<32xf32>
    %293 = vector.shape_cast %292 : vector<32xf32> to vector<32x1xf32>
    %cst_92 = arith.constant 3.200000e+01 : f32
    %294 = vector.broadcast %cst_92 : f32 to vector<32x1xf32>
    %295 = arith.divf %293, %294 : vector<32x1xf32>
    %296 = vector.broadcast %295 : vector<32x1xf32> to vector<32x32xf32>
    %297 = arith.subf %291, %296 : vector<32x32xf32>
    %298 = arith.mulf %297, %297 : vector<32x32xf32>
    %cst_93 = arith.constant dense<0.000000e+00> : vector<32xf32>
    %299 = vector.multi_reduction <add>, %298, %cst_93 [1] : vector<32x32xf32> to vector<32xf32>
    %300 = vector.shape_cast %299 : vector<32xf32> to vector<32x1xf32>
    %cst_94 = arith.constant 3.200000e+01 : f32
    %301 = vector.broadcast %cst_94 : f32 to vector<32x1xf32>
    %302 = arith.divf %300, %301 : vector<32x1xf32>
    %303 = vector.broadcast %295 : vector<32x1xf32> to vector<32x32xf32>
    %304 = arith.subf %291, %303 : vector<32x32xf32>
    %cst_95 = arith.constant 9.99999974E-6 : f32
    %305 = vector.broadcast %cst_95 : f32 to vector<32x1xf32>
    %306 = arith.addf %302, %305 : vector<32x1xf32>
    %307 = math.rsqrt %306 : vector<32x1xf32>
    %308 = vector.broadcast %307 : vector<32x1xf32> to vector<32x32xf32>
    %309 = arith.mulf %304, %308 : vector<32x32xf32>
    %310 = vector.broadcast %170 : vector<1x32xf32> to vector<32x32xf32>
    %311 = arith.mulf %309, %310 : vector<32x32xf32>
    %312 = vector.broadcast %171 : vector<1x32xf32> to vector<32x32xf32>
    %313 = arith.addf %311, %312 : vector<32x32xf32>
    %c832 = arith.constant 832 : index
    %c0_96 = arith.constant 0 : index
    %314 = vector.load %arg3[%c832, %c0_96] : memref<960x32xbf16, #tpu.memory_space<vmem>>, vector<128x32xbf16>
    %c18 = arith.constant 18 : index
    %c0_97 = arith.constant 0 : index
    %315 = vector.load %arg4[%c18, %c0_97] : memref<24x128xf32, #tpu.memory_space<vmem>>, vector<1x128xf32>
    %316 = arith.truncf %313 : vector<32x32xf32> to vector<32x32xbf16>
    %cst_98 = arith.constant dense<0.000000e+00> : vector<32x128xf32>
    %317 = tpu.matmul %316, %314, %cst_98 {dimension_numbers = #tpu.dot_dimension_numbers<[1], [1], [0], [0], [0, 0, 1, 0], [], []>} : vector<32x32xbf16>, vector<128x32xbf16>, vector<32x128xf32> -> vector<32x128xf32>
    %318 = vector.broadcast %315 : vector<1x128xf32> to vector<32x128xf32>
    %319 = arith.addf %317, %318 : vector<32x128xf32>
    %c0_99 = arith.constant 0 : index
    %c0_100 = arith.constant 0 : index
    %320 = vector.load %arg5[%c0_99, %c0_100] : memref<32x128xf32, #tpu.memory_space<vmem>>, vector<32x128xf32>
    tpu.vector_store %arg5[%c0_99, %c0_100], %319 {strides = array<i32>} : memref<32x128xf32, #tpu.memory_space<vmem>>, vector<32x128xf32>,
    return
  }
  func.func @transform_0(%arg0: i32) -> (i32, i32) {
    %c0_i32 = arith.constant 0 : i32
    %c0_i32_0 = arith.constant 0 : i32
    %c0_i32_1 = arith.constant 0 : i32
    return %c0_i32, %c0_i32_0 : i32, i32
  }
  func.func @transform_1(%arg0: i32) -> (i32, i32) {
    %c0_i32 = arith.constant 0 : i32
    %c0_i32_0 = arith.constant 0 : i32
    %c0_i32_1 = arith.constant 0 : i32
    return %c0_i32, %c0_i32_0 : i32, i32
  }
  func.func @transform_2(%arg0: i32) -> (i32, i32) {
    %c0_i32 = arith.constant 0 : i32
    %c0_i32_0 = arith.constant 0 : i32
    %c0_i32_1 = arith.constant 0 : i32
    return %c0_i32, %c0_i32_0 : i32, i32
  }
  func.func @transform_3(%arg0: i32) -> (i32, i32) {
    %c0_i32 = arith.constant 0 : i32
    %c0_i32_0 = arith.constant 0 : i32
    %c0_i32_1 = arith.constant 0 : i32
    return %c0_i32, %c0_i32_0 : i32, i32
  }
  func.func @transform_4(%arg0: i32) -> (i32, i32) {
    %c0_i32 = arith.constant 0 : i32
    %c0_i32_0 = arith.constant 0 : i32
    %c0_i32_1 = arith.constant 0 : i32
    return %c0_i32, %c0_i32_0 : i32, i32
  }
}

</mosaic_0001>

<llo_original>
// kernel: defmod_forward.1
$region0: #{defmod_forward.1}
  #allocation0 [shape = 'u32[]', space=smem, size = 0x4, offset = 0x4, fixed_abs, tag = 'smem constant byte address 0x4 - core index']
  #allocation1 [shape = 'u32[144,128]{1,0:T(1,128)}', space=vmem, size = 0x12000, scoped, tag = 'internal scratch']
  %s0 = inlined_call_operand.vmem [shape: f32[32,32], index: 0, kind: input, shape index: {}]
  %s1 = inlined_call_operand.vmem [shape: f32[32,32], index: 1, kind: input, shape index: {}]
  %s2 = inlined_call_operand.vmem [shape: bf16[960,32], index: 2, kind: input, shape index: {}]
  %s3 = inlined_call_operand.vmem [shape: f32[24,128], index: 3, kind: input, shape index: {}]
  %s4 = inlined_call_operand.vmem [shape: f32[32,128], index: 4, kind: output, shape index: {}]
  %s5 = sld [smem:[#allocation0]]
  $region26: #{defmod_forward.1} parent=0
    _
  %s7 = ssub.s32 1, %s5
  %s8 = scalar_select 0, %s7, %s5
  // Predicated region
  $region2: #{defmod_forward.1} parent=0 // pred_check
    _
  $region3: #{defmod_forward.1} parent=0 // pred_check_branch
    %10 = sbr.rel (0) target = $region5
  $region4: #{defmod_forward.1} parent=0 // pred_region
    _
  $region5: #{defmod_forward.1} parent=0 // pred_fallthru
    _
  // Predicated region
  $region6: #{defmod_forward.1} parent=0 // pred_check
    _
  $region7: #{defmod_forward.1} parent=0 // pred_check_branch
    %12 = sbr.rel (0) target = $region9
  $region8: #{defmod_forward.1} parent=0 // pred_region
    _
  $region9: #{defmod_forward.1} parent=0 // pred_fallthru
    _
  // Predicated region
  $region10: #{defmod_forward.1} parent=0 // pred_check
    _
  $region11: #{defmod_forward.1} parent=0 // pred_check_branch
    %14 = sbr.rel (0) target = $region13
  $region12: #{defmod_forward.1} parent=0 // pred_region
    _
  $region13: #{defmod_forward.1} parent=0 // pred_fallthru
    _
  // Predicated region
  $region14: #{defmod_forward.1} parent=0 // pred_check
    _
  $region15: #{defmod_forward.1} parent=0 // pred_check_branch
    %16 = sbr.rel (0) target = $region17
  $region16: #{defmod_forward.1} parent=0 // pred_region
    _
  $region17: #{defmod_forward.1} parent=0 // pred_fallthru
    _
  %v18 = vld [vmem:[%s0] sm:$0xff]
  %v19 = vld [vmem:[%s0 + $0x8] sm:$0xff]
  %v20 = vld [vmem:[%s0 + $0x10] sm:$0xff]
  %v21 = vld [vmem:[%s0 + $0x18] sm:$0xff]
  %v22 = vld [vmem:[%s1] sm:$0xff]
  %v23 = vld [vmem:[%s1 + $0x8] sm:$0xff]
  %v24 = vld [vmem:[%s1 + $0x10] sm:$0xff]
  %v25 = vld [vmem:[%s1 + $0x18] sm:$0xff]
  %v26 = vld [vmem:[%s2] sm:$0xf]
  %v27 = vld [vmem:[%s2 + $0x4] sm:$0xf]
  %v28 = vld [vmem:[%s2 + $0x8] sm:$0xf]
  %v29 = vld [vmem:[%s2 + $0xc] sm:$0xf]
  %v30 = vld [vmem:[%s2 + $0x10] sm:$0xf]
  %v31 = vld [vmem:[%s2 + $0x14] sm:$0xf]
  %v32 = vld [vmem:[%s2 + $0x18] sm:$0xf]
  %v33 = vld [vmem:[%s2 + $0x1c] sm:$0xf]
  %v34 = vld [vmem:[%s2 + $0x20] sm:$0xf]
  %v35 = vld [vmem:[%s2 + $0x24] sm:$0xf]
  %v36 = vld [vmem:[%s2 + $0x28] sm:$0xf]
  %v37 = vld [vmem:[%s2 + $0x2c] sm:$0xf]
  %v38 = vld [vmem:[%s2 + $0x30] sm:$0xf]
  %v39 = vld [vmem:[%s2 + $0x34] sm:$0xf]
  %v40 = vld [vmem:[%s2 + $0x38] sm:$0xf]
  %v41 = vld [vmem:[%s2 + $0x3c] sm:$0xf]
  %v42 = vld [vmem:[%s2 + $0x40] sm:$0xf]
  %v43 = vld [vmem:[%s2 + $0x44] sm:$0xf]
  %v44 = vld [vmem:[%s2 + $0x48] sm:$0xf]
  %v45 = vld [vmem:[%s2 + $0x4c] sm:$0xf]
  %v46 = vld [vmem:[%s2 + $0x50] sm:$0xf]
  %v47 = vld [vmem:[%s2 + $0x54] sm:$0xf]
  %v48 = vld [vmem:[%s2 + $0x58] sm:$0xf]
  %v49 = vld [vmem:[%s2 + $0x5c] sm:$0xf]
  %v50 = vld [vmem:[%s2 + $0x60] sm:$0xf]
  %v51 = vld [vmem:[%s2 + $0x64] sm:$0xf]
  %v52 = vld [vmem:[%s2 + $0x68] sm:$0xf]
  %v53 = vld [vmem:[%s2 + $0x6c] sm:$0xf]
  %v54 = vld [vmem:[%s2 + $0x70] sm:$0xf]
  %v55 = vld [vmem:[%s2 + $0x74] sm:$0xf]
  %v56 = vld [vmem:[%s2 + $0x78] sm:$0xf]
  %v57 = vld [vmem:[%s2 + $0x7c] sm:$0xf]
  %v58 = vld [vmem:[%s2 + $0x80] sm:$0xf]
  %v59 = vld [vmem:[%s2 + $0x84] sm:$0xf]
  %v60 = vld [vmem:[%s2 + $0x88] sm:$0xf]
  %v61 = vld [vmem:[%s2 + $0x8c] sm:$0xf]
  %v62 = vld [vmem:[%s2 + $0x90] sm:$0xf]
  %v63 = vld [vmem:[%s2 + $0x94] sm:$0xf]
  %v64 = vld [vmem:[%s2 + $0x98] sm:$0xf]
  %v65 = vld [vmem:[%s2 + $0x9c] sm:$0xf]
  %v66 = vld [vmem:[%s2 + $0xa0] sm:$0xf]
  %v67 = vld [vmem:[%s2 + $0xa4] sm:$0xf]
  %v68 = vld [vmem:[%s2 + $0xa8] sm:$0xf]
  %v69 = vld [vmem:[%s2 + $0xac] sm:$0xf]
  %v70 = vld [vmem:[%s2 + $0xb0] sm:$0xf]
  %v71 = vld [vmem:[%s2 + $0xb4] sm:$0xf]
  %v72 = vld [vmem:[%s2 + $0xb8] sm:$0xf]
  %v73 = vld [vmem:[%s2 + $0xbc] sm:$0xf]
  %v74 = vld [vmem:[%s2 + $0xc0] sm:$0xf]
  %v75 = vld [vmem:[%s2 + $0xc4] sm:$0xf]
  %v76 = vld [vmem:[%s2 + $0xc8] sm:$0xf]
  %v77 = vld [vmem:[%s2 + $0xcc] sm:$0xf]
  %v78 = vld [vmem:[%s3] sm:$0x1]
  %v79 = vld [vmem:[%s3 + $0x1] sm:$0x1]
  %v80 = vld [vmem:[%s3 + $0x2] sm:$0x1]
  %v81 = vld [vmem:[%s3 + $0x3] sm:$0x1]
  %v82 = vld [vmem:[%s3 + $0x4] sm:$0x1]
  %v83 = vld [vmem:[%s3 + $0x5] sm:$0x1]
  %v84 = vld [vmem:[%s3 + $0x6] sm:$0x1]
  %v85 = vld [vmem:[%s3 + $0x7] sm:$0x1]
  %v86 = vld [vmem:[%s3 + $0x8] sm:$0x1]
  %v87 = vpack.c.bf16 %v19, %v18
  %v88 = vpack.c.bf16 %v21, %v20
  %v89 = vlaneseq
  %v90 = vshrl.u32 %v89, 7
  %v91 = vsub.s32 0, %v90
  %v92 = vrot.slane %v78, %v91
  %v109 = vunpack.c.l.b16 %v26
  %v110 = vunpack.c.l.b16 %v27
  %v111 = vunpack.c.l.b16 %v28
  %v112 = vunpack.c.l.b16 %v29
  %v113 = vunpack.c.l.b16 %v30
  %v114 = vunpack.c.l.b16 %v31
  %v115 = vunpack.c.l.b16 %v32
  %v116 = vunpack.c.l.b16 %v33
  %v117 = vunpack.c.l.b16 %v34
  %v118 = vunpack.c.l.b16 %v35
  %v119 = vunpack.c.l.b16 %v36
  %v120 = vunpack.c.l.b16 %v37
  %v121 = vunpack.c.l.b16 %v38
  %v122 = vunpack.c.l.b16 %v39
  %v123 = vunpack.c.l.b16 %v40
  %v124 = vunpack.c.l.b16 %v41
  %v125 = vpack.c.b16 %v110, %v109
  %v126 = vpack.c.b16 %v112, %v111
  %v127 = vpack.c.b16 %v114, %v113
  %v128 = vpack.c.b16 %v116, %v115
  %v129 = vpack.c.b16 %v118, %v117
  %v130 = vpack.c.b16 %v120, %v119
  %v131 = vpack.c.b16 %v122, %v121
  %v132 = vpack.c.b16 %v124, %v123
  %vm133 = vcmask 261120
  %v135 = vsel %vm133, %v87, 0
  %v138 = vsel %vm133, %v88, 0
  %v141 = vsel %vm133, %v125, 0
  %v144 = vsel %vm133, %v126, 0
  %v147 = vsel %vm133, %v127, 0
  %v150 = vsel %vm133, %v128, 0
  %v153 = vsel %vm133, %v129, 0
  %v156 = vsel %vm133, %v130, 0
  %v159 = vsel %vm133, %v131, 0
  %v162 = vsel %vm133, %v132, 0
  %164 = vmatprep.subr.bf16.mxu0 0
  %165 = vmatpush1.bf16.xpose.msra.mxu0 %v141
  %166 = vmatprep.subr.bf16.mxu0 0
  %167 = vmatpush1.bf16.xpose.msra.mxu0 %v144
  %168 = vmatprep.subr.bf16.mxu0 0
  %169 = vmatpush1.bf16.xpose.msra.mxu0 %v147
  %170 = vmatprep.subr.bf16.mxu0 0
  %171 = vmatpush1.bf16.xpose.msra.mxu0 %v150
  %172 = vmatprep.subr.bf16.mxu0 0
  %173 = vmatpush1.bf16.xpose.msra.mxu0 %v153
  %174 = vmatprep.subr.bf16.mxu0 0
  %175 = vmatpush1.bf16.xpose.msra.mxu0 %v156
  %176 = vmatprep.subr.bf16.mxu0 0
  %177 = vmatpush1.bf16.xpose.msra.mxu0 %v159
  %178 = vmatprep.subr.bf16.mxu0 0
  %179 = vmatpush1.bf16.xpose.msra.mxu0 %v162
  %180 = vmatprep.subr.bf16.mxu0 0
  %181 = vmatpush1.bf16.xpose.msra.mxu0 0
  %182 = vmatprep.subr.bf16.mxu0 0
  %183 = vmatpush1.bf16.xpose.msra.mxu0 0
  %184 = vmatprep.subr.bf16.mxu0 0
  %185 = vmatpush1.bf16.xpose.msra.mxu0 0
  %186 = vmatprep.subr.bf16.mxu0 0
  %187 = vmatpush1.bf16.xpose.msra.mxu0 0
  %188 = vmatprep.subr.bf16.mxu0 0
  %189 = vmatpush1.bf16.xpose.msra.mxu0 0
  %190 = vmatprep.subr.bf16.mxu0 0
  %191 = vmatpush1.bf16.xpose.msra.mxu0 0
  %192 = vmatprep.subr.bf16.mxu0 0
  %193 = vmatpush1.bf16.xpose.msra.mxu0 0
  %194 = vmatprep.subr.bf16.mxu0 0
  %195 = vmatpush1.bf16.xpose.msra.mxu0 0
  %196 = vmatprep.mubr.bf16.mxu0 0
  %197 = vmatmul.mubr.bf16.gmra.mrb[0].mxu0 %v135
  %v198 = vpop.f32.mrb[0].mxu0
  %v199 = vadd.f32 %v92, %v198
  %v200 = vpop.f32.mrb[0].mxu0
  %v201 = vpop.f32.mrb[0].mxu0
  %v202 = vadd.f32 %v92, %v201
  %v203 = vpop.f32.mrb[0].mxu0
  %204 = vmatprep.mubr.bf16.mxu0 0
  %205 = vmatmul.mubr.bf16.gmra.mrb[0].mxu0 %v138
  %v206 = vpop.f32.mrb[0].mxu0
  %v207 = vadd.f32 %v92, %v206
  %v208 = vpop.f32.mrb[0].mxu0
  %v209 = vpop.f32.mrb[0].mxu0
  %v210 = vadd.f32 %v92, %v209
  %v211 = vpop.f32.mrb[0].mxu0
  %212 = vdwg.mxu0
  %v213 = vlaneseq
  %v214 = vshrl.u32 %v213, 7
  %v215 = vsub.s32 0, %v214
  %v216 = vrot.slane %v79, %v215
  %v221 = vunpack.c.l.b16 %v42
  %v222 = vunpack.c.l.b16 %v43
  %v223 = vunpack.c.l.b16 %v44
  %v224 = vunpack.c.l.b16 %v45
  %v225 = vpack.c.b16 %v222, %v221
  %v226 = vpack.c.b16 %v224, %v223
  %v228 = vsel %vm133, %v225, 0
  %v231 = vsel %vm133, %v226, 0
  %233 = vmatprep.subr.bf16.mxu0 0
  %234 = vmatpush1.bf16.xpose.msra.mxu0 %v228
  %235 = vmatprep.subr.bf16.mxu0 0
  %236 = vmatpush1.bf16.xpose.msra.mxu0 %v231
  %237 = vmatprep.subr.bf16.mxu0 0
  %238 = vmatpush1.bf16.xpose.msra.mxu0 0
  %239 = vmatprep.subr.bf16.mxu0 0
  %240 = vmatpush1.bf16.xpose.msra.mxu0 0
  %241 = vmatprep.subr.bf16.mxu0 0
  %242 = vmatpush1.bf16.xpose.msra.mxu0 0
  %243 = vmatprep.subr.bf16.mxu0 0
  %244 = vmatpush1.bf16.xpose.msra.mxu0 0
  %245 = vmatprep.subr.bf16.mxu0 0
  %246 = vmatpush1.bf16.xpose.msra.mxu0 0
  %247 = vmatprep.subr.bf16.mxu0 0
  %248 = vmatpush1.bf16.xpose.msra.mxu0 0
  %249 = vmatprep.subr.bf16.mxu0 0
  %250 = vmatpush1.bf16.xpose.msra.mxu0 0
  %251 = vmatprep.subr.bf16.mxu0 0
  %252 = vmatpush1.bf16.xpose.msra.mxu0 0
  %253 = vmatprep.subr.bf16.mxu0 0
  %254 = vmatpush1.bf16.xpose.msra.mxu0 0
  %255 = vmatprep.subr.bf16.mxu0 0
  %256 = vmatpush1.bf16.xpose.msra.mxu0 0
  %257 = vmatprep.subr.bf16.mxu0 0
  %258 = vmatpush1.bf16.xpose.msra.mxu0 0
  %259 = vmatprep.subr.bf16.mxu0 0
  %260 = vmatpush1.bf16.xpose.msra.mxu0 0
  %261 = vmatprep.subr.bf16.mxu0 0
  %262 = vmatpush1.bf16.xpose.msra.mxu0 0
  %263 = vmatprep.subr.bf16.mxu0 0
  %264 = vmatpush1.bf16.xpose.msra.mxu0 0
  %265 = vmatprep.mubr.bf16.mxu0 0
  %266 = vmatmul.mubr.bf16.gmra.mrb[0].mxu0 %v135
  %v267 = vpop.f32.mrb[0].mxu0
  %v268 = vadd.f32 %v216, %v267
  %v269 = vpop.f32.mrb[0].mxu0
  %v270 = vpop.f32.mrb[0].mxu0
  %v271 = vadd.f32 %v216, %v270
  %v272 = vpop.f32.mrb[0].mxu0
  %273 = vmatprep.mubr.bf16.mxu0 0
  %274 = vmatmul.mubr.bf16.gmra.mrb[0].mxu0 %v138
  %v275 = vpop.f32.mrb[0].mxu0
  %v276 = vadd.f32 %v216, %v275
  %v277 = vpop.f32.mrb[0].mxu0
  %v278 = vpop.f32.mrb[0].mxu0
  %v279 = vadd.f32 %v216, %v278
  %v280 = vpop.f32.mrb[0].mxu0
  %281 = vdwg.mxu0
  %v282 = vlaneseq
  %v283 = vshrl.u32 %v282, 7
  %v284 = vsub.s32 0, %v283
  %v285 = vrot.slane %v80, %v284
  %v302 = vunpack.c.l.b16 %v46
  %v303 = vunpack.c.l.b16 %v47
  %v304 = vunpack.c.l.b16 %v48
  %v305 = vunpack.c.l.b16 %v49
  %v306 = vunpack.c.l.b16 %v50
  %v307 = vunpack.c.l.b16 %v51
  %v308 = vunpack.c.l.b16 %v52
  %v309 = vunpack.c.l.b16 %v53
  %v310 = vunpack.c.l.b16 %v54
  %v311 = vunpack.c.l.b16 %v55
  %v312 = vunpack.c.l.b16 %v56
  %v313 = vunpack.c.l.b16 %v57
  %v314 = vunpack.c.l.b16 %v58
  %v315 = vunpack.c.l.b16 %v59
  %v316 = vunpack.c.l.b16 %v60
  %v317 = vunpack.c.l.b16 %v61
  %v318 = vpack.c.b16 %v303, %v302
  %v319 = vpack.c.b16 %v305, %v304
  %v320 = vpack.c.b16 %v307, %v306
  %v321 = vpack.c.b16 %v309, %v308
  %v322 = vpack.c.b16 %v311, %v310
  %v323 = vpack.c.b16 %v313, %v312
  %v324 = vpack.c.b16 %v315, %v314
  %v325 = vpack.c.b16 %v317, %v316
  %v327 = vsel %vm133, %v318, 0
  %v330 = vsel %vm133, %v319, 0
  %v333 = vsel %vm133, %v320, 0
  %v336 = vsel %vm133, %v321, 0
  %v339 = vsel %vm133, %v322, 0
  %v342 = vsel %vm133, %v323, 0
  %v345 = vsel %vm133, %v324, 0
  %v348 = vsel %vm133, %v325, 0
  %350 = vmatprep.subr.bf16.mxu0 0
  %351 = vmatpush1.bf16.xpose.msra.mxu0 %v327
  %352 = vmatprep.subr.bf16.mxu0 0
  %353 = vmatpush1.bf16.xpose.msra.mxu0 %v330
  %354 = vmatprep.subr.bf16.mxu0 0
  %355 = vmatpush1.bf16.xpose.msra.mxu0 %v333
  %356 = vmatprep.subr.bf16.mxu0 0
  %357 = vmatpush1.bf16.xpose.msra.mxu0 %v336
  %358 = vmatprep.subr.bf16.mxu0 0
  %359 = vmatpush1.bf16.xpose.msra.mxu0 %v339
  %360 = vmatprep.subr.bf16.mxu0 0
  %361 = vmatpush1.bf16.xpose.msra.mxu0 %v342
  %362 = vmatprep.subr.bf16.mxu0 0
  %363 = vmatpush1.bf16.xpose.msra.mxu0 %v345
  %364 = vmatprep.subr.bf16.mxu0 0
  %365 = vmatpush1.bf16.xpose.msra.mxu0 %v348
  %366 = vmatprep.subr.bf16.mxu0 0
  %367 = vmatpush1.bf16.xpose.msra.mxu0 0
  %368 = vmatprep.subr.bf16.mxu0 0
  %369 = vmatpush1.bf16.xpose.msra.mxu0 0
  %370 = vmatprep.subr.bf16.mxu0 0
  %371 = vmatpush1.bf16.xpose.msra.mxu0 0
  %372 = vmatprep.subr.bf16.mxu0 0
  %373 = vmatpush1.bf16.xpose.msra.mxu0 0
  %374 = vmatprep.subr.bf16.mxu0 0
  %375 = vmatpush1.bf16.xpose.msra.mxu0 0
  %376 = vmatprep.subr.bf16.mxu0 0
  %377 = vmatpush1.bf16.xpose.msra.mxu0 0
  %378 = vmatprep.subr.bf16.mxu0 0
  %379 = vmatpush1.bf16.xpose.msra.mxu0 0
  %380 = vmatprep.subr.bf16.mxu0 0
  %381 = vmatpush1.bf16.xpose.msra.mxu0 0
  %382 = vmatprep.mubr.bf16.mxu0 0
  %383 = vmatmul.mubr.bf16.gmra.mrb[0].mxu0 %v135
  %v384 = vpop.f32.mrb[0].mxu0
  %v385 = vadd.f32 %v285, %v384
  %v386 = vpop.f32.mrb[0].mxu0
  %v387 = vpop.f32.mrb[0].mxu0
  %v388 = vadd.f32 %v285, %v387
  %v389 = vpop.f32.mrb[0].mxu0
  %390 = vmatprep.mubr.bf16.mxu0 0
  %391 = vmatmul.mubr.bf16.gmra.mrb[0].mxu0 %v138
  %v392 = vpop.f32.mrb[0].mxu0
  %v393 = vadd.f32 %v285, %v392
  %v394 = vpop.f32.mrb[0].mxu0
  %v395 = vpop.f32.mrb[0].mxu0
  %v396 = vadd.f32 %v285, %v395
  %v397 = vpop.f32.mrb[0].mxu0
  %398 = vdwg.mxu0
  %v399 = vpack.c.bf16 %v271, %v268
  %v400 = vpack.c.bf16 %v279, %v276
  %v401 = vpack.c.bf16 %v202, %v199
  %v402 = vpack.c.bf16 %v210, %v207
  %v404 = vsel %vm133, %v401, 0
  %v407 = vsel %vm133, %v402, 0
  %v410 = vsel %vm133, %v399, 0
  %v413 = vsel %vm133, %v400, 0
  %415 = vmatprep.subr.bf16.mxu0 0
  %416 = vmatpush1.bf16.xpose.msra.mxu0 %v410
  %417 = vmatprep.subr.bf16.mxu0 0
  %418 = vmatpush1.bf16.xpose.msra.mxu0 %v413
  %419 = vmatprep.subr.bf16.mxu0 0
  %420 = vmatpush1.bf16.xpose.msra.mxu0 0
  %421 = vmatprep.subr.bf16.mxu0 0
  %422 = vmatpush1.bf16.xpose.msra.mxu0 0
  %423 = vmatprep.subr.bf16.mxu0 0
  %424 = vmatpush1.bf16.xpose.msra.mxu0 0
  %425 = vmatprep.subr.bf16.mxu0 0
  %426 = vmatpush1.bf16.xpose.msra.mxu0 0
  %427 = vmatprep.subr.bf16.mxu0 0
  %428 = vmatpush1.bf16.xpose.msra.mxu0 0
  %429 = vmatprep.subr.bf16.mxu0 0
  %430 = vmatpush1.bf16.xpose.msra.mxu0 0
  %431 = vmatprep.subr.bf16.mxu0 0
  %432 = vmatpush1.bf16.xpose.msra.mxu0 0
  %433 = vmatprep.subr.bf16.mxu0 0
  %434 = vmatpush1.bf16.xpose.msra.mxu0 0
  %435 = vmatprep.subr.bf16.mxu0 0
  %436 = vmatpush1.bf16.xpose.msra.mxu0 0
  %437 = vmatprep.subr.bf16.mxu0 0
  %438 = vmatpush1.bf16.xpose.msra.mxu0 0
  %439 = vmatprep.subr.bf16.mxu0 0
  %440 = vmatpush1.bf16.xpose.msra.mxu0 0
  %441 = vmatprep.subr.bf16.mxu0 0
  %442 = vmatpush1.bf16.xpose.msra.mxu0 0
  %443 = vmatprep.subr.bf16.mxu0 0
  %444 = vmatpush1.bf16.xpose.msra.mxu0 0
  %445 = vmatprep.subr.bf16.mxu0 0
  %446 = vmatpush1.bf16.xpose.msra.mxu0 0
  %447 = vmatprep.mubr.bf16.mxu0 0
  %448 = vmatmul.mubr.bf16.gmra.mrb[0].mxu0 %v404
  %v449 = vpop.f32.mrb[0].mxu0
  %v450 = vadd.f32 %v22, %v449
  %v451 = vpop.f32.mrb[0].mxu0
  %v452 = vpop.f32.mrb[0].mxu0
  %v453 = vadd.f32 %v23, %v452
  %v454 = vpop.f32.mrb[0].mxu0
  %455 = vmatprep.mubr.bf16.mxu0 0
  %456 = vmatmul.mubr.bf16.gmra.mrb[0].mxu0 %v407
  %v457 = vpop.f32.mrb[0].mxu0
  %v458 = vadd.f32 %v24, %v457
  %v459 = vpop.f32.mrb[0].mxu0
  %v460 = vpop.f32.mrb[0].mxu0
  %v461 = vadd.f32 %v25, %v460
  %v462 = vpop.f32.mrb[0].mxu0
  %463 = vdwg.mxu0
  %v464 = vsel %vm133, %v450, -inf
  %465 = vmax.xlane.f32.xlu0 %v464
  %v466 = vpop.xlane.xlu0 %465
  %v467 = vsel %vm133, %v453, -inf
  %468 = vmax.xlane.f32.xlu0 %v467
  %v469 = vpop.xlane.xlu0 %468
  %v470 = vsel %vm133, %v458, -inf
  %471 = vmax.xlane.f32.xlu0 %v470
  %v472 = vpop.xlane.xlu0 %471
  %v473 = vsel %vm133, %v461, -inf
  %474 = vmax.xlane.f32.xlu0 %v473
  %v475 = vpop.xlane.xlu0 %474
  %v476 = vsub.f32 %v450, %v466
  %v477 = vsub.f32 %v453, %v469
  %v478 = vsub.f32 %v458, %v472
  %v479 = vsub.f32 %v461, %v475
  %v480 = vmul.f32 %v476, 1.442695
  %v481 = vpow.pop %v480
  %v482 = vmul.f32 %v477, 1.442695
  %v483 = vpow.pop %v482
  %v484 = vmul.f32 %v478, 1.442695
  %v485 = vpow.pop %v484
  %v486 = vmul.f32 %v479, 1.442695
  %v487 = vpow.pop %v486
  %v488 = vsel %vm133, %v481, 0.0
  %489 = vadd.xlane.f32.xlu0 %v488
  %v490 = vpop.xlane.xlu0 %489
  %v491 = vsel %vm133, %v483, 0.0
  %492 = vadd.xlane.f32.xlu0 %v491
  %v493 = vpop.xlane.xlu0 %492
  %v494 = vsel %vm133, %v485, 0.0
  %495 = vadd.xlane.f32.xlu0 %v494
  %v496 = vpop.xlane.xlu0 %495
  %v497 = vsel %vm133, %v487, 0.0
  %498 = vadd.xlane.f32.xlu0 %v497
  %v499 = vpop.xlane.xlu0 %498
  %v500 = vrcp.pop %v490
  %v501 = vrcp.pop %v493
  %v502 = vrcp.pop %v496
  %v503 = vrcp.pop %v499
  %v504 = vmul.f32 %v481, %v500
  %v505 = vmul.f32 %v483, %v501
  %v506 = vmul.f32 %v485, %v502
  %v507 = vmul.f32 %v487, %v503
  %v508 = vpack.c.bf16 %v388, %v385
  %v509 = vpack.c.bf16 %v396, %v393
  %v510 = vpack.c.bf16 %v505, %v504
  %v511 = vpack.c.bf16 %v507, %v506
  %514 = vrot.lane.b32.xlu0 %v401, 96
  %v515 = vpop.permute.xlu0 %514
  %516 = vrot.lane.b32.xlu0 %v402, 96
  %v517 = vpop.permute.xlu0 %516
  %v519 = vsel %vm133, %v515, 0
  %v522 = vsel %vm133, %v517, 0
  %524 = vmatprep.subr.bf16.mxu0 0
  %525 = vmatpush1.bf16.xpose.msra.mxu0 %v410
  %526 = vmatprep.subr.bf16.mxu0 0
  %527 = vmatpush1.bf16.xpose.msra.mxu0 %v413
  %528 = vmatprep.subr.bf16.mxu0 0
  %529 = vmatpush1.bf16.xpose.msra.mxu0 0
  %530 = vmatprep.subr.bf16.mxu0 0
  %531 = vmatpush1.bf16.xpose.msra.mxu0 0
  %532 = vmatprep.subr.bf16.mxu0 0
  %533 = vmatpush1.bf16.xpose.msra.mxu0 0
  %534 = vmatprep.subr.bf16.mxu0 0
  %535 = vmatpush1.bf16.xpose.msra.mxu0 0
  %536 = vmatprep.subr.bf16.mxu0 0
  %537 = vmatpush1.bf16.xpose.msra.mxu0 0
  %538 = vmatprep.subr.bf16.mxu0 0
  %539 = vmatpush1.bf16.xpose.msra.mxu0 0
  %540 = vmatprep.subr.bf16.mxu0 0
  %541 = vmatpush1.bf16.xpose.msra.mxu0 0
  %542 = vmatprep.subr.bf16.mxu0 0
  %543 = vmatpush1.bf16.xpose.msra.mxu0 0
  %544 = vmatprep.subr.bf16.mxu0 0
  %545 = vmatpush1.bf16.xpose.msra.mxu0 0
  %546 = vmatprep.subr.bf16.mxu0 0
  %547 = vmatpush1.bf16.xpose.msra.mxu0 0
  %548 = vmatprep.subr.bf16.mxu0 0
  %549 = vmatpush1.bf16.xpose.msra.mxu0 0
  %550 = vmatprep.subr.bf16.mxu0 0
  %551 = vmatpush1.bf16.xpose.msra.mxu0 0
  %552 = vmatprep.subr.bf16.mxu0 0
  %553 = vmatpush1.bf16.xpose.msra.mxu0 0
  %554 = vmatprep.subr.bf16.mxu0 0
  %555 = vmatpush1.bf16.xpose.msra.mxu0 0
  %556 = vmatprep.mubr.bf16.mxu0 0
  %557 = vmatmul.mubr.bf16.gmra.mrb[0].mxu0 %v519
  %v558 = vpop.f32.mrb[0].mxu0
  %v559 = vadd.f32 %v22, %v558
  %v560 = vpop.f32.mrb[0].mxu0
  %v561 = vpop.f32.mrb[0].mxu0
  %v562 = vadd.f32 %v23, %v561
  %v563 = vpop.f32.mrb[0].mxu0
  %564 = vmatprep.mubr.bf16.mxu0 0
  %565 = vmatmul.mubr.bf16.gmra.mrb[0].mxu0 %v522
  %v566 = vpop.f32.mrb[0].mxu0
  %v567 = vadd.f32 %v24, %v566
  %v568 = vpop.f32.mrb[0].mxu0
  %v569 = vpop.f32.mrb[0].mxu0
  %v570 = vadd.f32 %v25, %v569
  %v571 = vpop.f32.mrb[0].mxu0
  %572 = vdwg.mxu0
  %v573 = vsel %vm133, %v559, -inf
  %574 = vmax.xlane.f32.xlu0 %v573
  %v575 = vpop.xlane.xlu0 %574
  %v576 = vsel %vm133, %v562, -inf
  %577 = vmax.xlane.f32.xlu0 %v576
  %v578 = vpop.xlane.xlu0 %577
  %v579 = vsel %vm133, %v567, -inf
  %580 = vmax.xlane.f32.xlu0 %v579
  %v581 = vpop.xlane.xlu0 %580
  %v582 = vsel %vm133, %v570, -inf
  %583 = vmax.xlane.f32.xlu0 %v582
  %v584 = vpop.xlane.xlu0 %583
  %v585 = vsub.f32 %v559, %v575
  %v586 = vsub.f32 %v562, %v578
  %v587 = vsub.f32 %v567, %v581
  %v588 = vsub.f32 %v570, %v584
  %v589 = vmul.f32 %v585, 1.442695
  %v590 = vpow.pop %v589
  %v591 = vmul.f32 %v586, 1.442695
  %v592 = vpow.pop %v591
  %v593 = vmul.f32 %v587, 1.442695
  %v594 = vpow.pop %v593
  %v595 = vmul.f32 %v588, 1.442695
  %v596 = vpow.pop %v595
  %v597 = vsel %vm133, %v590, 0.0
  %598 = vadd.xlane.f32.xlu0 %v597
  %v599 = vpop.xlane.xlu0 %598
  %v600 = vsel %vm133, %v592, 0.0
  %601 = vadd.xlane.f32.xlu0 %v600
  %v602 = vpop.xlane.xlu0 %601
  %v603 = vsel %vm133, %v594, 0.0
  %604 = vadd.xlane.f32.xlu0 %v603
  %v605 = vpop.xlane.xlu0 %604
  %v606 = vsel %vm133, %v596, 0.0
  %607 = vadd.xlane.f32.xlu0 %v606
  %v608 = vpop.xlane.xlu0 %607
  %v609 = vrcp.pop %v599
  %v610 = vrcp.pop %v602
  %v611 = vrcp.pop %v605
  %v612 = vrcp.pop %v608
  %v613 = vmul.f32 %v590, %v609
  %v614 = vmul.f32 %v592, %v610
  %v615 = vmul.f32 %v594, %v611
  %v616 = vmul.f32 %v596, %v612
  %v617 = vpack.c.bf16 %v614, %v613
  %v618 = vpack.c.bf16 %v616, %v615
  %621 = vrot.lane.b32.xlu0 %v508, 96
  %v622 = vpop.permute.xlu0 %621
  %623 = vrot.lane.b32.xlu0 %v509, 96
  %v624 = vpop.permute.xlu0 %623
  %v628 = vsel %vm133, %v617, 0
  %v631 = vsel %vm133, %v618, 0
  %633 = vmatprep.subr.bf16.mxu0 0
  %634 = vmatpush1.bf16.msra.mxu0 %v622
  %635 = vmatprep.subr.bf16.mxu0 0
  %636 = vmatpush1.bf16.msra.mxu0 %v624
  %637 = vmatprep.subr.bf16.mxu0 0
  %638 = vmatpush1.bf16.msra.mxu0 0
  %639 = vmatprep.subr.bf16.mxu0 0
  %640 = vmatpush1.bf16.msra.mxu0 0
  %641 = vmatprep.subr.bf16.mxu0 0
  %642 = vmatpush1.bf16.msra.mxu0 0
  %643 = vmatprep.subr.bf16.mxu0 0
  %644 = vmatpush1.bf16.msra.mxu0 0
  %645 = vmatprep.subr.bf16.mxu0 0
  %646 = vmatpush1.bf16.msra.mxu0 0
  %647 = vmatprep.subr.bf16.mxu0 0
  %648 = vmatpush1.bf16.msra.mxu0 0
  %649 = vmatprep.subr.bf16.mxu0 0
  %650 = vmatpush1.bf16.msra.mxu0 0
  %651 = vmatprep.subr.bf16.mxu0 0
  %652 = vmatpush1.bf16.msra.mxu0 0
  %653 = vmatprep.subr.bf16.mxu0 0
  %654 = vmatpush1.bf16.msra.mxu0 0
  %655 = vmatprep.subr.bf16.mxu0 0
  %656 = vmatpush1.bf16.msra.mxu0 0
  %657 = vmatprep.subr.bf16.mxu0 0
  %658 = vmatpush1.bf16.msra.mxu0 0
  %659 = vmatprep.subr.bf16.mxu0 0
  %660 = vmatpush1.bf16.msra.mxu0 0
  %661 = vmatprep.subr.bf16.mxu0 0
  %662 = vmatpush1.bf16.msra.mxu0 0
  %663 = vmatprep.subr.bf16.mxu0 0
  %664 = vmatpush1.bf16.msra.mxu0 0
  %665 = vmatprep.mubr.bf16.mxu0 0
  %666 = vmatmul.mubr.bf16.gmra.mrb[0].mxu0 %v628
  %v667 = vpop.f32.mrb[0].mxu0
  %v668 = vadd.f32 0.0, %v667
  %v669 = vpop.f32.mrb[0].mxu0
  %v670 = vpop.f32.mrb[0].mxu0
  %v671 = vadd.f32 0.0, %v670
  %v672 = vpop.f32.mrb[0].mxu0
  %673 = vmatprep.mubr.bf16.mxu0 0
  %674 = vmatmul.mubr.bf16.gmra.mrb[0].mxu0 %v631
  %v675 = vpop.f32.mrb[0].mxu0
  %v676 = vadd.f32 0.0, %v675
  %v677 = vpop.f32.mrb[0].mxu0
  %v678 = vpop.f32.mrb[0].mxu0
  %v679 = vadd.f32 0.0, %v678
  %v680 = vpop.f32.mrb[0].mxu0
  %681 = vdwg.mxu0
  %v683 = vsel %vm133, %v510, 0
  %v686 = vsel %vm133, %v511, 0
  %688 = vmatprep.subr.bf16.mxu0 0
  %689 = vmatpush1.bf16.msra.mxu0 %v508
  %690 = vmatprep.subr.bf16.mxu0 0
  %691 = vmatpush1.bf16.msra.mxu0 %v509
  %692 = vmatprep.subr.bf16.mxu0 0
  %693 = vmatpush1.bf16.msra.mxu0 0
  %694 = vmatprep.subr.bf16.mxu0 0
  %695 = vmatpush1.bf16.msra.mxu0 0
  %696 = vmatprep.subr.bf16.mxu0 0
  %697 = vmatpush1.bf16.msra.mxu0 0
  %698 = vmatprep.subr.bf16.mxu0 0
  %699 = vmatpush1.bf16.msra.mxu0 0
  %700 = vmatprep.subr.bf16.mxu0 0
  %701 = vmatpush1.bf16.msra.mxu0 0
  %702 = vmatprep.subr.bf16.mxu0 0
  %703 = vmatpush1.bf16.msra.mxu0 0
  %704 = vmatprep.subr.bf16.mxu0 0
  %705 = vmatpush1.bf16.msra.mxu0 0
  %706 = vmatprep.subr.bf16.mxu0 0
  %707 = vmatpush1.bf16.msra.mxu0 0
  %708 = vmatprep.subr.bf16.mxu0 0
  %709 = vmatpush1.bf16.msra.mxu0 0
  %710 = vmatprep.subr.bf16.mxu0 0
  %711 = vmatpush1.bf16.msra.mxu0 0
  %712 = vmatprep.subr.bf16.mxu0 0
  %713 = vmatpush1.bf16.msra.mxu0 0
  %714 = vmatprep.subr.bf16.mxu0 0
  %715 = vmatpush1.bf16.msra.mxu0 0
  %716 = vmatprep.subr.bf16.mxu0 0
  %717 = vmatpush1.bf16.msra.mxu0 0
  %718 = vmatprep.subr.bf16.mxu0 0
  %719 = vmatpush1.bf16.msra.mxu0 0
  %720 = vmatprep.mubr.bf16.mxu0 0
  %721 = vmatmul.mubr.bf16.gmra.mrb[0].mxu0 %v683
  %v722 = vpop.f32.mrb[0].mxu0
  %v723 = vadd.f32 %v668, %v722
  %v724 = vpop.f32.mrb[0].mxu0
  %v725 = vpop.f32.mrb[0].mxu0
  %v726 = vadd.f32 %v671, %v725
  %v727 = vpop.f32.mrb[0].mxu0
  %728 = vmatprep.mubr.bf16.mxu0 0
  %729 = vmatmul.mubr.bf16.gmra.mrb[0].mxu0 %v686
  %v730 = vpop.f32.mrb[0].mxu0
  %v731 = vadd.f32 %v676, %v730
  %v732 = vpop.f32.mrb[0].mxu0
  %v733 = vpop.f32.mrb[0].mxu0
  %v734 = vadd.f32 %v679, %v733
  %v735 = vpop.f32.mrb[0].mxu0
  %736 = vdwg.mxu0
  %737 = vrot.lane.b32.xlu0 %v401, 64
  %v738 = vpop.permute.xlu0 %737
  %739 = vrot.lane.b32.xlu0 %v402, 64
  %v740 = vpop.permute.xlu0 %739
  %v742 = vsel %vm133, %v738, 0
  %v745 = vsel %vm133, %v740, 0
  %747 = vmatprep.subr.bf16.mxu0 0
  %748 = vmatpush1.bf16.xpose.msra.mxu0 %v410
  %749 = vmatprep.subr.bf16.mxu0 0
  %750 = vmatpush1.bf16.xpose.msra.mxu0 %v413
  %751 = vmatprep.subr.bf16.mxu0 0
  %752 = vmatpush1.bf16.xpose.msra.mxu0 0
  %753 = vmatprep.subr.bf16.mxu0 0
  %754 = vmatpush1.bf16.xpose.msra.mxu0 0
  %755 = vmatprep.subr.bf16.mxu0 0
  %756 = vmatpush1.bf16.xpose.msra.mxu0 0
  %757 = vmatprep.subr.bf16.mxu0 0
  %758 = vmatpush1.bf16.xpose.msra.mxu0 0
  %759 = vmatprep.subr.bf16.mxu0 0
  %760 = vmatpush1.bf16.xpose.msra.mxu0 0
  %761 = vmatprep.subr.bf16.mxu0 0
  %762 = vmatpush1.bf16.xpose.msra.mxu0 0
  %763 = vmatprep.subr.bf16.mxu0 0
  %764 = vmatpush1.bf16.xpose.msra.mxu0 0
  %765 = vmatprep.subr.bf16.mxu0 0
  %766 = vmatpush1.bf16.xpose.msra.mxu0 0
  %767 = vmatprep.subr.bf16.mxu0 0
  %768 = vmatpush1.bf16.xpose.msra.mxu0 0
  %769 = vmatprep.subr.bf16.mxu0 0
  %770 = vmatpush1.bf16.xpose.msra.mxu0 0
  %771 = vmatprep.subr.bf16.mxu0 0
  %772 = vmatpush1.bf16.xpose.msra.mxu0 0
  %773 = vmatprep.subr.bf16.mxu0 0
  %774 = vmatpush1.bf16.xpose.msra.mxu0 0
  %775 = vmatprep.subr.bf16.mxu0 0
  %776 = vmatpush1.bf16.xpose.msra.mxu0 0
  %777 = vmatprep.subr.bf16.mxu0 0
  %778 = vmatpush1.bf16.xpose.msra.mxu0 0
  %779 = vmatprep.mubr.bf16.mxu0 0
  %780 = vmatmul.mubr.bf16.gmra.mrb[0].mxu0 %v742
  %v781 = vpop.f32.mrb[0].mxu0
  %v782 = vadd.f32 %v22, %v781
  %v783 = vpop.f32.mrb[0].mxu0
  %v784 = vpop.f32.mrb[0].mxu0
  %v785 = vadd.f32 %v23, %v784
  %v786 = vpop.f32.mrb[0].mxu0
  %787 = vmatprep.mubr.bf16.mxu0 0
  %788 = vmatmul.mubr.bf16.gmra.mrb[0].mxu0 %v745
  %v789 = vpop.f32.mrb[0].mxu0
  %v790 = vadd.f32 %v24, %v789
  %v791 = vpop.f32.mrb[0].mxu0
  %v792 = vpop.f32.mrb[0].mxu0
  %v793 = vadd.f32 %v25, %v792
  %v794 = vpop.f32.mrb[0].mxu0
  %795 = vdwg.mxu0
  %v796 = vsel %vm133, %v782, -inf
  %797 = vmax.xlane.f32.xlu0 %v796
  %v798 = vpop.xlane.xlu0 %797
  %v799 = vsel %vm133, %v785, -inf
  %800 = vmax.xlane.f32.xlu0 %v799
  %v801 = vpop.xlane.xlu0 %800
  %v802 = vsel %vm133, %v790, -inf
  %803 = vmax.xlane.f32.xlu0 %v802
  %v804 = vpop.xlane.xlu0 %803
  %v805 = vsel %vm133, %v793, -inf
  %806 = vmax.xlane.f32.xlu0 %v805
  %v807 = vpop.xlane.xlu0 %806
  %v808 = vsub.f32 %v782, %v798
  %v809 = vsub.f32 %v785, %v801
  %v810 = vsub.f32 %v790, %v804
  %v811 = vsub.f32 %v793, %v807
  %v812 = vmul.f32 %v808, 1.442695
  %v813 = vpow.pop %v812
  %v814 = vmul.f32 %v809, 1.442695
  %v815 = vpow.pop %v814
  %v816 = vmul.f32 %v810, 1.442695
  %v817 = vpow.pop %v816
  %v818 = vmul.f32 %v811, 1.442695
  %v819 = vpow.pop %v818
  %v820 = vsel %vm133, %v813, 0.0
  %821 = vadd.xlane.f32.xlu0 %v820
  %v822 = vpop.xlane.xlu0 %821
  %v823 = vsel %vm133, %v815, 0.0
  %824 = vadd.xlane.f32.xlu0 %v823
  %v825 = vpop.xlane.xlu0 %824
  %v826 = vsel %vm133, %v817, 0.0
  %827 = vadd.xlane.f32.xlu0 %v826
  %v828 = vpop.xlane.xlu0 %827
  %v829 = vsel %vm133, %v819, 0.0
  %830 = vadd.xlane.f32.xlu0 %v829
  %v831 = vpop.xlane.xlu0 %830
  %v832 = vrcp.pop %v822
  %v833 = vrcp.pop %v825
  %v834 = vrcp.pop %v828
  %v835 = vrcp.pop %v831
  %v836 = vmul.f32 %v813, %v832
  %v837 = vmul.f32 %v815, %v833
  %v838 = vmul.f32 %v817, %v834
  %v839 = vmul.f32 %v819, %v835
  %v840 = vpack.c.bf16 %v837, %v836
  %v841 = vpack.c.bf16 %v839, %v838
  %842 = vrot.lane.b32.xlu0 %v508, 64
  %v843 = vpop.permute.xlu0 %842
  %844 = vrot.lane.b32.xlu0 %v509, 64
  %v845 = vpop.permute.xlu0 %844
  %v849 = vsel %vm133, %v840, 0
  %v852 = vsel %vm133, %v841, 0
  %854 = vmatprep.subr.bf16.mxu0 0
  %855 = vmatpush1.bf16.msra.mxu0 %v843
  %856 = vmatprep.subr.bf16.mxu0 0
  %857 = vmatpush1.bf16.msra.mxu0 %v845
  %858 = vmatprep.subr.bf16.mxu0 0
  %859 = vmatpush1.bf16.msra.mxu0 0
  %860 = vmatprep.subr.bf16.mxu0 0
  %861 = vmatpush1.bf16.msra.mxu0 0
  %862 = vmatprep.subr.bf16.mxu0 0
  %863 = vmatpush1.bf16.msra.mxu0 0
  %864 = vmatprep.subr.bf16.mxu0 0
  %865 = vmatpush1.bf16.msra.mxu0 0
  %866 = vmatprep.subr.bf16.mxu0 0
  %867 = vmatpush1.bf16.msra.mxu0 0
  %868 = vmatprep.subr.bf16.mxu0 0
  %869 = vmatpush1.bf16.msra.mxu0 0
  %870 = vmatprep.subr.bf16.mxu0 0
  %871 = vmatpush1.bf16.msra.mxu0 0
  %872 = vmatprep.subr.bf16.mxu0 0
  %873 = vmatpush1.bf16.msra.mxu0 0
  %874 = vmatprep.subr.bf16.mxu0 0
  %875 = vmatpush1.bf16.msra.mxu0 0
  %876 = vmatprep.subr.bf16.mxu0 0
  %877 = vmatpush1.bf16.msra.mxu0 0
  %878 = vmatprep.subr.bf16.mxu0 0
  %879 = vmatpush1.bf16.msra.mxu0 0
  %880 = vmatprep.subr.bf16.mxu0 0
  %881 = vmatpush1.bf16.msra.mxu0 0
  %882 = vmatprep.subr.bf16.mxu0 0
  %883 = vmatpush1.bf16.msra.mxu0 0
  %884 = vmatprep.subr.bf16.mxu0 0
  %885 = vmatpush1.bf16.msra.mxu0 0
  %886 = vmatprep.mubr.bf16.mxu0 0
  %887 = vmatmul.mubr.bf16.gmra.mrb[0].mxu0 %v849
  %v888 = vpop.f32.mrb[0].mxu0
  %v889 = vadd.f32 0.0, %v888
  %v890 = vpop.f32.mrb[0].mxu0
  %v891 = vpop.f32.mrb[0].mxu0
  %v892 = vadd.f32 0.0, %v891
  %v893 = vpop.f32.mrb[0].mxu0
  %894 = vmatprep.mubr.bf16.mxu0 0
  %895 = vmatmul.mubr.bf16.gmra.mrb[0].mxu0 %v852
  %v896 = vpop.f32.mrb[0].mxu0
  %v897 = vadd.f32 0.0, %v896
  %v898 = vpop.f32.mrb[0].mxu0
  %v899 = vpop.f32.mrb[0].mxu0
  %v900 = vadd.f32 0.0, %v899
  %v901 = vpop.f32.mrb[0].mxu0
  %902 = vdwg.mxu0
  %v903 = vadd.f32 %v723, %v889
  %v904 = vadd.f32 %v726, %v892
  %v905 = vadd.f32 %v731, %v897
  %v906 = vadd.f32 %v734, %v900
  %907 = vrot.lane.b32.xlu0 %v401, 32
  %v908 = vpop.permute.xlu0 %907
  %909 = vrot.lane.b32.xlu0 %v402, 32
  %v910 = vpop.permute.xlu0 %909
  %v912 = vsel %vm133, %v908, 0
  %v915 = vsel %vm133, %v910, 0
  %917 = vmatprep.subr.bf16.mxu0 0
  %918 = vmatpush1.bf16.xpose.msra.mxu0 %v410
  %919 = vmatprep.subr.bf16.mxu0 0
  %920 = vmatpush1.bf16.xpose.msra.mxu0 %v413
  %921 = vmatprep.subr.bf16.mxu0 0
  %922 = vmatpush1.bf16.xpose.msra.mxu0 0
  %923 = vmatprep.subr.bf16.mxu0 0
  %924 = vmatpush1.bf16.xpose.msra.mxu0 0
  %925 = vmatprep.subr.bf16.mxu0 0
  %926 = vmatpush1.bf16.xpose.msra.mxu0 0
  %927 = vmatprep.subr.bf16.mxu0 0
  %928 = vmatpush1.bf16.xpose.msra.mxu0 0
  %929 = vmatprep.subr.bf16.mxu0 0
  %930 = vmatpush1.bf16.xpose.msra.mxu0 0
  %931 = vmatprep.subr.bf16.mxu0 0
  %932 = vmatpush1.bf16.xpose.msra.mxu0 0
  %933 = vmatprep.subr.bf16.mxu0 0
  %934 = vmatpush1.bf16.xpose.msra.mxu0 0
  %935 = vmatprep.subr.bf16.mxu0 0
  %936 = vmatpush1.bf16.xpose.msra.mxu0 0
  %937 = vmatprep.subr.bf16.mxu0 0
  %938 = vmatpush1.bf16.xpose.msra.mxu0 0
  %939 = vmatprep.subr.bf16.mxu0 0
  %940 = vmatpush1.bf16.xpose.msra.mxu0 0
  %941 = vmatprep.subr.bf16.mxu0 0
  %942 = vmatpush1.bf16.xpose.msra.mxu0 0
  %943 = vmatprep.subr.bf16.mxu0 0
  %944 = vmatpush1.bf16.xpose.msra.mxu0 0
  %945 = vmatprep.subr.bf16.mxu0 0
  %946 = vmatpush1.bf16.xpose.msra.mxu0 0
  %947 = vmatprep.subr.bf16.mxu0 0
  %948 = vmatpush1.bf16.xpose.msra.mxu0 0
  %949 = vmatprep.mubr.bf16.mxu0 0
  %950 = vmatmul.mubr.bf16.gmra.mrb[0].mxu0 %v912
  %v951 = vpop.f32.mrb[0].mxu0
  %v952 = vadd.f32 %v22, %v951
  %v953 = vpop.f32.mrb[0].mxu0
  %v954 = vpop.f32.mrb[0].mxu0
  %v955 = vadd.f32 %v23, %v954
  %v956 = vpop.f32.mrb[0].mxu0
  %957 = vmatprep.mubr.bf16.mxu0 0
  %958 = vmatmul.mubr.bf16.gmra.mrb[0].mxu0 %v915
  %v959 = vpop.f32.mrb[0].mxu0
  %v960 = vadd.f32 %v24, %v959
  %v961 = vpop.f32.mrb[0].mxu0
  %v962 = vpop.f32.mrb[0].mxu0
  %v963 = vadd.f32 %v25, %v962
  %v964 = vpop.f32.mrb[0].mxu0
  %965 = vdwg.mxu0
  %v966 = vsel %vm133, %v952, -inf
  %967 = vmax.xlane.f32.xlu0 %v966
  %v968 = vpop.xlane.xlu0 %967
  %v969 = vsel %vm133, %v955, -inf
  %970 = vmax.xlane.f32.xlu0 %v969
  %v971 = vpop.xlane.xlu0 %970
  %v972 = vsel %vm133, %v960, -inf
  %973 = vmax.xlane.f32.xlu0 %v972
  %v974 = vpop.xlane.xlu0 %973
  %v975 = vsel %vm133, %v963, -inf
  %976 = vmax.xlane.f32.xlu0 %v975
  %v977 = vpop.xlane.xlu0 %976
  %v978 = vsub.f32 %v952, %v968
  %v979 = vsub.f32 %v955, %v971
  %v980 = vsub.f32 %v960, %v974
  %v981 = vsub.f32 %v963, %v977
  %v982 = vmul.f32 %v978, 1.442695
  %v983 = vpow.pop %v982
  %v984 = vmul.f32 %v979, 1.442695
  %v985 = vpow.pop %v984
  %v986 = vmul.f32 %v980, 1.442695
  %v987 = vpow.pop %v986
  %v988 = vmul.f32 %v981, 1.442695
  %v989 = vpow.pop %v988
  %v990 = vsel %vm133, %v983, 0.0
  %991 = vadd.xlane.f32.xlu0 %v990
  %v992 = vpop.xlane.xlu0 %991
  %v993 = vsel %vm133, %v985, 0.0
  %994 = vadd.xlane.f32.xlu0 %v993
  %v995 = vpop.xlane.xlu0 %994
  %v996 = vsel %vm133, %v987, 0.0
  %997 = vadd.xlane.f32.xlu0 %v996
  %v998 = vpop.xlane.xlu0 %997
  %v999 = vsel %vm133, %v989, 0.0
  %1000 = vadd.xlane.f32.xlu0 %v999
  %v1001 = vpop.xlane.xlu0 %1000
  %v1002 = vrcp.pop %v992
  %v1003 = vrcp.pop %v995
  %v1004 = vrcp.pop %v998
  %v1005 = vrcp.pop %v1001
  %v1006 = vmul.f32 %v983, %v1002
  %v1007 = vmul.f32 %v985, %v1003
  %v1008 = vmul.f32 %v987, %v1004
  %v1009 = vmul.f32 %v989, %v1005
  %v1010 = vpack.c.bf16 %v1007, %v1006
  %v1011 = vpack.c.bf16 %v1009, %v1008
  %1012 = vrot.lane.b32.xlu0 %v508, 32
  %v1013 = vpop.permute.xlu0 %1012
  %1014 = vrot.lane.b32.xlu0 %v509, 32
  %v1015 = vpop.permute.xlu0 %1014
  %v1019 = vsel %vm133, %v1010, 0
  %v1022 = vsel %vm133, %v1011, 0
  %1024 = vmatprep.subr.bf16.mxu0 0
  %1025 = vmatpush1.bf16.msra.mxu0 %v1013
  %1026 = vmatprep.subr.bf16.mxu0 0
  %1027 = vmatpush1.bf16.msra.mxu0 %v1015
  %1028 = vmatprep.subr.bf16.mxu0 0
  %1029 = vmatpush1.bf16.msra.mxu0 0
  %1030 = vmatprep.subr.bf16.mxu0 0
  %1031 = vmatpush1.bf16.msra.mxu0 0
  %1032 = vmatprep.subr.bf16.mxu0 0
  %1033 = vmatpush1.bf16.msra.mxu0 0
  %1034 = vmatprep.subr.bf16.mxu0 0
  %1035 = vmatpush1.bf16.msra.mxu0 0
  %1036 = vmatprep.subr.bf16.mxu0 0
  %1037 = vmatpush1.bf16.msra.mxu0 0
  %1038 = vmatprep.subr.bf16.mxu0 0
  %1039 = vmatpush1.bf16.msra.mxu0 0
  %1040 = vmatprep.subr.bf16.mxu0 0
  %1041 = vmatpush1.bf16.msra.mxu0 0
  %1042 = vmatprep.subr.bf16.mxu0 0
  %1043 = vmatpush1.bf16.msra.mxu0 0
  %1044 = vmatprep.subr.bf16.mxu0 0
  %1045 = vmatpush1.bf16.msra.mxu0 0
  %1046 = vmatprep.subr.bf16.mxu0 0
  %1047 = vmatpush1.bf16.msra.mxu0 0
  %1048 = vmatprep.subr.bf16.mxu0 0
  %1049 = vmatpush1.bf16.msra.mxu0 0
  %1050 = vmatprep.subr.bf16.mxu0 0
  %1051 = vmatpush1.bf16.msra.mxu0 0
  %1052 = vmatprep.subr.bf16.mxu0 0
  %1053 = vmatpush1.bf16.msra.mxu0 0
  %1054 = vmatprep.subr.bf16.mxu0 0
  %1055 = vmatpush1.bf16.msra.mxu0 0
  %1056 = vmatprep.mubr.bf16.mxu0 0
  %1057 = vmatmul.mubr.bf16.gmra.mrb[0].mxu0 %v1019
  %v1058 = vpop.f32.mrb[0].mxu0
  %v1059 = vadd.f32 0.0, %v1058
  %v1060 = vpop.f32.mrb[0].mxu0
  %v1061 = vpop.f32.mrb[0].mxu0
  %v1062 = vadd.f32 0.0, %v1061
  %v1063 = vpop.f32.mrb[0].mxu0
  %1064 = vmatprep.mubr.bf16.mxu0 0
  %1065 = vmatmul.mubr.bf16.gmra.mrb[0].mxu0 %v1022
  %v1066 = vpop.f32.mrb[0].mxu0
  %v1067 = vadd.f32 0.0, %v1066
  %v1068 = vpop.f32.mrb[0].mxu0
  %v1069 = vpop.f32.mrb[0].mxu0
  %v1070 = vadd.f32 0.0, %v1069
  %v1071 = vpop.f32.mrb[0].mxu0
  %1072 = vdwg.mxu0
  %v1073 = vadd.f32 %v903, %v1059
  %v1074 = vadd.f32 %v904, %v1062
  %v1075 = vadd.f32 %v905, %v1067
  %v1076 = vadd.f32 %v906, %v1070
  %v1077 = vadd.f32 %v18, %v1073
  %v1078 = vadd.f32 %v19, %v1074
  %v1079 = vadd.f32 %v20, %v1075
  %v1080 = vadd.f32 %v21, %v1076
  %v1081 = vsel %vm133, %v1077, 0.0
  %1082 = vadd.xlane.f32.xlu0 %v1081
  %v1083 = vpop.xlane.xlu0 %1082
  %v1084 = vsel %vm133, %v1078, 0.0
  %1085 = vadd.xlane.f32.xlu0 %v1084
  %v1086 = vpop.xlane.xlu0 %1085
  %v1087 = vsel %vm133, %v1079, 0.0
  %1088 = vadd.xlane.f32.xlu0 %v1087
  %v1089 = vpop.xlane.xlu0 %1088
  %v1090 = vsel %vm133, %v1080, 0.0
  %1091 = vadd.xlane.f32.xlu0 %v1090
  %v1092 = vpop.xlane.xlu0 %1091
  %v1093 = vrcp.pop 32.0
  %v1094 = vmul.f32 %v1083, %v1093
  %v1095 = vmul.f32 %v1086, %v1093
  %v1096 = vmul.f32 %v1089, %v1093
  %v1097 = vmul.f32 %v1092, %v1093
  %v1098 = vsub.f32 %v1077, %v1094
  %v1099 = vsub.f32 %v1078, %v1095
  %v1100 = vsub.f32 %v1079, %v1096
  %v1101 = vsub.f32 %v1080, %v1097
  %v1102 = vmul.f32 %v1098, %v1098
  %v1103 = vmul.f32 %v1099, %v1099
  %v1104 = vmul.f32 %v1100, %v1100
  %v1105 = vmul.f32 %v1101, %v1101
  %v1106 = vsel %vm133, %v1102, 0.0
  %1107 = vadd.xlane.f32.xlu0 %v1106
  %v1108 = vpop.xlane.xlu0 %1107
  %v1109 = vsel %vm133, %v1103, 0.0
  %1110 = vadd.xlane.f32.xlu0 %v1109
  %v1111 = vpop.xlane.xlu0 %1110
  %v1112 = vsel %vm133, %v1104, 0.0
  %1113 = vadd.xlane.f32.xlu0 %v1112
  %v1114 = vpop.xlane.xlu0 %1113
  %v1115 = vsel %vm133, %v1105, 0.0
  %1116 = vadd.xlane.f32.xlu0 %v1115
  %v1117 = vpop.xlane.xlu0 %1116
  %v1118 = vmul.f32 %v1108, %v1093
  %v1119 = vmul.f32 %v1111, %v1093
  %v1120 = vmul.f32 %v1114, %v1093
  %v1121 = vmul.f32 %v1117, %v1093
  %v1122 = vadd.f32 %v1118, 1e-05
  %v1123 = vadd.f32 %v1119, 1e-05
  %v1124 = vadd.f32 %v1120, 1e-05
  %v1125 = vadd.f32 %v1121, 1e-05
  %v1126 = vrsqrt.pop %v1122
  %v1127 = vrsqrt.pop %v1123
  %v1128 = vrsqrt.pop %v1124
  %v1129 = vrsqrt.pop %v1125
  %v1130 = vmul.f32 %v1098, %v1126
  %v1131 = vmul.f32 %v1099, %v1127
  %v1132 = vmul.f32 %v1100, %v1128
  %v1133 = vmul.f32 %v1101, %v1129
  %v1134 = vlaneseq
  %v1135 = vshrl.u32 %v1134, 7
  %v1136 = vsub.s32 0, %v1135
  %v1137 = vrot.slane %v83, %v1136
  %v1138 = vmul.f32 %v1130, %v1137
  %v1139 = vmul.f32 %v1131, %v1137
  %v1140 = vmul.f32 %v1132, %v1137
  %v1141 = vmul.f32 %v1133, %v1137
  %v1142 = vlaneseq
  %v1143 = vshrl.u32 %v1142, 7
  %v1144 = vsub.s32 0, %v1143
  %v1145 = vrot.slane %v84, %v1144
  %v1146 = vadd.f32 %v1138, %v1145
  %v1147 = vadd.f32 %v1139, %v1145
  %v1148 = vadd.f32 %v1140, %v1145
  %v1149 = vadd.f32 %v1141, %v1145
  %v1150 = vpack.c.bf16 %v1147, %v1146
  %v1151 = vpack.c.bf16 %v1149, %v1148
  %v1152 = vlaneseq
  %v1153 = vshrl.u32 %v1152, 7
  %v1154 = vsub.s32 0, %v1153
  %v1155 = vrot.slane %v81, %v1154
  %v1164 = vunpack.c.l.b16 %v62
  %v1165 = vunpack.c.l.b16 %v63
  %v1166 = vunpack.c.l.b16 %v64
  %v1167 = vunpack.c.l.b16 %v65
  %v1168 = vunpack.c.l.b16 %v66
  %v1169 = vunpack.c.l.b16 %v67
  %v1170 = vunpack.c.l.b16 %v68
  %v1171 = vunpack.c.l.b16 %v69
  %v1172 = vpack.c.b16 %v1165, %v1164
  %v1173 = vpack.c.b16 %v1167, %v1166
  %v1174 = vpack.c.b16 %v1169, %v1168
  %v1175 = vpack.c.b16 %v1171, %v1170
  %v1177 = vsel %vm133, %v1150, 0
  %v1180 = vsel %vm133, %v1151, 0
  %v1183 = vsel %vm133, %v1172, 0
  %v1186 = vsel %vm133, %v1173, 0
  %v1189 = vsel %vm133, %v1174, 0
  %v1192 = vsel %vm133, %v1175, 0
  %1194 = vmatprep.subr.bf16.mxu0 0
  %1195 = vmatpush1.bf16.xpose.msra.mxu0 %v1183
  %1196 = vmatprep.subr.bf16.mxu0 0
  %1197 = vmatpush1.bf16.xpose.msra.mxu0 %v1186
  %1198 = vmatprep.subr.bf16.mxu0 0
  %1199 = vmatpush1.bf16.xpose.msra.mxu0 %v1189
  %1200 = vmatprep.subr.bf16.mxu0 0
  %1201 = vmatpush1.bf16.xpose.msra.mxu0 %v1192
  %1202 = vmatprep.subr.bf16.mxu0 0
  %1203 = vmatpush1.bf16.xpose.msra.mxu0 0
  %1204 = vmatprep.subr.bf16.mxu0 0
  %1205 = vmatpush1.bf16.xpose.msra.mxu0 0
  %1206 = vmatprep.subr.bf16.mxu0 0
  %1207 = vmatpush1.bf16.xpose.msra.mxu0 0
  %1208 = vmatprep.subr.bf16.mxu0 0
  %1209 = vmatpush1.bf16.xpose.msra.mxu0 0
  %1210 = vmatprep.subr.bf16.mxu0 0
  %1211 = vmatpush1.bf16.xpose.msra.mxu0 0
  %1212 = vmatprep.subr.bf16.mxu0 0
  %1213 = vmatpush1.bf16.xpose.msra.mxu0 0
  %1214 = vmatprep.subr.bf16.mxu0 0
  %1215 = vmatpush1.bf16.xpose.msra.mxu0 0
  %1216 = vmatprep.subr.bf16.mxu0 0
  %1217 = vmatpush1.bf16.xpose.msra.mxu0 0
  %1218 = vmatprep.subr.bf16.mxu0 0
  %1219 = vmatpush1.bf16.xpose.msra.mxu0 0
  %1220 = vmatprep.subr.bf16.mxu0 0
  %1221 = vmatpush1.bf16.xpose.msra.mxu0 0
  %1222 = vmatprep.subr.bf16.mxu0 0
  %1223 = vmatpush1.bf16.xpose.msra.mxu0 0
  %1224 = vmatprep.subr.bf16.mxu0 0
  %1225 = vmatpush1.bf16.xpose.msra.mxu0 0
  %1226 = vmatprep.mubr.bf16.mxu0 0
  %1227 = vmatmul.mubr.bf16.gmra.mrb[0].mxu0 %v1177
  %v1228 = vpop.f32.mrb[0].mxu0
  %v1229 = vadd.f32 %v1155, %v1228
  %v1230 = vpop.f32.mrb[0].mxu0
  %v1231 = vpop.f32.mrb[0].mxu0
  %v1232 = vadd.f32 %v1155, %v1231
  %v1233 = vpop.f32.mrb[0].mxu0
  %1234 = vmatprep.mubr.bf16.mxu0 0
  %1235 = vmatmul.mubr.bf16.gmra.mrb[0].mxu0 %v1180
  %v1236 = vpop.f32.mrb[0].mxu0
  %v1237 = vadd.f32 %v1155, %v1236
  %v1238 = vpop.f32.mrb[0].mxu0
  %v1239 = vpop.f32.mrb[0].mxu0
  %v1240 = vadd.f32 %v1155, %v1239
  %v1241 = vpop.f32.mrb[0].mxu0
  %1242 = vdwg.mxu0
  %v1243 = vmax.f32 %v1229, 0.0
  %v1244 = vmax.f32 %v1232, 0.0
  %v1245 = vmax.f32 %v1237, 0.0
  %v1246 = vmax.f32 %v1240, 0.0
  %v1247 = vpack.c.bf16 %v1244, %v1243
  %v1248 = vpack.c.bf16 %v1246, %v1245
  %v1249 = vlaneseq
  %v1250 = vshrl.u32 %v1249, 7
  %v1251 = vsub.s32 0, %v1250
  %v1252 = vrot.slane %v82, %v1251
  %v1261 = vunpack.c.l.b16 %v70
  %v1262 = vunpack.c.l.b16 %v71
  %v1263 = vunpack.c.l.b16 %v72
  %v1264 = vunpack.c.l.b16 %v73
  %v1265 = vunpack.c.l.b16 %v74
  %v1266 = vunpack.c.l.b16 %v75
  %v1267 = vunpack.c.l.b16 %v76
  %v1268 = vunpack.c.l.b16 %v77
  %v1269 = vpack.c.b16 %v1262, %v1261
  %v1270 = vpack.c.b16 %v1264, %v1263
  %v1271 = vpack.c.b16 %v1266, %v1265
  %v1272 = vpack.c.b16 %v1268, %v1267
  %vm1277 = vcmask 523264
  %v1279 = vsel %vm1277, %v1247, 0
  %v1282 = vsel %vm1277, %v1248, 0
  %1284 = vmatprep.subr.bf16.mxu0 0
  %1285 = vmatpush1.bf16.msra.mxu0 %v1269
  %1286 = vmatprep.subr.bf16.mxu0 0
  %1287 = vmatpush1.bf16.msra.mxu0 %v1270
  %1288 = vmatprep.subr.bf16.mxu0 0
  %1289 = vmatpush1.bf16.msra.mxu0 %v1271
  %1290 = vmatprep.subr.bf16.mxu0 0
  %1291 = vmatpush1.bf16.msra.mxu0 %v1272
  %1292 = vmatprep.subr.bf16.mxu0 0
  %1293 = vmatpush1.bf16.msra.mxu0 0
  %1294 = vmatprep.subr.bf16.mxu0 0
  %1295 = vmatpush1.bf16.msra.mxu0 0
  %1296 = vmatprep.subr.bf16.mxu0 0
  %1297 = vmatpush1.bf16.msra.mxu0 0
  %1298 = vmatprep.subr.bf16.mxu0 0
  %1299 = vmatpush1.bf16.msra.mxu0 0
  %1300 = vmatprep.subr.bf16.mxu0 0
  %1301 = vmatpush1.bf16.msra.mxu0 0
  %1302 = vmatprep.subr.bf16.mxu0 0
  %1303 = vmatpush1.bf16.msra.mxu0 0
  %1304 = vmatprep.subr.bf16.mxu0 0
  %1305 = vmatpush1.bf16.msra.mxu0 0
  %1306 = vmatprep.subr.bf16.mxu0 0
  %1307 = vmatpush1.bf16.msra.mxu0 0
  %1308 = vmatprep.subr.bf16.mxu0 0
  %1309 = vmatpush1.bf16.msra.mxu0 0
  %1310 = vmatprep.subr.bf16.mxu0 0
  %1311 = vmatpush1.bf16.msra.mxu0 0
  %1312 = vmatprep.subr.bf16.mxu0 0
  %1313 = vmatpush1.bf16.msra.mxu0 0
  %1314 = vmatprep.subr.bf16.mxu0 0
  %1315 = vmatpush1.bf16.msra.mxu0 0
  %1316 = vmatprep.mubr.bf16.mxu0 0
  %1317 = vmatmul.mubr.bf16.gmra.mrb[0].mxu0 %v1279
  %v1318 = vpop.f32.mrb[0].mxu0
  %v1319 = vadd.f32 %v1252, %v1318
  %v1320 = vpop.f32.mrb[0].mxu0
  %v1321 = vpop.f32.mrb[0].mxu0
  %v1322 = vadd.f32 %v1252, %v1321
  %v1323 = vpop.f32.mrb[0].mxu0
  %1324 = vmatprep.mubr.bf16.mxu0 0
  %1325 = vmatmul.mubr.bf16.gmra.mrb[0].mxu0 %v1282
  %v1326 = vpop.f32.mrb[0].mxu0
  %v1327 = vadd.f32 %v1252, %v1326
  %v1328 = vpop.f32.mrb[0].mxu0
  %v1329 = vpop.f32.mrb[0].mxu0
  %v1330 = vadd.f32 %v1252, %v1329
  %v1331 = vpop.f32.mrb[0].mxu0
  %1332 = vdwg.mxu0
  %v1333 = vadd.f32 %v1146, %v1319
  %v1334 = vadd.f32 %v1147, %v1322
  %v1335 = vadd.f32 %v1148, %v1327
  %v1336 = vadd.f32 %v1149, %v1330
  %v1337 = vsel %vm133, %v1333, 0.0
  %1338 = vadd.xlane.f32.xlu0 %v1337
  %v1339 = vpop.xlane.xlu0 %1338
  %v1340 = vsel %vm133, %v1334, 0.0
  %1341 = vadd.xlane.f32.xlu0 %v1340
  %v1342 = vpop.xlane.xlu0 %1341
  %v1343 = vsel %vm133, %v1335, 0.0
  %1344 = vadd.xlane.f32.xlu0 %v1343
  %v1345 = vpop.xlane.xlu0 %1344
  %v1346 = vsel %vm133, %v1336, 0.0
  %1347 = vadd.xlane.f32.xlu0 %v1346
  %v1348 = vpop.xlane.xlu0 %1347
  %v1349 = vmul.f32 %v1339, %v1093
  %v1350 = vmul.f32 %v1342, %v1093
  %v1351 = vmul.f32 %v1345, %v1093
  %v1352 = vmul.f32 %v1348, %v1093
  %v1353 = vsub.f32 %v1333, %v1349
  %v1354 = vsub.f32 %v1334, %v1350
  %v1355 = vsub.f32 %v1335, %v1351
  %v1356 = vsub.f32 %v1336, %v1352
  %v1357 = vmul.f32 %v1353, %v1353
  %v1358 = vmul.f32 %v1354, %v1354
  %v1359 = vmul.f32 %v1355, %v1355
  %v1360 = vmul.f32 %v1356, %v1356
  %v1361 = vsel %vm133, %v1357, 0.0
  %1362 = vadd.xlane.f32.xlu0 %v1361
  %v1363 = vpop.xlane.xlu0 %1362
  %v1364 = vsel %vm133, %v1358, 0.0
  %1365 = vadd.xlane.f32.xlu0 %v1364
  %v1366 = vpop.xlane.xlu0 %1365
  %v1367 = vsel %vm133, %v1359, 0.0
  %1368 = vadd.xlane.f32.xlu0 %v1367
  %v1369 = vpop.xlane.xlu0 %1368
  %v1370 = vsel %vm133, %v1360, 0.0
  %1371 = vadd.xlane.f32.xlu0 %v1370
  %v1372 = vpop.xlane.xlu0 %1371
  %v1373 = vmul.f32 %v1363, %v1093
  %v1374 = vmul.f32 %v1366, %v1093
  %v1375 = vmul.f32 %v1369, %v1093
  %v1376 = vmul.f32 %v1372, %v1093
  %v1377 = vadd.f32 %v1373, 1e-05
  %v1378 = vadd.f32 %v1374, 1e-05
  %v1379 = vadd.f32 %v1375, 1e-05
  %v1380 = vadd.f32 %v1376, 1e-05
  %v1381 = vrsqrt.pop %v1377
  %v1382 = vrsqrt.pop %v1378
  %v1383 = vrsqrt.pop %v1379
  %v1384 = vrsqrt.pop %v1380
  %v1385 = vmul.f32 %v1353, %v1381
  %v1386 = vmul.f32 %v1354, %v1382
  %v1387 = vmul.f32 %v1355, %v1383
  %v1388 = vmul.f32 %v1356, %v1384
  %v1389 = vlaneseq
  %v1390 = vshrl.u32 %v1389, 7
  %v1391 = vsub.s32 0, %v1390
  %v1392 = vrot.slane %v85, %v1391
  %v1393 = vmul.f32 %v1385, %v1392
  %v1394 = vmul.f32 %v1386, %v1392
  %v1395 = vmul.f32 %v1387, %v1392
  %v1396 = vmul.f32 %v1388, %v1392
  %v1397 = vlaneseq
  %v1398 = vshrl.u32 %v1397, 7
  %v1399 = vsub.s32 0, %v1398
  %v1400 = vrot.slane %v86, %v1399
  %v1401 = vadd.f32 %v1393, %v1400
  %v1402 = vadd.f32 %v1394, %v1400
  %v1403 = vadd.f32 %v1395, %v1400
  %v1404 = vadd.f32 %v1396, %v1400
  %v1405 = vld [vmem:[%s2 + $0xd0] sm:$0xf]
  %v1406 = vld [vmem:[%s2 + $0xd4] sm:$0xf]
  %v1407 = vld [vmem:[%s2 + $0xd8] sm:$0xf]
  %v1408 = vld [vmem:[%s2 + $0xdc] sm:$0xf]
  %v1409 = vld [vmem:[%s2 + $0xe0] sm:$0xf]
  %v1410 = vld [vmem:[%s2 + $0xe4] sm:$0xf]
  %v1411 = vld [vmem:[%s2 + $0xe8] sm:$0xf]
  %v1412 = vld [vmem:[%s2 + $0xec] sm:$0xf]
  %v1413 = vld [vmem:[%s2 + $0xf0] sm:$0xf]
  %v1414 = vld [vmem:[%s2 + $0xf4] sm:$0xf]
  %v1415 = vld [vmem:[%s2 + $0xf8] sm:$0xf]
  %v1416 = vld [vmem:[%s2 + $0xfc] sm:$0xf]
  %v1417 = vld [vmem:[%s2 + $0x100] sm:$0xf]
  %v1418 = vld [vmem:[%s2 + $0x104] sm:$0xf]
  %v1419 = vld [vmem:[%s2 + $0x108] sm:$0xf]
  %v1420 = vld [vmem:[%s2 + $0x10c] sm:$0xf]
  %v1421 = vld [vmem:[%s2 + $0x110] sm:$0xf]
  %v1422 = vld [vmem:[%s2 + $0x114] sm:$0xf]
  %v1423 = vld [vmem:[%s2 + $0x118] sm:$0xf]
  %v1424 = vld [vmem:[%s2 + $0x11c] sm:$0xf]
  %v1425 = vld [vmem:[%s2 + $0x120] sm:$0xf]
  %v1426 = vld [vmem:[%s2 + $0x124] sm:$0xf]
  %v1427 = vld [vmem:[%s2 + $0x128] sm:$0xf]
  %v1428 = vld [vmem:[%s2 + $0x12c] sm:$0xf]
  %v1429 = vld [vmem:[%s2 + $0x130] sm:$0xf]
  %v1430 = vld [vmem:[%s2 + $0x134] sm:$0xf]
  %v1431 = vld [vmem:[%s2 + $0x138] sm:$0xf]
  %v1432 = vld [vmem:[%s2 + $0x13c] sm:$0xf]
  %v1433 = vld [vmem:[%s2 + $0x140] sm:$0xf]
  %v1434 = vld [vmem:[%s2 + $0x144] sm:$0xf]
  %v1435 = vld [vmem:[%s2 + $0x148] sm:$0xf]
  %v1436 = vld [vmem:[%s2 + $0x14c] sm:$0xf]
  %v1437 = vld [vmem:[%s2 + $0x150] sm:$0xf]
  %v1438 = vld [vmem:[%s2 + $0x154] sm:$0xf]
  %v1439 = vld [vmem:[%s2 + $0x158] sm:$0xf]
  %v1440 = vld [vmem:[%s2 + $0x15c] sm:$0xf]
  %v1441 = vld [vmem:[%s2 + $0x160] sm:$0xf]
  %v1442 = vld [vmem:[%s2 + $0x164] sm:$0xf]
  %v1443 = vld [vmem:[%s2 + $0x168] sm:$0xf]
  %v1444 = vld [vmem:[%s2 + $0x16c] sm:$0xf]
  %v1445 = vld [vmem:[%s2 + $0x170] sm:$0xf]
  %v1446 = vld [vmem:[%s2 + $0x174] sm:$0xf]
  %v1447 = vld [vmem:[%s2 + $0x178] sm:$0xf]
  %v1448 = vld [vmem:[%s2 + $0x17c] sm:$0xf]
  %v1449 = vld [vmem:[%s2 + $0x180] sm:$0xf]
  %v1450 = vld [vmem:[%s2 + $0x184] sm:$0xf]
  %v1451 = vld [vmem:[%s2 + $0x188] sm:$0xf]
  %v1452 = vld [vmem:[%s2 + $0x18c] sm:$0xf]
  %v1453 = vld [vmem:[%s2 + $0x190] sm:$0xf]
  %v1454 = vld [vmem:[%s2 + $0x194] sm:$0xf]
  %v1455 = vld [vmem:[%s2 + $0x198] sm:$0xf]
  %v1456 = vld [vmem:[%s2 + $0x19c] sm:$0xf]
  %v1457 = vld [vmem:[%s3 + $0x9] sm:$0x1]
  %v1458 = vld [vmem:[%s3 + $0xa] sm:$0x1]
  %v1459 = vld [vmem:[%s3 + $0xb] sm:$0x1]
  %v1460 = vld [vmem:[%s3 + $0xc] sm:$0x1]
  %v1461 = vld [vmem:[%s3 + $0xd] sm:$0x1]
  %v1462 = vld [vmem:[%s3 + $0xe] sm:$0x1]
  %v1463 = vld [vmem:[%s3 + $0xf] sm:$0x1]
  %v1464 = vld [vmem:[%s3 + $0x10] sm:$0x1]
  %v1465 = vld [vmem:[%s3 + $0x11] sm:$0x1]
  %v1466 = vpack.c.bf16 %v1402, %v1401
  %v1467 = vpack.c.bf16 %v1404, %v1403
  %v1468 = vlaneseq
  %v1469 = vshrl.u32 %v1468, 7
  %v1470 = vsub.s32 0, %v1469
  %v1471 = vrot.slane %v1457, %v1470
  %v1488 = vunpack.c.l.b16 %v1405
  %v1489 = vunpack.c.l.b16 %v1406
  %v1490 = vunpack.c.l.b16 %v1407
  %v1491 = vunpack.c.l.b16 %v1408
  %v1492 = vunpack.c.l.b16 %v1409
  %v1493 = vunpack.c.l.b16 %v1410
  %v1494 = vunpack.c.l.b16 %v1411
  %v1495 = vunpack.c.l.b16 %v1412
  %v1496 = vunpack.c.l.b16 %v1413
  %v1497 = vunpack.c.l.b16 %v1414
  %v1498 = vunpack.c.l.b16 %v1415
  %v1499 = vunpack.c.l.b16 %v1416
  %v1500 = vunpack.c.l.b16 %v1417
  %v1501 = vunpack.c.l.b16 %v1418
  %v1502 = vunpack.c.l.b16 %v1419
  %v1503 = vunpack.c.l.b16 %v1420
  %v1504 = vpack.c.b16 %v1489, %v1488
  %v1505 = vpack.c.b16 %v1491, %v1490
  %v1506 = vpack.c.b16 %v1493, %v1492
  %v1507 = vpack.c.b16 %v1495, %v1494
  %v1508 = vpack.c.b16 %v1497, %v1496
  %v1509 = vpack.c.b16 %v1499, %v1498
  %v1510 = vpack.c.b16 %v1501, %v1500
  %v1511 = vpack.c.b16 %v1503, %v1502
  %v1513 = vsel %vm133, %v1466, 0
  %v1516 = vsel %vm133, %v1467, 0
  %v1519 = vsel %vm133, %v1504, 0
  %v1522 = vsel %vm133, %v1505, 0
  %v1525 = vsel %vm133, %v1506, 0
  %v1528 = vsel %vm133, %v1507, 0
  %v1531 = vsel %vm133, %v1508, 0
  %v1534 = vsel %vm133, %v1509, 0
  %v1537 = vsel %vm133, %v1510, 0
  %v1540 = vsel %vm133, %v1511, 0
  %1542 = vmatprep.subr.bf16.mxu0 0
  %1543 = vmatpush1.bf16.xpose.msra.mxu0 %v1519
  %1544 = vmatprep.subr.bf16.mxu0 0
  %1545 = vmatpush1.bf16.xpose.msra.mxu0 %v1522
  %1546 = vmatprep.subr.bf16.mxu0 0
  %1547 = vmatpush1.bf16.xpose.msra.mxu0 %v1525
  %1548 = vmatprep.subr.bf16.mxu0 0
  %1549 = vmatpush1.bf16.xpose.msra.mxu0 %v1528
  %1550 = vmatprep.subr.bf16.mxu0 0
  %1551 = vmatpush1.bf16.xpose.msra.mxu0 %v1531
  %1552 = vmatprep.subr.bf16.mxu0 0
  %1553 = vmatpush1.bf16.xpose.msra.mxu0 %v1534
  %1554 = vmatprep.subr.bf16.mxu0 0
  %1555 = vmatpush1.bf16.xpose.msra.mxu0 %v1537
  %1556 = vmatprep.subr.bf16.mxu0 0
  %1557 = vmatpush1.bf16.xpose.msra.mxu0 %v1540
  %1558 = vmatprep.subr.bf16.mxu0 0
  %1559 = vmatpush1.bf16.xpose.msra.mxu0 0
  %1560 = vmatprep.subr.bf16.mxu0 0
  %1561 = vmatpush1.bf16.xpose.msra.mxu0 0
  %1562 = vmatprep.subr.bf16.mxu0 0
  %1563 = vmatpush1.bf16.xpose.msra.mxu0 0
  %1564 = vmatprep.subr.bf16.mxu0 0
  %1565 = vmatpush1.bf16.xpose.msra.mxu0 0
  %1566 = vmatprep.subr.bf16.mxu0 0
  %1567 = vmatpush1.bf16.xpose.msra.mxu0 0
  %1568 = vmatprep.subr.bf16.mxu0 0
  %1569 = vmatpush1.bf16.xpose.msra.mxu0 0
  %1570 = vmatprep.subr.bf16.mxu0 0
  %1571 = vmatpush1.bf16.xpose.msra.mxu0 0
  %1572 = vmatprep.subr.bf16.mxu0 0
  %1573 = vmatpush1.bf16.xpose.msra.mxu0 0
  %1574 = vmatprep.mubr.bf16.mxu0 0
  %1575 = vmatmul.mubr.bf16.gmra.mrb[0].mxu0 %v1513
  %v1576 = vpop.f32.mrb[0].mxu0
  %v1577 = vadd.f32 %v1471, %v1576
  %v1578 = vpop.f32.mrb[0].mxu0
  %v1579 = vpop.f32.mrb[0].mxu0
  %v1580 = vadd.f32 %v1471, %v1579
  %v1581 = vpop.f32.mrb[0].mxu0
  %1582 = vmatprep.mubr.bf16.mxu0 0
  %1583 = vmatmul.mubr.bf16.gmra.mrb[0].mxu0 %v1516
  %v1584 = vpop.f32.mrb[0].mxu0
  %v1585 = vadd.f32 %v1471, %v1584
  %v1586 = vpop.f32.mrb[0].mxu0
  %v1587 = vpop.f32.mrb[0].mxu0
  %v1588 = vadd.f32 %v1471, %v1587
  %v1589 = vpop.f32.mrb[0].mxu0
  %1590 = vdwg.mxu0
  %v1591 = vlaneseq
  %v1592 = vshrl.u32 %v1591, 7
  %v1593 = vsub.s32 0, %v1592
  %v1594 = vrot.slane %v1458, %v1593
  %v1599 = vunpack.c.l.b16 %v1421
  %v1600 = vunpack.c.l.b16 %v1422
  %v1601 = vunpack.c.l.b16 %v1423
  %v1602 = vunpack.c.l.b16 %v1424
  %v1603 = vpack.c.b16 %v1600, %v1599
  %v1604 = vpack.c.b16 %v1602, %v1601
  %v1606 = vsel %vm133, %v1603, 0
  %v1609 = vsel %vm133, %v1604, 0
  %1611 = vmatprep.subr.bf16.mxu0 0
  %1612 = vmatpush1.bf16.xpose.msra.mxu0 %v1606
  %1613 = vmatprep.subr.bf16.mxu0 0
  %1614 = vmatpush1.bf16.xpose.msra.mxu0 %v1609
  %1615 = vmatprep.subr.bf16.mxu0 0
  %1616 = vmatpush1.bf16.xpose.msra.mxu0 0
  %1617 = vmatprep.subr.bf16.mxu0 0
  %1618 = vmatpush1.bf16.xpose.msra.mxu0 0
  %1619 = vmatprep.subr.bf16.mxu0 0
  %1620 = vmatpush1.bf16.xpose.msra.mxu0 0
  %1621 = vmatprep.subr.bf16.mxu0 0
  %1622 = vmatpush1.bf16.xpose.msra.mxu0 0
  %1623 = vmatprep.subr.bf16.mxu0 0
  %1624 = vmatpush1.bf16.xpose.msra.mxu0 0
  %1625 = vmatprep.subr.bf16.mxu0 0
  %1626 = vmatpush1.bf16.xpose.msra.mxu0 0
  %1627 = vmatprep.subr.bf16.mxu0 0
  %1628 = vmatpush1.bf16.xpose.msra.mxu0 0
  %1629 = vmatprep.subr.bf16.mxu0 0
  %1630 = vmatpush1.bf16.xpose.msra.mxu0 0
  %1631 = vmatprep.subr.bf16.mxu0 0
  %1632 = vmatpush1.bf16.xpose.msra.mxu0 0
  %1633 = vmatprep.subr.bf16.mxu0 0
  %1634 = vmatpush1.bf16.xpose.msra.mxu0 0
  %1635 = vmatprep.subr.bf16.mxu0 0
  %1636 = vmatpush1.bf16.xpose.msra.mxu0 0
  %1637 = vmatprep.subr.bf16.mxu0 0
  %1638 = vmatpush1.bf16.xpose.msra.mxu0 0
  %1639 = vmatprep.subr.bf16.mxu0 0
  %1640 = vmatpush1.bf16.xpose.msra.mxu0 0
  %1641 = vmatprep.subr.bf16.mxu0 0
  %1642 = vmatpush1.bf16.xpose.msra.mxu0 0
  %1643 = vmatprep.mubr.bf16.mxu0 0
  %1644 = vmatmul.mubr.bf16.gmra.mrb[0].mxu0 %v1513
  %v1645 = vpop.f32.mrb[0].mxu0
  %v1646 = vadd.f32 %v1594, %v1645
  %v1647 = vpop.f32.mrb[0].mxu0
  %v1648 = vpop.f32.mrb[0].mxu0
  %v1649 = vadd.f32 %v1594, %v1648
  %v1650 = vpop.f32.mrb[0].mxu0
  %1651 = vmatprep.mubr.bf16.mxu0 0
  %1652 = vmatmul.mubr.bf16.gmra.mrb[0].mxu0 %v1516
  %v1653 = vpop.f32.mrb[0].mxu0
  %v1654 = vadd.f32 %v1594, %v1653
  %v1655 = vpop.f32.mrb[0].mxu0
  %v1656 = vpop.f32.mrb[0].mxu0
  %v1657 = vadd.f32 %v1594, %v1656
  %v1658 = vpop.f32.mrb[0].mxu0
  %1659 = vdwg.mxu0
  %v1660 = vlaneseq
  %v1661 = vshrl.u32 %v1660, 7
  %v1662 = vsub.s32 0, %v1661
  %v1663 = vrot.slane %v1459, %v1662
  %v1680 = vunpack.c.l.b16 %v1425
  %v1681 = vunpack.c.l.b16 %v1426
  %v1682 = vunpack.c.l.b16 %v1427
  %v1683 = vunpack.c.l.b16 %v1428
  %v1684 = vunpack.c.l.b16 %v1429
  %v1685 = vunpack.c.l.b16 %v1430
  %v1686 = vunpack.c.l.b16 %v1431
  %v1687 = vunpack.c.l.b16 %v1432
  %v1688 = vunpack.c.l.b16 %v1433
  %v1689 = vunpack.c.l.b16 %v1434
  %v1690 = vunpack.c.l.b16 %v1435
  %v1691 = vunpack.c.l.b16 %v1436
  %v1692 = vunpack.c.l.b16 %v1437
  %v1693 = vunpack.c.l.b16 %v1438
  %v1694 = vunpack.c.l.b16 %v1439
  %v1695 = vunpack.c.l.b16 %v1440
  %v1696 = vpack.c.b16 %v1681, %v1680
  %v1697 = vpack.c.b16 %v1683, %v1682
  %v1698 = vpack.c.b16 %v1685, %v1684
  %v1699 = vpack.c.b16 %v1687, %v1686
  %v1700 = vpack.c.b16 %v1689, %v1688
  %v1701 = vpack.c.b16 %v1691, %v1690
  %v1702 = vpack.c.b16 %v1693, %v1692
  %v1703 = vpack.c.b16 %v1695, %v1694
  %v1705 = vsel %vm133, %v1696, 0
  %v1708 = vsel %vm133, %v1697, 0
  %v1711 = vsel %vm133, %v1698, 0
  %v1714 = vsel %vm133, %v1699, 0
  %v1717 = vsel %vm133, %v1700, 0
  %v1720 = vsel %vm133, %v1701, 0
  %v1723 = vsel %vm133, %v1702, 0
  %v1726 = vsel %vm133, %v1703, 0
  %1728 = vmatprep.subr.bf16.mxu0 0
  %1729 = vmatpush1.bf16.xpose.msra.mxu0 %v1705
  %1730 = vmatprep.subr.bf16.mxu0 0
  %1731 = vmatpush1.bf16.xpose.msra.mxu0 %v1708
  %1732 = vmatprep.subr.bf16.mxu0 0
  %1733 = vmatpush1.bf16.xpose.msra.mxu0 %v1711
  %1734 = vmatprep.subr.bf16.mxu0 0
  %1735 = vmatpush1.bf16.xpose.msra.mxu0 %v1714
  %1736 = vmatprep.subr.bf16.mxu0 0
  %1737 = vmatpush1.bf16.xpose.msra.mxu0 %v1717
  %1738 = vmatprep.subr.bf16.mxu0 0
  %1739 = vmatpush1.bf16.xpose.msra.mxu0 %v1720
  %1740 = vmatprep.subr.bf16.mxu0 0
  %1741 = vmatpush1.bf16.xpose.msra.mxu0 %v1723
  %1742 = vmatprep.subr.bf16.mxu0 0
  %1743 = vmatpush1.bf16.xpose.msra.mxu0 %v1726
  %1744 = vmatprep.subr.bf16.mxu0 0
  %1745 = vmatpush1.bf16.xpose.msra.mxu0 0
  %1746 = vmatprep.subr.bf16.mxu0 0
  %1747 = vmatpush1.bf16.xpose.msra.mxu0 0
  %1748 = vmatprep.subr.bf16.mxu0 0
  %1749 = vmatpush1.bf16.xpose.msra.mxu0 0
  %1750 = vmatprep.subr.bf16.mxu0 0
  %1751 = vmatpush1.bf16.xpose.msra.mxu0 0
  %1752 = vmatprep.subr.bf16.mxu0 0
  %1753 = vmatpush1.bf16.xpose.msra.mxu0 0
  %1754 = vmatprep.subr.bf16.mxu0 0
  %1755 = vmatpush1.bf16.xpose.msra.mxu0 0
  %1756 = vmatprep.subr.bf16.mxu0 0
  %1757 = vmatpush1.bf16.xpose.msra.mxu0 0
  %1758 = vmatprep.subr.bf16.mxu0 0
  %1759 = vmatpush1.bf16.xpose.msra.mxu0 0
  %1760 = vmatprep.mubr.bf16.mxu0 0
  %1761 = vmatmul.mubr.bf16.gmra.mrb[0].mxu0 %v1513
  %v1762 = vpop.f32.mrb[0].mxu0
  %v1763 = vadd.f32 %v1663, %v1762
  %v1764 = vpop.f32.mrb[0].mxu0
  %v1765 = vpop.f32.mrb[0].mxu0
  %v1766 = vadd.f32 %v1663, %v1765
  %v1767 = vpop.f32.mrb[0].mxu0
  %1768 = vmatprep.mubr.bf16.mxu0 0
  %1769 = vmatmul.mubr.bf16.gmra.mrb[0].mxu0 %v1516
  %v1770 = vpop.f32.mrb[0].mxu0
  %v1771 = vadd.f32 %v1663, %v1770
  %v1772 = vpop.f32.mrb[0].mxu0
  %v1773 = vpop.f32.mrb[0].mxu0
  %v1774 = vadd.f32 %v1663, %v1773
  %v1775 = vpop.f32.mrb[0].mxu0
  %1776 = vdwg.mxu0
  %v1777 = vpack.c.bf16 %v1649, %v1646
  %v1778 = vpack.c.bf16 %v1657, %v1654
  %v1779 = vpack.c.bf16 %v1580, %v1577
  %v1780 = vpack.c.bf16 %v1588, %v1585
  %v1782 = vsel %vm133, %v1779, 0
  %v1785 = vsel %vm133, %v1780, 0
  %v1788 = vsel %vm133, %v1777, 0
  %v1791 = vsel %vm133, %v1778, 0
  %1793 = vmatprep.subr.bf16.mxu0 0
  %1794 = vmatpush1.bf16.xpose.msra.mxu0 %v1788
  %1795 = vmatprep.subr.bf16.mxu0 0
  %1796 = vmatpush1.bf16.xpose.msra.mxu0 %v1791
  %1797 = vmatprep.subr.bf16.mxu0 0
  %1798 = vmatpush1.bf16.xpose.msra.mxu0 0
  %1799 = vmatprep.subr.bf16.mxu0 0
  %1800 = vmatpush1.bf16.xpose.msra.mxu0 0
  %1801 = vmatprep.subr.bf16.mxu0 0
  %1802 = vmatpush1.bf16.xpose.msra.mxu0 0
  %1803 = vmatprep.subr.bf16.mxu0 0
  %1804 = vmatpush1.bf16.xpose.msra.mxu0 0
  %1805 = vmatprep.subr.bf16.mxu0 0
  %1806 = vmatpush1.bf16.xpose.msra.mxu0 0
  %1807 = vmatprep.subr.bf16.mxu0 0
  %1808 = vmatpush1.bf16.xpose.msra.mxu0 0
  %1809 = vmatprep.subr.bf16.mxu0 0
  %1810 = vmatpush1.bf16.xpose.msra.mxu0 0
  %1811 = vmatprep.subr.bf16.mxu0 0
  %1812 = vmatpush1.bf16.xpose.msra.mxu0 0
  %1813 = vmatprep.subr.bf16.mxu0 0
  %1814 = vmatpush1.bf16.xpose.msra.mxu0 0
  %1815 = vmatprep.subr.bf16.mxu0 0
  %1816 = vmatpush1.bf16.xpose.msra.mxu0 0
  %1817 = vmatprep.subr.bf16.mxu0 0
  %1818 = vmatpush1.bf16.xpose.msra.mxu0 0
  %1819 = vmatprep.subr.bf16.mxu0 0
  %1820 = vmatpush1.bf16.xpose.msra.mxu0 0
  %1821 = vmatprep.subr.bf16.mxu0 0
  %1822 = vmatpush1.bf16.xpose.msra.mxu0 0
  %1823 = vmatprep.subr.bf16.mxu0 0
  %1824 = vmatpush1.bf16.xpose.msra.mxu0 0
  %1825 = vmatprep.mubr.bf16.mxu0 0
  %1826 = vmatmul.mubr.bf16.gmra.mrb[0].mxu0 %v1782
  %v1827 = vpop.f32.mrb[0].mxu0
  %v1828 = vadd.f32 %v22, %v1827
  %v1829 = vpop.f32.mrb[0].mxu0
  %v1830 = vpop.f32.mrb[0].mxu0
  %v1831 = vadd.f32 %v23, %v1830
  %v1832 = vpop.f32.mrb[0].mxu0
  %1833 = vmatprep.mubr.bf16.mxu0 0
  %1834 = vmatmul.mubr.bf16.gmra.mrb[0].mxu0 %v1785
  %v1835 = vpop.f32.mrb[0].mxu0
  %v1836 = vadd.f32 %v24, %v1835
  %v1837 = vpop.f32.mrb[0].mxu0
  %v1838 = vpop.f32.mrb[0].mxu0
  %v1839 = vadd.f32 %v25, %v1838
  %v1840 = vpop.f32.mrb[0].mxu0
  %1841 = vdwg.mxu0
  %v1842 = vsel %vm133, %v1828, -inf
  %1843 = vmax.xlane.f32.xlu0 %v1842
  %v1844 = vpop.xlane.xlu0 %1843
  %v1845 = vsel %vm133, %v1831, -inf
  %1846 = vmax.xlane.f32.xlu0 %v1845
  %v1847 = vpop.xlane.xlu0 %1846
  %v1848 = vsel %vm133, %v1836, -inf
  %1849 = vmax.xlane.f32.xlu0 %v1848
  %v1850 = vpop.xlane.xlu0 %1849
  %v1851 = vsel %vm133, %v1839, -inf
  %1852 = vmax.xlane.f32.xlu0 %v1851
  %v1853 = vpop.xlane.xlu0 %1852
  %v1854 = vsub.f32 %v1828, %v1844
  %v1855 = vsub.f32 %v1831, %v1847
  %v1856 = vsub.f32 %v1836, %v1850
  %v1857 = vsub.f32 %v1839, %v1853
  %v1858 = vmul.f32 %v1854, 1.442695
  %v1859 = vpow.pop %v1858
  %v1860 = vmul.f32 %v1855, 1.442695
  %v1861 = vpow.pop %v1860
  %v1862 = vmul.f32 %v1856, 1.442695
  %v1863 = vpow.pop %v1862
  %v1864 = vmul.f32 %v1857, 1.442695
  %v1865 = vpow.pop %v1864
  %v1866 = vsel %vm133, %v1859, 0.0
  %1867 = vadd.xlane.f32.xlu0 %v1866
  %v1868 = vpop.xlane.xlu0 %1867
  %v1869 = vsel %vm133, %v1861, 0.0
  %1870 = vadd.xlane.f32.xlu0 %v1869
  %v1871 = vpop.xlane.xlu0 %1870
  %v1872 = vsel %vm133, %v1863, 0.0
  %1873 = vadd.xlane.f32.xlu0 %v1872
  %v1874 = vpop.xlane.xlu0 %1873
  %v1875 = vsel %vm133, %v1865, 0.0
  %1876 = vadd.xlane.f32.xlu0 %v1875
  %v1877 = vpop.xlane.xlu0 %1876
  %v1878 = vrcp.pop %v1868
  %v1879 = vrcp.pop %v1871
  %v1880 = vrcp.pop %v1874
  %v1881 = vrcp.pop %v1877
  %v1882 = vmul.f32 %v1859, %v1878
  %v1883 = vmul.f32 %v1861, %v1879
  %v1884 = vmul.f32 %v1863, %v1880
  %v1885 = vmul.f32 %v1865, %v1881
  %v1886 = vpack.c.bf16 %v1766, %v1763
  %v1887 = vpack.c.bf16 %v1774, %v1771
  %v1888 = vpack.c.bf16 %v1883, %v1882
  %v1889 = vpack.c.bf16 %v1885, %v1884
  %1892 = vrot.lane.b32.xlu0 %v1779, 96
  %v1893 = vpop.permute.xlu0 %1892
  %1894 = vrot.lane.b32.xlu0 %v1780, 96
  %v1895 = vpop.permute.xlu0 %1894
  %v1897 = vsel %vm133, %v1893, 0
  %v1900 = vsel %vm133, %v1895, 0
  %1902 = vmatprep.subr.bf16.mxu0 0
  %1903 = vmatpush1.bf16.xpose.msra.mxu0 %v1788
  %1904 = vmatprep.subr.bf16.mxu0 0
  %1905 = vmatpush1.bf16.xpose.msra.mxu0 %v1791
  %1906 = vmatprep.subr.bf16.mxu0 0
  %1907 = vmatpush1.bf16.xpose.msra.mxu0 0
  %1908 = vmatprep.subr.bf16.mxu0 0
  %1909 = vmatpush1.bf16.xpose.msra.mxu0 0
  %1910 = vmatprep.subr.bf16.mxu0 0
  %1911 = vmatpush1.bf16.xpose.msra.mxu0 0
  %1912 = vmatprep.subr.bf16.mxu0 0
  %1913 = vmatpush1.bf16.xpose.msra.mxu0 0
  %1914 = vmatprep.subr.bf16.mxu0 0
  %1915 = vmatpush1.bf16.xpose.msra.mxu0 0
  %1916 = vmatprep.subr.bf16.mxu0 0
  %1917 = vmatpush1.bf16.xpose.msra.mxu0 0
  %1918 = vmatprep.subr.bf16.mxu0 0
  %1919 = vmatpush1.bf16.xpose.msra.mxu0 0
  %1920 = vmatprep.subr.bf16.mxu0 0
  %1921 = vmatpush1.bf16.xpose.msra.mxu0 0
  %1922 = vmatprep.subr.bf16.mxu0 0
  %1923 = vmatpush1.bf16.xpose.msra.mxu0 0
  %1924 = vmatprep.subr.bf16.mxu0 0
  %1925 = vmatpush1.bf16.xpose.msra.mxu0 0
  %1926 = vmatprep.subr.bf16.mxu0 0
  %1927 = vmatpush1.bf16.xpose.msra.mxu0 0
  %1928 = vmatprep.subr.bf16.mxu0 0
  %1929 = vmatpush1.bf16.xpose.msra.mxu0 0
  %1930 = vmatprep.subr.bf16.mxu0 0
  %1931 = vmatpush1.bf16.xpose.msra.mxu0 0
  %1932 = vmatprep.subr.bf16.mxu0 0
  %1933 = vmatpush1.bf16.xpose.msra.mxu0 0
  %1934 = vmatprep.mubr.bf16.mxu0 0
  %1935 = vmatmul.mubr.bf16.gmra.mrb[0].mxu0 %v1897
  %v1936 = vpop.f32.mrb[0].mxu0
  %v1937 = vadd.f32 %v22, %v1936
  %v1938 = vpop.f32.mrb[0].mxu0
  %v1939 = vpop.f32.mrb[0].mxu0
  %v1940 = vadd.f32 %v23, %v1939
  %v1941 = vpop.f32.mrb[0].mxu0
  %1942 = vmatprep.mubr.bf16.mxu0 0
  %1943 = vmatmul.mubr.bf16.gmra.mrb[0].mxu0 %v1900
  %v1944 = vpop.f32.mrb[0].mxu0
  %v1945 = vadd.f32 %v24, %v1944
  %v1946 = vpop.f32.mrb[0].mxu0
  %v1947 = vpop.f32.mrb[0].mxu0
  %v1948 = vadd.f32 %v25, %v1947
  %v1949 = vpop.f32.mrb[0].mxu0
  %1950 = vdwg.mxu0
  %v1951 = vsel %vm133, %v1937, -inf
  %1952 = vmax.xlane.f32.xlu0 %v1951
  %v1953 = vpop.xlane.xlu0 %1952
  %v1954 = vsel %vm133, %v1940, -inf
  %1955 = vmax.xlane.f32.xlu0 %v1954
  %v1956 = vpop.xlane.xlu0 %1955
  %v1957 = vsel %vm133, %v1945, -inf
  %1958 = vmax.xlane.f32.xlu0 %v1957
  %v1959 = vpop.xlane.xlu0 %1958
  %v1960 = vsel %vm133, %v1948, -inf
  %1961 = vmax.xlane.f32.xlu0 %v1960
  %v1962 = vpop.xlane.xlu0 %1961
  %v1963 = vsub.f32 %v1937, %v1953
  %v1964 = vsub.f32 %v1940, %v1956
  %v1965 = vsub.f32 %v1945, %v1959
  %v1966 = vsub.f32 %v1948, %v1962
  %v1967 = vmul.f32 %v1963, 1.442695
  %v1968 = vpow.pop %v1967
  %v1969 = vmul.f32 %v1964, 1.442695
  %v1970 = vpow.pop %v1969
  %v1971 = vmul.f32 %v1965, 1.442695
  %v1972 = vpow.pop %v1971
  %v1973 = vmul.f32 %v1966, 1.442695
  %v1974 = vpow.pop %v1973
  %v1975 = vsel %vm133, %v1968, 0.0
  %1976 = vadd.xlane.f32.xlu0 %v1975
  %v1977 = vpop.xlane.xlu0 %1976
  %v1978 = vsel %vm133, %v1970, 0.0
  %1979 = vadd.xlane.f32.xlu0 %v1978
  %v1980 = vpop.xlane.xlu0 %1979
  %v1981 = vsel %vm133, %v1972, 0.0
  %1982 = vadd.xlane.f32.xlu0 %v1981
  %v1983 = vpop.xlane.xlu0 %1982
  %v1984 = vsel %vm133, %v1974, 0.0
  %1985 = vadd.xlane.f32.xlu0 %v1984
  %v1986 = vpop.xlane.xlu0 %1985
  %v1987 = vrcp.pop %v1977
  %v1988 = vrcp.pop %v1980
  %v1989 = vrcp.pop %v1983
  %v1990 = vrcp.pop %v1986
  %v1991 = vmul.f32 %v1968, %v1987
  %v1992 = vmul.f32 %v1970, %v1988
  %v1993 = vmul.f32 %v1972, %v1989
  %v1994 = vmul.f32 %v1974, %v1990
  %v1995 = vpack.c.bf16 %v1992, %v1991
  %v1996 = vpack.c.bf16 %v1994, %v1993
  %1999 = vrot.lane.b32.xlu0 %v1886, 96
  %v2000 = vpop.permute.xlu0 %1999
  %2001 = vrot.lane.b32.xlu0 %v1887, 96
  %v2002 = vpop.permute.xlu0 %2001
  %v2006 = vsel %vm133, %v1995, 0
  %v2009 = vsel %vm133, %v1996, 0
  %2011 = vmatprep.subr.bf16.mxu0 0
  %2012 = vmatpush1.bf16.msra.mxu0 %v2000
  %2013 = vmatprep.subr.bf16.mxu0 0
  %2014 = vmatpush1.bf16.msra.mxu0 %v2002
  %2015 = vmatprep.subr.bf16.mxu0 0
  %2016 = vmatpush1.bf16.msra.mxu0 0
  %2017 = vmatprep.subr.bf16.mxu0 0
  %2018 = vmatpush1.bf16.msra.mxu0 0
  %2019 = vmatprep.subr.bf16.mxu0 0
  %2020 = vmatpush1.bf16.msra.mxu0 0
  %2021 = vmatprep.subr.bf16.mxu0 0
  %2022 = vmatpush1.bf16.msra.mxu0 0
  %2023 = vmatprep.subr.bf16.mxu0 0
  %2024 = vmatpush1.bf16.msra.mxu0 0
  %2025 = vmatprep.subr.bf16.mxu0 0
  %2026 = vmatpush1.bf16.msra.mxu0 0
  %2027 = vmatprep.subr.bf16.mxu0 0
  %2028 = vmatpush1.bf16.msra.mxu0 0
  %2029 = vmatprep.subr.bf16.mxu0 0
  %2030 = vmatpush1.bf16.msra.mxu0 0
  %2031 = vmatprep.subr.bf16.mxu0 0
  %2032 = vmatpush1.bf16.msra.mxu0 0
  %2033 = vmatprep.subr.bf16.mxu0 0
  %2034 = vmatpush1.bf16.msra.mxu0 0
  %2035 = vmatprep.subr.bf16.mxu0 0
  %2036 = vmatpush1.bf16.msra.mxu0 0
  %2037 = vmatprep.subr.bf16.mxu0 0
  %2038 = vmatpush1.bf16.msra.mxu0 0
  %2039 = vmatprep.subr.bf16.mxu0 0
  %2040 = vmatpush1.bf16.msra.mxu0 0
  %2041 = vmatprep.subr.bf16.mxu0 0
  %2042 = vmatpush1.bf16.msra.mxu0 0
  %2043 = vmatprep.mubr.bf16.mxu0 0
  %2044 = vmatmul.mubr.bf16.gmra.mrb[0].mxu0 %v2006
  %v2045 = vpop.f32.mrb[0].mxu0
  %v2046 = vadd.f32 0.0, %v2045
  %v2047 = vpop.f32.mrb[0].mxu0
  %v2048 = vpop.f32.mrb[0].mxu0
  %v2049 = vadd.f32 0.0, %v2048
  %v2050 = vpop.f32.mrb[0].mxu0
  %2051 = vmatprep.mubr.bf16.mxu0 0
  %2052 = vmatmul.mubr.bf16.gmra.mrb[0].mxu0 %v2009
  %v2053 = vpop.f32.mrb[0].mxu0
  %v2054 = vadd.f32 0.0, %v2053
  %v2055 = vpop.f32.mrb[0].mxu0
  %v2056 = vpop.f32.mrb[0].mxu0
  %v2057 = vadd.f32 0.0, %v2056
  %v2058 = vpop.f32.mrb[0].mxu0
  %2059 = vdwg.mxu0
  %v2061 = vsel %vm133, %v1888, 0
  %v2064 = vsel %vm133, %v1889, 0
  %2066 = vmatprep.subr.bf16.mxu0 0
  %2067 = vmatpush1.bf16.msra.mxu0 %v1886
  %2068 = vmatprep.subr.bf16.mxu0 0
  %2069 = vmatpush1.bf16.msra.mxu0 %v1887
  %2070 = vmatprep.subr.bf16.mxu0 0
  %2071 = vmatpush1.bf16.msra.mxu0 0
  %2072 = vmatprep.subr.bf16.mxu0 0
  %2073 = vmatpush1.bf16.msra.mxu0 0
  %2074 = vmatprep.subr.bf16.mxu0 0
  %2075 = vmatpush1.bf16.msra.mxu0 0
  %2076 = vmatprep.subr.bf16.mxu0 0
  %2077 = vmatpush1.bf16.msra.mxu0 0
  %2078 = vmatprep.subr.bf16.mxu0 0
  %2079 = vmatpush1.bf16.msra.mxu0 0
  %2080 = vmatprep.subr.bf16.mxu0 0
  %2081 = vmatpush1.bf16.msra.mxu0 0
  %2082 = vmatprep.subr.bf16.mxu0 0
  %2083 = vmatpush1.bf16.msra.mxu0 0
  %2084 = vmatprep.subr.bf16.mxu0 0
  %2085 = vmatpush1.bf16.msra.mxu0 0
  %2086 = vmatprep.subr.bf16.mxu0 0
  %2087 = vmatpush1.bf16.msra.mxu0 0
  %2088 = vmatprep.subr.bf16.mxu0 0
  %2089 = vmatpush1.bf16.msra.mxu0 0
  %2090 = vmatprep.subr.bf16.mxu0 0
  %2091 = vmatpush1.bf16.msra.mxu0 0
  %2092 = vmatprep.subr.bf16.mxu0 0
  %2093 = vmatpush1.bf16.msra.mxu0 0
  %2094 = vmatprep.subr.bf16.mxu0 0
  %2095 = vmatpush1.bf16.msra.mxu0 0
  %2096 = vmatprep.subr.bf16.mxu0 0
  %2097 = vmatpush1.bf16.msra.mxu0 0
  %2098 = vmatprep.mubr.bf16.mxu0 0
  %2099 = vmatmul.mubr.bf16.gmra.mrb[0].mxu0 %v2061
  %v2100 = vpop.f32.mrb[0].mxu0
  %v2101 = vadd.f32 %v2046, %v2100
  %v2102 = vpop.f32.mrb[0].mxu0
  %v2103 = vpop.f32.mrb[0].mxu0
  %v2104 = vadd.f32 %v2049, %v2103
  %v2105 = vpop.f32.mrb[0].mxu0
  %2106 = vmatprep.mubr.bf16.mxu0 0
  %2107 = vmatmul.mubr.bf16.gmra.mrb[0].mxu0 %v2064
  %v2108 = vpop.f32.mrb[0].mxu0
  %v2109 = vadd.f32 %v2054, %v2108
  %v2110 = vpop.f32.mrb[0].mxu0
  %v2111 = vpop.f32.mrb[0].mxu0
  %v2112 = vadd.f32 %v2057, %v2111
  %v2113 = vpop.f32.mrb[0].mxu0
  %2114 = vdwg.mxu0
  %2115 = vrot.lane.b32.xlu0 %v1779, 64
  %v2116 = vpop.permute.xlu0 %2115
  %2117 = vrot.lane.b32.xlu0 %v1780, 64
  %v2118 = vpop.permute.xlu0 %2117
  %v2120 = vsel %vm133, %v2116, 0
  %v2123 = vsel %vm133, %v2118, 0
  %2125 = vmatprep.subr.bf16.mxu0 0
  %2126 = vmatpush1.bf16.xpose.msra.mxu0 %v1788
  %2127 = vmatprep.subr.bf16.mxu0 0
  %2128 = vmatpush1.bf16.xpose.msra.mxu0 %v1791
  %2129 = vmatprep.subr.bf16.mxu0 0
  %2130 = vmatpush1.bf16.xpose.msra.mxu0 0
  %2131 = vmatprep.subr.bf16.mxu0 0
  %2132 = vmatpush1.bf16.xpose.msra.mxu0 0
  %2133 = vmatprep.subr.bf16.mxu0 0
  %2134 = vmatpush1.bf16.xpose.msra.mxu0 0
  %2135 = vmatprep.subr.bf16.mxu0 0
  %2136 = vmatpush1.bf16.xpose.msra.mxu0 0
  %2137 = vmatprep.subr.bf16.mxu0 0
  %2138 = vmatpush1.bf16.xpose.msra.mxu0 0
  %2139 = vmatprep.subr.bf16.mxu0 0
  %2140 = vmatpush1.bf16.xpose.msra.mxu0 0
  %2141 = vmatprep.subr.bf16.mxu0 0
  %2142 = vmatpush1.bf16.xpose.msra.mxu0 0
  %2143 = vmatprep.subr.bf16.mxu0 0
  %2144 = vmatpush1.bf16.xpose.msra.mxu0 0
  %2145 = vmatprep.subr.bf16.mxu0 0
  %2146 = vmatpush1.bf16.xpose.msra.mxu0 0
  %2147 = vmatprep.subr.bf16.mxu0 0
  %2148 = vmatpush1.bf16.xpose.msra.mxu0 0
  %2149 = vmatprep.subr.bf16.mxu0 0
  %2150 = vmatpush1.bf16.xpose.msra.mxu0 0
  %2151 = vmatprep.subr.bf16.mxu0 0
  %2152 = vmatpush1.bf16.xpose.msra.mxu0 0
  %2153 = vmatprep.subr.bf16.mxu0 0
  %2154 = vmatpush1.bf16.xpose.msra.mxu0 0
  %2155 = vmatprep.subr.bf16.mxu0 0
  %2156 = vmatpush1.bf16.xpose.msra.mxu0 0
  %2157 = vmatprep.mubr.bf16.mxu0 0
  %2158 = vmatmul.mubr.bf16.gmra.mrb[0].mxu0 %v2120
  %v2159 = vpop.f32.mrb[0].mxu0
  %v2160 = vadd.f32 %v22, %v2159
  %v2161 = vpop.f32.mrb[0].mxu0
  %v2162 = vpop.f32.mrb[0].mxu0
  %v2163 = vadd.f32 %v23, %v2162
  %v2164 = vpop.f32.mrb[0].mxu0
  %2165 = vmatprep.mubr.bf16.mxu0 0
  %2166 = vmatmul.mubr.bf16.gmra.mrb[0].mxu0 %v2123
  %v2167 = vpop.f32.mrb[0].mxu0
  %v2168 = vadd.f32 %v24, %v2167
  %v2169 = vpop.f32.mrb[0].mxu0
  %v2170 = vpop.f32.mrb[0].mxu0
  %v2171 = vadd.f32 %v25, %v2170
  %v2172 = vpop.f32.mrb[0].mxu0
  %2173 = vdwg.mxu0
  %v2174 = vsel %vm133, %v2160, -inf
  %2175 = vmax.xlane.f32.xlu0 %v2174
  %v2176 = vpop.xlane.xlu0 %2175
  %v2177 = vsel %vm133, %v2163, -inf
  %2178 = vmax.xlane.f32.xlu0 %v2177
  %v2179 = vpop.xlane.xlu0 %2178
  %v2180 = vsel %vm133, %v2168, -inf
  %2181 = vmax.xlane.f32.xlu0 %v2180
  %v2182 = vpop.xlane.xlu0 %2181
  %v2183 = vsel %vm133, %v2171, -inf
  %2184 = vmax.xlane.f32.xlu0 %v2183
  %v2185 = vpop.xlane.xlu0 %2184
  %v2186 = vsub.f32 %v2160, %v2176
  %v2187 = vsub.f32 %v2163, %v2179
  %v2188 = vsub.f32 %v2168, %v2182
  %v2189 = vsub.f32 %v2171, %v2185
  %v2190 = vmul.f32 %v2186, 1.442695
  %v2191 = vpow.pop %v2190
  %v2192 = vmul.f32 %v2187, 1.442695
  %v2193 = vpow.pop %v2192
  %v2194 = vmul.f32 %v2188, 1.442695
  %v2195 = vpow.pop %v2194
  %v2196 = vmul.f32 %v2189, 1.442695
  %v2197 = vpow.pop %v2196
  %v2198 = vsel %vm133, %v2191, 0.0
  %2199 = vadd.xlane.f32.xlu0 %v2198
  %v2200 = vpop.xlane.xlu0 %2199
  %v2201 = vsel %vm133, %v2193, 0.0
  %2202 = vadd.xlane.f32.xlu0 %v2201
  %v2203 = vpop.xlane.xlu0 %2202
  %v2204 = vsel %vm133, %v2195, 0.0
  %2205 = vadd.xlane.f32.xlu0 %v2204
  %v2206 = vpop.xlane.xlu0 %2205
  %v2207 = vsel %vm133, %v2197, 0.0
  %2208 = vadd.xlane.f32.xlu0 %v2207
  %v2209 = vpop.xlane.xlu0 %2208
  %v2210 = vrcp.pop %v2200
  %v2211 = vrcp.pop %v2203
  %v2212 = vrcp.pop %v2206
  %v2213 = vrcp.pop %v2209
  %v2214 = vmul.f32 %v2191, %v2210
  %v2215 = vmul.f32 %v2193, %v2211
  %v2216 = vmul.f32 %v2195, %v2212
  %v2217 = vmul.f32 %v2197, %v2213
  %v2218 = vpack.c.bf16 %v2215, %v2214
  %v2219 = vpack.c.bf16 %v2217, %v2216
  %2220 = vrot.lane.b32.xlu0 %v1886, 64
  %v2221 = vpop.permute.xlu0 %2220
  %2222 = vrot.lane.b32.xlu0 %v1887, 64
  %v2223 = vpop.permute.xlu0 %2222
  %v2227 = vsel %vm133, %v2218, 0
  %v2230 = vsel %vm133, %v2219, 0
  %2232 = vmatprep.subr.bf16.mxu0 0
  %2233 = vmatpush1.bf16.msra.mxu0 %v2221
  %2234 = vmatprep.subr.bf16.mxu0 0
  %2235 = vmatpush1.bf16.msra.mxu0 %v2223
  %2236 = vmatprep.subr.bf16.mxu0 0
  %2237 = vmatpush1.bf16.msra.mxu0 0
  %2238 = vmatprep.subr.bf16.mxu0 0
  %2239 = vmatpush1.bf16.msra.mxu0 0
  %2240 = vmatprep.subr.bf16.mxu0 0
  %2241 = vmatpush1.bf16.msra.mxu0 0
  %2242 = vmatprep.subr.bf16.mxu0 0
  %2243 = vmatpush1.bf16.msra.mxu0 0
  %2244 = vmatprep.subr.bf16.mxu0 0
  %2245 = vmatpush1.bf16.msra.mxu0 0
  %2246 = vmatprep.subr.bf16.mxu0 0
  %2247 = vmatpush1.bf16.msra.mxu0 0
  %2248 = vmatprep.subr.bf16.mxu0 0
  %2249 = vmatpush1.bf16.msra.mxu0 0
  %2250 = vmatprep.subr.bf16.mxu0 0
  %2251 = vmatpush1.bf16.msra.mxu0 0
  %2252 = vmatprep.subr.bf16.mxu0 0
  %2253 = vmatpush1.bf16.msra.mxu0 0
  %2254 = vmatprep.subr.bf16.mxu0 0
  %2255 = vmatpush1.bf16.msra.mxu0 0
  %2256 = vmatprep.subr.bf16.mxu0 0
  %2257 = vmatpush1.bf16.msra.mxu0 0
  %2258 = vmatprep.subr.bf16.mxu0 0
  %2259 = vmatpush1.bf16.msra.mxu0 0
  %2260 = vmatprep.subr.bf16.mxu0 0
  %2261 = vmatpush1.bf16.msra.mxu0 0
  %2262 = vmatprep.subr.bf16.mxu0 0
  %2263 = vmatpush1.bf16.msra.mxu0 0
  %2264 = vmatprep.mubr.bf16.mxu0 0
  %2265 = vmatmul.mubr.bf16.gmra.mrb[0].mxu0 %v2227
  %v2266 = vpop.f32.mrb[0].mxu0
  %v2267 = vadd.f32 0.0, %v2266
  %v2268 = vpop.f32.mrb[0].mxu0
  %v2269 = vpop.f32.mrb[0].mxu0
  %v2270 = vadd.f32 0.0, %v2269
  %v2271 = vpop.f32.mrb[0].mxu0
  %2272 = vmatprep.mubr.bf16.mxu0 0
  %2273 = vmatmul.mubr.bf16.gmra.mrb[0].mxu0 %v2230
  %v2274 = vpop.f32.mrb[0].mxu0
  %v2275 = vadd.f32 0.0, %v2274
  %v2276 = vpop.f32.mrb[0].mxu0
  %v2277 = vpop.f32.mrb[0].mxu0
  %v2278 = vadd.f32 0.0, %v2277
  %v2279 = vpop.f32.mrb[0].mxu0
  %2280 = vdwg.mxu0
  %v2281 = vadd.f32 %v2101, %v2267
  %v2282 = vadd.f32 %v2104, %v2270
  %v2283 = vadd.f32 %v2109, %v2275
  %v2284 = vadd.f32 %v2112, %v2278
  %2285 = vrot.lane.b32.xlu0 %v1779, 32
  %v2286 = vpop.permute.xlu0 %2285
  %2287 = vrot.lane.b32.xlu0 %v1780, 32
  %v2288 = vpop.permute.xlu0 %2287
  %v2290 = vsel %vm133, %v2286, 0
  %v2293 = vsel %vm133, %v2288, 0
  %2295 = vmatprep.subr.bf16.mxu0 0
  %2296 = vmatpush1.bf16.xpose.msra.mxu0 %v1788
  %2297 = vmatprep.subr.bf16.mxu0 0
  %2298 = vmatpush1.bf16.xpose.msra.mxu0 %v1791
  %2299 = vmatprep.subr.bf16.mxu0 0
  %2300 = vmatpush1.bf16.xpose.msra.mxu0 0
  %2301 = vmatprep.subr.bf16.mxu0 0
  %2302 = vmatpush1.bf16.xpose.msra.mxu0 0
  %2303 = vmatprep.subr.bf16.mxu0 0
  %2304 = vmatpush1.bf16.xpose.msra.mxu0 0
  %2305 = vmatprep.subr.bf16.mxu0 0
  %2306 = vmatpush1.bf16.xpose.msra.mxu0 0
  %2307 = vmatprep.subr.bf16.mxu0 0
  %2308 = vmatpush1.bf16.xpose.msra.mxu0 0
  %2309 = vmatprep.subr.bf16.mxu0 0
  %2310 = vmatpush1.bf16.xpose.msra.mxu0 0
  %2311 = vmatprep.subr.bf16.mxu0 0
  %2312 = vmatpush1.bf16.xpose.msra.mxu0 0
  %2313 = vmatprep.subr.bf16.mxu0 0
  %2314 = vmatpush1.bf16.xpose.msra.mxu0 0
  %2315 = vmatprep.subr.bf16.mxu0 0
  %2316 = vmatpush1.bf16.xpose.msra.mxu0 0
  %2317 = vmatprep.subr.bf16.mxu0 0
  %2318 = vmatpush1.bf16.xpose.msra.mxu0 0
  %2319 = vmatprep.subr.bf16.mxu0 0
  %2320 = vmatpush1.bf16.xpose.msra.mxu0 0
  %2321 = vmatprep.subr.bf16.mxu0 0
  %2322 = vmatpush1.bf16.xpose.msra.mxu0 0
  %2323 = vmatprep.subr.bf16.mxu0 0
  %2324 = vmatpush1.bf16.xpose.msra.mxu0 0
  %2325 = vmatprep.subr.bf16.mxu0 0
  %2326 = vmatpush1.bf16.xpose.msra.mxu0 0
  %2327 = vmatprep.mubr.bf16.mxu0 0
  %2328 = vmatmul.mubr.bf16.gmra.mrb[0].mxu0 %v2290
  %v2329 = vpop.f32.mrb[0].mxu0
  %v2330 = vadd.f32 %v22, %v2329
  %v2331 = vpop.f32.mrb[0].mxu0
  %v2332 = vpop.f32.mrb[0].mxu0
  %v2333 = vadd.f32 %v23, %v2332
  %v2334 = vpop.f32.mrb[0].mxu0
  %2335 = vmatprep.mubr.bf16.mxu0 0
  %2336 = vmatmul.mubr.bf16.gmra.mrb[0].mxu0 %v2293
  %v2337 = vpop.f32.mrb[0].mxu0
  %v2338 = vadd.f32 %v24, %v2337
  %v2339 = vpop.f32.mrb[0].mxu0
  %v2340 = vpop.f32.mrb[0].mxu0
  %v2341 = vadd.f32 %v25, %v2340
  %v2342 = vpop.f32.mrb[0].mxu0
  %2343 = vdwg.mxu0
  %v2344 = vsel %vm133, %v2330, -inf
  %2345 = vmax.xlane.f32.xlu0 %v2344
  %v2346 = vpop.xlane.xlu0 %2345
  %v2347 = vsel %vm133, %v2333, -inf
  %2348 = vmax.xlane.f32.xlu0 %v2347
  %v2349 = vpop.xlane.xlu0 %2348
  %v2350 = vsel %vm133, %v2338, -inf
  %2351 = vmax.xlane.f32.xlu0 %v2350
  %v2352 = vpop.xlane.xlu0 %2351
  %v2353 = vsel %vm133, %v2341, -inf
  %2354 = vmax.xlane.f32.xlu0 %v2353
  %v2355 = vpop.xlane.xlu0 %2354
  %v2356 = vsub.f32 %v2330, %v2346
  %v2357 = vsub.f32 %v2333, %v2349
  %v2358 = vsub.f32 %v2338, %v2352
  %v2359 = vsub.f32 %v2341, %v2355
  %v2360 = vmul.f32 %v2356, 1.442695
  %v2361 = vpow.pop %v2360
  %v2362 = vmul.f32 %v2357, 1.442695
  %v2363 = vpow.pop %v2362
  %v2364 = vmul.f32 %v2358, 1.442695
  %v2365 = vpow.pop %v2364
  %v2366 = vmul.f32 %v2359, 1.442695
  %v2367 = vpow.pop %v2366
  %v2368 = vsel %vm133, %v2361, 0.0
  %2369 = vadd.xlane.f32.xlu0 %v2368
  %v2370 = vpop.xlane.xlu0 %2369
  %v2371 = vsel %vm133, %v2363, 0.0
  %2372 = vadd.xlane.f32.xlu0 %v2371
  %v2373 = vpop.xlane.xlu0 %2372
  %v2374 = vsel %vm133, %v2365, 0.0
  %2375 = vadd.xlane.f32.xlu0 %v2374
  %v2376 = vpop.xlane.xlu0 %2375
  %v2377 = vsel %vm133, %v2367, 0.0
  %2378 = vadd.xlane.f32.xlu0 %v2377
  %v2379 = vpop.xlane.xlu0 %2378
  %v2380 = vrcp.pop %v2370
  %v2381 = vrcp.pop %v2373
  %v2382 = vrcp.pop %v2376
  %v2383 = vrcp.pop %v2379
  %v2384 = vmul.f32 %v2361, %v2380
  %v2385 = vmul.f32 %v2363, %v2381
  %v2386 = vmul.f32 %v2365, %v2382
  %v2387 = vmul.f32 %v2367, %v2383
  %v2388 = vpack.c.bf16 %v2385, %v2384
  %v2389 = vpack.c.bf16 %v2387, %v2386
  %2390 = vrot.lane.b32.xlu0 %v1886, 32
  %v2391 = vpop.permute.xlu0 %2390
  %2392 = vrot.lane.b32.xlu0 %v1887, 32
  %v2393 = vpop.permute.xlu0 %2392
  %v2397 = vsel %vm133, %v2388, 0
  %v2400 = vsel %vm133, %v2389, 0
  %2402 = vmatprep.subr.bf16.mxu0 0
  %2403 = vmatpush1.bf16.msra.mxu0 %v2391
  %2404 = vmatprep.subr.bf16.mxu0 0
  %2405 = vmatpush1.bf16.msra.mxu0 %v2393
  %2406 = vmatprep.subr.bf16.mxu0 0
  %2407 = vmatpush1.bf16.msra.mxu0 0
  %2408 = vmatprep.subr.bf16.mxu0 0
  %2409 = vmatpush1.bf16.msra.mxu0 0
  %2410 = vmatprep.subr.bf16.mxu0 0
  %2411 = vmatpush1.bf16.msra.mxu0 0
  %2412 = vmatprep.subr.bf16.mxu0 0
  %2413 = vmatpush1.bf16.msra.mxu0 0
  %2414 = vmatprep.subr.bf16.mxu0 0
  %2415 = vmatpush1.bf16.msra.mxu0 0
  %2416 = vmatprep.subr.bf16.mxu0 0
  %2417 = vmatpush1.bf16.msra.mxu0 0
  %2418 = vmatprep.subr.bf16.mxu0 0
  %2419 = vmatpush1.bf16.msra.mxu0 0
  %2420 = vmatprep.subr.bf16.mxu0 0
  %2421 = vmatpush1.bf16.msra.mxu0 0
  %2422 = vmatprep.subr.bf16.mxu0 0
  %2423 = vmatpush1.bf16.msra.mxu0 0
  %2424 = vmatprep.subr.bf16.mxu0 0
  %2425 = vmatpush1.bf16.msra.mxu0 0
  %2426 = vmatprep.subr.bf16.mxu0 0
  %2427 = vmatpush1.bf16.msra.mxu0 0
  %2428 = vmatprep.subr.bf16.mxu0 0
  %2429 = vmatpush1.bf16.msra.mxu0 0
  %2430 = vmatprep.subr.bf16.mxu0 0
  %2431 = vmatpush1.bf16.msra.mxu0 0
  %2432 = vmatprep.subr.bf16.mxu0 0
  %2433 = vmatpush1.bf16.msra.mxu0 0
  %2434 = vmatprep.mubr.bf16.mxu0 0
  %2435 = vmatmul.mubr.bf16.gmra.mrb[0].mxu0 %v2397
  %v2436 = vpop.f32.mrb[0].mxu0
  %v2437 = vadd.f32 0.0, %v2436
  %v2438 = vpop.f32.mrb[0].mxu0
  %v2439 = vpop.f32.mrb[0].mxu0
  %v2440 = vadd.f32 0.0, %v2439
  %v2441 = vpop.f32.mrb[0].mxu0
  %2442 = vmatprep.mubr.bf16.mxu0 0
  %2443 = vmatmul.mubr.bf16.gmra.mrb[0].mxu0 %v2400
  %v2444 = vpop.f32.mrb[0].mxu0
  %v2445 = vadd.f32 0.0, %v2444
  %v2446 = vpop.f32.mrb[0].mxu0
  %v2447 = vpop.f32.mrb[0].mxu0
  %v2448 = vadd.f32 0.0, %v2447
  %v2449 = vpop.f32.mrb[0].mxu0
  %2450 = vdwg.mxu0
  %v2451 = vadd.f32 %v2281, %v2437
  %v2452 = vadd.f32 %v2282, %v2440
  %v2453 = vadd.f32 %v2283, %v2445
  %v2454 = vadd.f32 %v2284, %v2448
  %v2455 = vadd.f32 %v1401, %v2451
  %v2456 = vadd.f32 %v1402, %v2452
  %v2457 = vadd.f32 %v1403, %v2453
  %v2458 = vadd.f32 %v1404, %v2454
  %v2459 = vsel %vm133, %v2455, 0.0
  %2460 = vadd.xlane.f32.xlu0 %v2459
  %v2461 = vpop.xlane.xlu0 %2460
  %v2462 = vsel %vm133, %v2456, 0.0
  %2463 = vadd.xlane.f32.xlu0 %v2462
  %v2464 = vpop.xlane.xlu0 %2463
  %v2465 = vsel %vm133, %v2457, 0.0
  %2466 = vadd.xlane.f32.xlu0 %v2465
  %v2467 = vpop.xlane.xlu0 %2466
  %v2468 = vsel %vm133, %v2458, 0.0
  %2469 = vadd.xlane.f32.xlu0 %v2468
  %v2470 = vpop.xlane.xlu0 %2469
  %v2471 = vmul.f32 %v2461, %v1093
  %v2472 = vmul.f32 %v2464, %v1093
  %v2473 = vmul.f32 %v2467, %v1093
  %v2474 = vmul.f32 %v2470, %v1093
  %v2475 = vsub.f32 %v2455, %v2471
  %v2476 = vsub.f32 %v2456, %v2472
  %v2477 = vsub.f32 %v2457, %v2473
  %v2478 = vsub.f32 %v2458, %v2474
  %v2479 = vmul.f32 %v2475, %v2475
  %v2480 = vmul.f32 %v2476, %v2476
  %v2481 = vmul.f32 %v2477, %v2477
  %v2482 = vmul.f32 %v2478, %v2478
  %v2483 = vsel %vm133, %v2479, 0.0
  %2484 = vadd.xlane.f32.xlu0 %v2483
  %v2485 = vpop.xlane.xlu0 %2484
  %v2486 = vsel %vm133, %v2480, 0.0
  %2487 = vadd.xlane.f32.xlu0 %v2486
  %v2488 = vpop.xlane.xlu0 %2487
  %v2489 = vsel %vm133, %v2481, 0.0
  %2490 = vadd.xlane.f32.xlu0 %v2489
  %v2491 = vpop.xlane.xlu0 %2490
  %v2492 = vsel %vm133, %v2482, 0.0
  %2493 = vadd.xlane.f32.xlu0 %v2492
  %v2494 = vpop.xlane.xlu0 %2493
  %v2495 = vmul.f32 %v2485, %v1093
  %v2496 = vmul.f32 %v2488, %v1093
  %v2497 = vmul.f32 %v2491, %v1093
  %v2498 = vmul.f32 %v2494, %v1093
  %v2499 = vadd.f32 %v2495, 1e-05
  %v2500 = vadd.f32 %v2496, 1e-05
  %v2501 = vadd.f32 %v2497, 1e-05
  %v2502 = vadd.f32 %v2498, 1e-05
  %v2503 = vrsqrt.pop %v2499
  %v2504 = vrsqrt.pop %v2500
  %v2505 = vrsqrt.pop %v2501
  %v2506 = vrsqrt.pop %v2502
  %v2507 = vmul.f32 %v2475, %v2503
  %v2508 = vmul.f32 %v2476, %v2504
  %v2509 = vmul.f32 %v2477, %v2505
  %v2510 = vmul.f32 %v2478, %v2506
  %v2511 = vlaneseq
  %v2512 = vshrl.u32 %v2511, 7
  %v2513 = vsub.s32 0, %v2512
  %v2514 = vrot.slane %v1462, %v2513
  %v2515 = vmul.f32 %v2507, %v2514
  %v2516 = vmul.f32 %v2508, %v2514
  %v2517 = vmul.f32 %v2509, %v2514
  %v2518 = vmul.f32 %v2510, %v2514
  %v2519 = vlaneseq
  %v2520 = vshrl.u32 %v2519, 7
  %v2521 = vsub.s32 0, %v2520
  %v2522 = vrot.slane %v1463, %v2521
  %v2523 = vadd.f32 %v2515, %v2522
  %v2524 = vadd.f32 %v2516, %v2522
  %v2525 = vadd.f32 %v2517, %v2522
  %v2526 = vadd.f32 %v2518, %v2522
  %v2527 = vpack.c.bf16 %v2524, %v2523
  %v2528 = vpack.c.bf16 %v2526, %v2525
  %v2529 = vlaneseq
  %v2530 = vshrl.u32 %v2529, 7
  %v2531 = vsub.s32 0, %v2530
  %v2532 = vrot.slane %v1460, %v2531
  %v2541 = vunpack.c.l.b16 %v1441
  %v2542 = vunpack.c.l.b16 %v1442
  %v2543 = vunpack.c.l.b16 %v1443
  %v2544 = vunpack.c.l.b16 %v1444
  %v2545 = vunpack.c.l.b16 %v1445
  %v2546 = vunpack.c.l.b16 %v1446
  %v2547 = vunpack.c.l.b16 %v1447
  %v2548 = vunpack.c.l.b16 %v1448
  %v2549 = vpack.c.b16 %v2542, %v2541
  %v2550 = vpack.c.b16 %v2544, %v2543
  %v2551 = vpack.c.b16 %v2546, %v2545
  %v2552 = vpack.c.b16 %v2548, %v2547
  %v2554 = vsel %vm133, %v2527, 0
  %v2557 = vsel %vm133, %v2528, 0
  %v2560 = vsel %vm133, %v2549, 0
  %v2563 = vsel %vm133, %v2550, 0
  %v2566 = vsel %vm133, %v2551, 0
  %v2569 = vsel %vm133, %v2552, 0
  %2571 = vmatprep.subr.bf16.mxu0 0
  %2572 = vmatpush1.bf16.xpose.msra.mxu0 %v2560
  %2573 = vmatprep.subr.bf16.mxu0 0
  %2574 = vmatpush1.bf16.xpose.msra.mxu0 %v2563
  %2575 = vmatprep.subr.bf16.mxu0 0
  %2576 = vmatpush1.bf16.xpose.msra.mxu0 %v2566
  %2577 = vmatprep.subr.bf16.mxu0 0
  %2578 = vmatpush1.bf16.xpose.msra.mxu0 %v2569
  %2579 = vmatprep.subr.bf16.mxu0 0
  %2580 = vmatpush1.bf16.xpose.msra.mxu0 0
  %2581 = vmatprep.subr.bf16.mxu0 0
  %2582 = vmatpush1.bf16.xpose.msra.mxu0 0
  %2583 = vmatprep.subr.bf16.mxu0 0
  %2584 = vmatpush1.bf16.xpose.msra.mxu0 0
  %2585 = vmatprep.subr.bf16.mxu0 0
  %2586 = vmatpush1.bf16.xpose.msra.mxu0 0
  %2587 = vmatprep.subr.bf16.mxu0 0
  %2588 = vmatpush1.bf16.xpose.msra.mxu0 0
  %2589 = vmatprep.subr.bf16.mxu0 0
  %2590 = vmatpush1.bf16.xpose.msra.mxu0 0
  %2591 = vmatprep.subr.bf16.mxu0 0
  %2592 = vmatpush1.bf16.xpose.msra.mxu0 0
  %2593 = vmatprep.subr.bf16.mxu0 0
  %2594 = vmatpush1.bf16.xpose.msra.mxu0 0
  %2595 = vmatprep.subr.bf16.mxu0 0
  %2596 = vmatpush1.bf16.xpose.msra.mxu0 0
  %2597 = vmatprep.subr.bf16.mxu0 0
  %2598 = vmatpush1.bf16.xpose.msra.mxu0 0
  %2599 = vmatprep.subr.bf16.mxu0 0
  %2600 = vmatpush1.bf16.xpose.msra.mxu0 0
  %2601 = vmatprep.subr.bf16.mxu0 0
  %2602 = vmatpush1.bf16.xpose.msra.mxu0 0
  %2603 = vmatprep.mubr.bf16.mxu0 0
  %2604 = vmatmul.mubr.bf16.gmra.mrb[0].mxu0 %v2554
  %v2605 = vpop.f32.mrb[0].mxu0
  %v2606 = vadd.f32 %v2532, %v2605
  %v2607 = vpop.f32.mrb[0].mxu0
  %v2608 = vpop.f32.mrb[0].mxu0
  %v2609 = vadd.f32 %v2532, %v2608
  %v2610 = vpop.f32.mrb[0].mxu0
  %2611 = vmatprep.mubr.bf16.mxu0 0
  %2612 = vmatmul.mubr.bf16.gmra.mrb[0].mxu0 %v2557
  %v2613 = vpop.f32.mrb[0].mxu0
  %v2614 = vadd.f32 %v2532, %v2613
  %v2615 = vpop.f32.mrb[0].mxu0
  %v2616 = vpop.f32.mrb[0].mxu0
  %v2617 = vadd.f32 %v2532, %v2616
  %v2618 = vpop.f32.mrb[0].mxu0
  %2619 = vdwg.mxu0
  %v2620 = vmax.f32 %v2606, 0.0
  %v2621 = vmax.f32 %v2609, 0.0
  %v2622 = vmax.f32 %v2614, 0.0
  %v2623 = vmax.f32 %v2617, 0.0
  %v2624 = vpack.c.bf16 %v2621, %v2620
  %v2625 = vpack.c.bf16 %v2623, %v2622
  %v2626 = vlaneseq
  %v2627 = vshrl.u32 %v2626, 7
  %v2628 = vsub.s32 0, %v2627
  %v2629 = vrot.slane %v1461, %v2628
  %v2638 = vunpack.c.l.b16 %v1449
  %v2639 = vunpack.c.l.b16 %v1450
  %v2640 = vunpack.c.l.b16 %v1451
  %v2641 = vunpack.c.l.b16 %v1452
  %v2642 = vunpack.c.l.b16 %v1453
  %v2643 = vunpack.c.l.b16 %v1454
  %v2644 = vunpack.c.l.b16 %v1455
  %v2645 = vunpack.c.l.b16 %v1456
  %v2646 = vpack.c.b16 %v2639, %v2638
  %v2647 = vpack.c.b16 %v2641, %v2640
  %v2648 = vpack.c.b16 %v2643, %v2642
  %v2649 = vpack.c.b16 %v2645, %v2644
  %v2655 = vsel %vm1277, %v2624, 0
  %v2658 = vsel %vm1277, %v2625, 0
  %2660 = vmatprep.subr.bf16.mxu0 0
  %2661 = vmatpush1.bf16.msra.mxu0 %v2646
  %2662 = vmatprep.subr.bf16.mxu0 0
  %2663 = vmatpush1.bf16.msra.mxu0 %v2647
  %2664 = vmatprep.subr.bf16.mxu0 0
  %2665 = vmatpush1.bf16.msra.mxu0 %v2648
  %2666 = vmatprep.subr.bf16.mxu0 0
  %2667 = vmatpush1.bf16.msra.mxu0 %v2649
  %2668 = vmatprep.subr.bf16.mxu0 0
  %2669 = vmatpush1.bf16.msra.mxu0 0
  %2670 = vmatprep.subr.bf16.mxu0 0
  %2671 = vmatpush1.bf16.msra.mxu0 0
  %2672 = vmatprep.subr.bf16.mxu0 0
  %2673 = vmatpush1.bf16.msra.mxu0 0
  %2674 = vmatprep.subr.bf16.mxu0 0
  %2675 = vmatpush1.bf16.msra.mxu0 0
  %2676 = vmatprep.subr.bf16.mxu0 0
  %2677 = vmatpush1.bf16.msra.mxu0 0
  %2678 = vmatprep.subr.bf16.mxu0 0
  %2679 = vmatpush1.bf16.msra.mxu0 0
  %2680 = vmatprep.subr.bf16.mxu0 0
  %2681 = vmatpush1.bf16.msra.mxu0 0
  %2682 = vmatprep.subr.bf16.mxu0 0
  %2683 = vmatpush1.bf16.msra.mxu0 0
  %2684 = vmatprep.subr.bf16.mxu0 0
  %2685 = vmatpush1.bf16.msra.mxu0 0
  %2686 = vmatprep.subr.bf16.mxu0 0
  %2687 = vmatpush1.bf16.msra.mxu0 0
  %2688 = vmatprep.subr.bf16.mxu0 0
  %2689 = vmatpush1.bf16.msra.mxu0 0
  %2690 = vmatprep.subr.bf16.mxu0 0
  %2691 = vmatpush1.bf16.msra.mxu0 0
  %2692 = vmatprep.mubr.bf16.mxu0 0
  %2693 = vmatmul.mubr.bf16.gmra.mrb[0].mxu0 %v2655
  %v2694 = vpop.f32.mrb[0].mxu0
  %v2695 = vadd.f32 %v2629, %v2694
  %v2696 = vpop.f32.mrb[0].mxu0
  %v2697 = vpop.f32.mrb[0].mxu0
  %v2698 = vadd.f32 %v2629, %v2697
  %v2699 = vpop.f32.mrb[0].mxu0
  %2700 = vmatprep.mubr.bf16.mxu0 0
  %2701 = vmatmul.mubr.bf16.gmra.mrb[0].mxu0 %v2658
  %v2702 = vpop.f32.mrb[0].mxu0
  %v2703 = vadd.f32 %v2629, %v2702
  %v2704 = vpop.f32.mrb[0].mxu0
  %v2705 = vpop.f32.mrb[0].mxu0
  %v2706 = vadd.f32 %v2629, %v2705
  %v2707 = vpop.f32.mrb[0].mxu0
  %2708 = vdwg.mxu0
  %v2709 = vadd.f32 %v2523, %v2695
  %v2710 = vadd.f32 %v2524, %v2698
  %v2711 = vadd.f32 %v2525, %v2703
  %v2712 = vadd.f32 %v2526, %v2706
  %v2713 = vsel %vm133, %v2709, 0.0
  %2714 = vadd.xlane.f32.xlu0 %v2713
  %v2715 = vpop.xlane.xlu0 %2714
  %v2716 = vsel %vm133, %v2710, 0.0
  %2717 = vadd.xlane.f32.xlu0 %v2716
  %v2718 = vpop.xlane.xlu0 %2717
  %v2719 = vsel %vm133, %v2711, 0.0
  %2720 = vadd.xlane.f32.xlu0 %v2719
  %v2721 = vpop.xlane.xlu0 %2720
  %v2722 = vsel %vm133, %v2712, 0.0
  %2723 = vadd.xlane.f32.xlu0 %v2722
  %v2724 = vpop.xlane.xlu0 %2723
  %v2725 = vmul.f32 %v2715, %v1093
  %v2726 = vmul.f32 %v2718, %v1093
  %v2727 = vmul.f32 %v2721, %v1093
  %v2728 = vmul.f32 %v2724, %v1093
  %v2729 = vsub.f32 %v2709, %v2725
  %v2730 = vsub.f32 %v2710, %v2726
  %v2731 = vsub.f32 %v2711, %v2727
  %v2732 = vsub.f32 %v2712, %v2728
  %v2733 = vmul.f32 %v2729, %v2729
  %v2734 = vmul.f32 %v2730, %v2730
  %v2735 = vmul.f32 %v2731, %v2731
  %v2736 = vmul.f32 %v2732, %v2732
  %v2737 = vsel %vm133, %v2733, 0.0
  %2738 = vadd.xlane.f32.xlu0 %v2737
  %v2739 = vpop.xlane.xlu0 %2738
  %v2740 = vsel %vm133, %v2734, 0.0
  %2741 = vadd.xlane.f32.xlu0 %v2740
  %v2742 = vpop.xlane.xlu0 %2741
  %v2743 = vsel %vm133, %v2735, 0.0
  %2744 = vadd.xlane.f32.xlu0 %v2743
  %v2745 = vpop.xlane.xlu0 %2744
  %v2746 = vsel %vm133, %v2736, 0.0
  %2747 = vadd.xlane.f32.xlu0 %v2746
  %v2748 = vpop.xlane.xlu0 %2747
  %v2749 = vmul.f32 %v2739, %v1093
  %v2750 = vmul.f32 %v2742, %v1093
  %v2751 = vmul.f32 %v2745, %v1093
  %v2752 = vmul.f32 %v2748, %v1093
  %v2753 = vadd.f32 %v2749, 1e-05
  %v2754 = vadd.f32 %v2750, 1e-05
  %v2755 = vadd.f32 %v2751, 1e-05
  %v2756 = vadd.f32 %v2752, 1e-05
  %v2757 = vrsqrt.pop %v2753
  %v2758 = vrsqrt.pop %v2754
  %v2759 = vrsqrt.pop %v2755
  %v2760 = vrsqrt.pop %v2756
  %v2761 = vmul.f32 %v2729, %v2757
  %v2762 = vmul.f32 %v2730, %v2758
  %v2763 = vmul.f32 %v2731, %v2759
  %v2764 = vmul.f32 %v2732, %v2760
  %v2765 = vlaneseq
  %v2766 = vshrl.u32 %v2765, 7
  %v2767 = vsub.s32 0, %v2766
  %v2768 = vrot.slane %v1464, %v2767
  %v2769 = vmul.f32 %v2761, %v2768
  %v2770 = vmul.f32 %v2762, %v2768
  %v2771 = vmul.f32 %v2763, %v2768
  %v2772 = vmul.f32 %v2764, %v2768
  %v2773 = vlaneseq
  %v2774 = vshrl.u32 %v2773, 7
  %v2775 = vsub.s32 0, %v2774
  %v2776 = vrot.slane %v1465, %v2775
  %v2777 = vadd.f32 %v2769, %v2776
  %v2778 = vadd.f32 %v2770, %v2776
  %v2779 = vadd.f32 %v2771, %v2776
  %v2780 = vadd.f32 %v2772, %v2776
  %v2781 = vld [vmem:[%s2 + $0x1a0] sm:$0xf]
  %v2782 = vld [vmem:[%s2 + $0x1a4] sm:$0xf]
  %v2783 = vld [vmem:[%s2 + $0x1a8] sm:$0xf]
  %v2784 = vld [vmem:[%s2 + $0x1ac] sm:$0xf]
  %v2785 = vld [vmem:[%s2 + $0x1b0] sm:$0xf]
  %v2786 = vld [vmem:[%s2 + $0x1b4] sm:$0xf]
  %v2787 = vld [vmem:[%s2 + $0x1b8] sm:$0xf]
  %v2788 = vld [vmem:[%s2 + $0x1bc] sm:$0xf]
  %v2789 = vld [vmem:[%s2 + $0x1c0] sm:$0xf]
  %v2790 = vld [vmem:[%s2 + $0x1c4] sm:$0xf]
  %v2791 = vld [vmem:[%s2 + $0x1c8] sm:$0xf]
  %v2792 = vld [vmem:[%s2 + $0x1cc] sm:$0xf]
  %v2793 = vld [vmem:[%s2 + $0x1d0] sm:$0xf]
  %v2794 = vld [vmem:[%s2 + $0x1d4] sm:$0xf]
  %v2795 = vld [vmem:[%s2 + $0x1d8] sm:$0xf]
  %v2796 = vld [vmem:[%s2 + $0x1dc] sm:$0xf]
  %v2797 = vld [vmem:[%s3 + $0x12] sm:$0x1]
  %v2798 = vpack.c.bf16 %v2778, %v2777
  %v2799 = vpack.c.bf16 %v2780, %v2779
  %v2800 = vlaneseq
  %v2801 = vshrl.u32 %v2800, 7
  %v2802 = vsub.s32 0, %v2801
  %v2803 = vrot.slane %v2797, %v2802
  %v2820 = vunpack.c.l.b16 %v2781
  %v2821 = vunpack.c.l.b16 %v2782
  %v2822 = vunpack.c.l.b16 %v2783
  %v2823 = vunpack.c.l.b16 %v2784
  %v2824 = vunpack.c.l.b16 %v2785
  %v2825 = vunpack.c.l.b16 %v2786
  %v2826 = vunpack.c.l.b16 %v2787
  %v2827 = vunpack.c.l.b16 %v2788
  %v2828 = vunpack.c.l.b16 %v2789
  %v2829 = vunpack.c.l.b16 %v2790
  %v2830 = vunpack.c.l.b16 %v2791
  %v2831 = vunpack.c.l.b16 %v2792
  %v2832 = vunpack.c.l.b16 %v2793
  %v2833 = vunpack.c.l.b16 %v2794
  %v2834 = vunpack.c.l.b16 %v2795
  %v2835 = vunpack.c.l.b16 %v2796
  %v2836 = vpack.c.b16 %v2821, %v2820
  %v2837 = vpack.c.b16 %v2823, %v2822
  %v2838 = vpack.c.b16 %v2825, %v2824
  %v2839 = vpack.c.b16 %v2827, %v2826
  %v2840 = vpack.c.b16 %v2829, %v2828
  %v2841 = vpack.c.b16 %v2831, %v2830
  %v2842 = vpack.c.b16 %v2833, %v2832
  %v2843 = vpack.c.b16 %v2835, %v2834
  %v2845 = vsel %vm133, %v2798, 0
  %v2848 = vsel %vm133, %v2799, 0
  %v2851 = vsel %vm133, %v2836, 0
  %v2854 = vsel %vm133, %v2837, 0
  %v2857 = vsel %vm133, %v2838, 0
  %v2860 = vsel %vm133, %v2839, 0
  %v2863 = vsel %vm133, %v2840, 0
  %v2866 = vsel %vm133, %v2841, 0
  %v2869 = vsel %vm133, %v2842, 0
  %v2872 = vsel %vm133, %v2843, 0
  %2874 = vmatprep.subr.bf16.mxu0 0
  %2875 = vmatpush1.bf16.xpose.msra.mxu0 %v2851
  %2876 = vmatprep.subr.bf16.mxu0 0
  %2877 = vmatpush1.bf16.xpose.msra.mxu0 %v2854
  %2878 = vmatprep.subr.bf16.mxu0 0
  %2879 = vmatpush1.bf16.xpose.msra.mxu0 %v2857
  %2880 = vmatprep.subr.bf16.mxu0 0
  %2881 = vmatpush1.bf16.xpose.msra.mxu0 %v2860
  %2882 = vmatprep.subr.bf16.mxu0 0
  %2883 = vmatpush1.bf16.xpose.msra.mxu0 %v2863
  %2884 = vmatprep.subr.bf16.mxu0 0
  %2885 = vmatpush1.bf16.xpose.msra.mxu0 %v2866
  %2886 = vmatprep.subr.bf16.mxu0 0
  %2887 = vmatpush1.bf16.xpose.msra.mxu0 %v2869
  %2888 = vmatprep.subr.bf16.mxu0 0
  %2889 = vmatpush1.bf16.xpose.msra.mxu0 %v2872
  %2890 = vmatprep.subr.bf16.mxu0 0
  %2891 = vmatpush1.bf16.xpose.msra.mxu0 0
  %2892 = vmatprep.subr.bf16.mxu0 0
  %2893 = vmatpush1.bf16.xpose.msra.mxu0 0
  %2894 = vmatprep.subr.bf16.mxu0 0
  %2895 = vmatpush1.bf16.xpose.msra.mxu0 0
  %2896 = vmatprep.subr.bf16.mxu0 0
  %2897 = vmatpush1.bf16.xpose.msra.mxu0 0
  %2898 = vmatprep.subr.bf16.mxu0 0
  %2899 = vmatpush1.bf16.xpose.msra.mxu0 0
  %2900 = vmatprep.subr.bf16.mxu0 0
  %2901 = vmatpush1.bf16.xpose.msra.mxu0 0
  %2902 = vmatprep.subr.bf16.mxu0 0
  %2903 = vmatpush1.bf16.xpose.msra.mxu0 0
  %2904 = vmatprep.subr.bf16.mxu0 0
  %2905 = vmatpush1.bf16.xpose.msra.mxu0 0
  %2906 = vmatprep.mubr.bf16.mxu0 0
  %2907 = vmatmul.mubr.bf16.gmra.mrb[0].mxu0 %v2845
  %v2908 = vpop.f32.mrb[0].mxu0
  %v2909 = vadd.f32 %v2803, %v2908
  %v2910 = vpop.f32.mrb[0].mxu0
  %v2911 = vpop.f32.mrb[0].mxu0
  %v2912 = vadd.f32 %v2803, %v2911
  %v2913 = vpop.f32.mrb[0].mxu0
  %2914 = vmatprep.mubr.bf16.mxu0 0
  %2915 = vmatmul.mubr.bf16.gmra.mrb[0].mxu0 %v2848
  %v2916 = vpop.f32.mrb[0].mxu0
  %v2917 = vadd.f32 %v2803, %v2916
  %v2918 = vpop.f32.mrb[0].mxu0
  %v2919 = vpop.f32.mrb[0].mxu0
  %v2920 = vadd.f32 %v2803, %v2919
  %v2921 = vpop.f32.mrb[0].mxu0
  %2922 = vdwg.mxu0
  %2923 = vst [vmem:[%s4] sm:$0xff] %v2909
  %2924 = vst [vmem:[%s4 + $0x8] sm:$0xff] %v2912
  %2925 = vst [vmem:[%s4 + $0x10] sm:$0xff] %v2917
  %2926 = vst [vmem:[%s4 + $0x18] sm:$0xff] %v2920
  // Predicated region
  $region18: #{defmod_forward.1} parent=0 // pred_check
    _
  $region19: #{defmod_forward.1} parent=0 // pred_check_branch
    %2928 = sbr.rel (0) target = $region21
  $region20: #{defmod_forward.1} parent=0 // pred_region
    _
  $region21: #{defmod_forward.1} parent=0 // pred_fallthru
    _
  // Predicated region
  $region22: #{defmod_forward.1} parent=0 // pred_check
    _
  $region23: #{defmod_forward.1} parent=0 // pred_check_branch
    %2930 = sbr.rel (0) target = $region25
  $region24: #{defmod_forward.1} parent=0 // pred_region
    _
  $region25: #{defmod_forward.1} parent=0 // pred_fallthru
    _

</llo_original>
